<compile_context>
chip_gen: v6e
topology: v6e:2x2x1
jax: 0.10.0
libtpu: 0.0.40
codegen_flags: <defaults>
</compile_context>

<pallas_src>
import functools
import math

import jax
import jax.numpy as jnp
from jax.experimental import pallas as pl
from jax.experimental.pallas import tpu as pltpu


ACT_DTYPE = jnp.bfloat16            # activation / MXU-input dtype
VMEM_LIMIT = 32 * 1024 * 1024       # sized for v7x (64 MiB physical / 32 MiB scoped)
TILE_M = 512                        # row tile (multiple of 8), sized well under VMEM


# ----------------------------------------------------------------------------
# Fused Pallas kernels
# ----------------------------------------------------------------------------
def matmul_bn_kernel(a_ref, w_ref, scale_ref, shift_ref, o_ref, *, act):
    # 1x1 conv as matmul + folded BN (+ SiLU).  a:(TM,K) bf16, w:(K,N) bf16
    z = jnp.dot(a_ref[...], w_ref[...], preferred_element_type=jnp.float32)
    z = z * scale_ref[...] + shift_ref[...]
    if act:  # SiLU
        z = z * jax.nn.sigmoid(z)
    o_ref[...] = z.astype(o_ref.dtype)


def matmul_bn_add_kernel(a_ref, w_ref, scale_ref, shift_ref, res_ref, o_ref, *, act):
    # Same as above with the residual skip-add fused into the epilogue.
    z = jnp.dot(a_ref[...], w_ref[...], preferred_element_type=jnp.float32)
    z = z * scale_ref[...] + shift_ref[...]
    if act:
        z = z * jax.nn.sigmoid(z)
    z = z + res_ref[...].astype(jnp.float32)
    o_ref[...] = z.astype(o_ref.dtype)


def tapconv_bn_kernel(p_ref, w_ref, scale_ref, shift_ref, o_ref, *, act):
    # 3x3 conv as 9 accumulated MXU matmuls over a K-major tap stack (no im2col transpose).
    # p:(9,TM,Cin) bf16, w:(9,Cin,Cout) bf16
    acc = jnp.zeros(o_ref.shape, jnp.float32)
    for k in range(9):
        acc = acc + jnp.dot(p_ref[k], w_ref[k], preferred_element_type=jnp.float32)
    z = acc * scale_ref[...] + shift_ref[...]
    if act:
        z = z * jax.nn.sigmoid(z)
    o_ref[...] = z.astype(o_ref.dtype)


def dwconv_bn_kernel(p_ref, w_ref, scale_ref, shift_ref, o_ref, *, act):
    # Depthwise 3x3 + folded BN (+ SiLU).  p:(9,TM,C) bf16, w:(9,1,C) f32
    acc = jnp.zeros(o_ref.shape, jnp.float32)
    for k in range(9):
        acc = acc + p_ref[k].astype(jnp.float32) * w_ref[k]
    z = acc * scale_ref[...] + shift_ref[...]
    if act:
        z = z * jax.nn.sigmoid(z)
    o_ref[...] = z.astype(o_ref.dtype)


def se_kernel(x_ref, w1_ref, b1_ref, w2_ref, b2_ref, o_ref):
    # Whole squeeze-excite block in one kernel: pool -> FC+SiLU -> FC -> sigmoid -> scale.
    # x:(1,HW,C) bf16
    x = x_ref[...].astype(jnp.float32)
    pooled = jnp.mean(x, axis=1)                                        # (1, C)
    h = jnp.dot(pooled, w1_ref[...], preferred_element_type=jnp.float32) + b1_ref[...]
    h = h * jax.nn.sigmoid(h)                                           # SiLU
    g = jnp.dot(h, w2_ref[...], preferred_element_type=jnp.float32) + b2_ref[...]
    gate = jax.nn.sigmoid(g)                                            # (1, C)
    o_ref[...] = (x * gate[:, None, :]).astype(o_ref.dtype)


def head_pool_kernel(x_ref, w_ref, scale_ref, shift_ref, o_ref):
    # conv_head (1x1) + BN + SiLU + global average pool, fused per image.
    # x:(1,HW,Cin) bf16, w:(Cin,Cout) bf16 -> o:(1,1,Cout) f32
    x = x_ref[0]                                                        # (HW, Cin)
    z = jnp.dot(x, w_ref[...], preferred_element_type=jnp.float32)
    z = z * scale_ref[...] + shift_ref[...]
    z = z * jax.nn.sigmoid(z)
    o_ref[0] = jnp.mean(z, axis=0, keepdims=True)                       # (1, Cout)


# ----------------------------------------------------------------------------
# pallas_call wrappers: M-tiled grids, "parallel" semantics, explicit VMEM limit
# ----------------------------------------------------------------------------
def _compiler_params():
    return pltpu.CompilerParams(dimension_semantics=("parallel",),
                                vmem_limit_bytes=VMEM_LIMIT)


def _matmul_bn(a, w, scale, shift, act, residual=None, out_dtype=ACT_DTYPE):
    m, k = a.shape
    n = w.shape[-1]
    tm = min(TILE_M, m)
    grid = (pl.cdiv(m, tm),)
    in_specs = [
        pl.BlockSpec((tm, k), lambda i: (i, 0)),
        pl.BlockSpec((k, n), lambda i: (0, 0)),
        pl.BlockSpec((1, n), lambda i: (0, 0)),
        pl.BlockSpec((1, n), lambda i: (0, 0)),
    ]
    args = [a, w, scale, shift]
    if residual is not None:
        in_specs.append(pl.BlockSpec((tm, n), lambda i: (i, 0)))
        args.append(residual)
        kern = functools.partial(matmul_bn_add_kernel, act=act)
    else:
        kern = functools.partial(matmul_bn_kernel, act=act)
    return pl.pallas_call(
        kern,
        out_shape=jax.ShapeDtypeStruct((m, n), out_dtype),
        grid=grid,
        in_specs=in_specs,
        out_specs=pl.BlockSpec((tm, n), lambda i: (i, 0)),
        compiler_params=_compiler_params(),
    )(*args)


def _tapconv_bn(p, w, scale, shift, act, out_dtype=ACT_DTYPE):
    _, m, cin = p.shape
    cout = w.shape[-1]
    tm = min(TILE_M, m)
    grid = (pl.cdiv(m, tm),)
    return pl.pallas_call(
        functools.partial(tapconv_bn_kernel, act=act),
        out_shape=jax.ShapeDtypeStruct((m, cout), out_dtype),
        grid=grid,
        in_specs=[
            pl.BlockSpec((9, tm, cin), lambda i: (0, i, 0)),
            pl.BlockSpec((9, cin, cout), lambda i: (0, 0, 0)),
            pl.BlockSpec((1, cout), lambda i: (0, 0)),
            pl.BlockSpec((1, cout), lambda i: (0, 0)),
        ],
        out_specs=pl.BlockSpec((tm, cout), lambda i: (i, 0)),
        compiler_params=_compiler_params(),
    )(p, w, scale, shift)


def _dwconv_bn(p, w, scale, shift, act, out_dtype=ACT_DTYPE):
    _, m, c = p.shape
    tm = min(TILE_M, m)
    grid = (pl.cdiv(m, tm),)
    return pl.pallas_call(
        functools.partial(dwconv_bn_kernel, act=act),
        out_shape=jax.ShapeDtypeStruct((m, c), out_dtype),
        grid=grid,
        in_specs=[
            pl.BlockSpec((9, tm, c), lambda i: (0, i, 0)),
            pl.BlockSpec((9, 1, c), lambda i: (0, 0, 0)),
            pl.BlockSpec((1, c), lambda i: (0, 0)),
            pl.BlockSpec((1, c), lambda i: (0, 0)),
        ],
        out_specs=pl.BlockSpec((tm, c), lambda i: (i, 0)),
        compiler_params=_compiler_params(),
    )(p, w, scale, shift)


# ----------------------------------------------------------------------------
# Layer wrappers (pad / tap-stack / reshape glue; all math inside Pallas)
# ----------------------------------------------------------------------------
def _im2col_3x3(x_nhwc, stride):
    """TF-SAME 3x3 taps, K-major. Returns (9, N, oh, ow, C) plus (oh, ow)."""
    n, h, w, c = x_nhwc.shape
    oh = -(-h // stride)
    ow = -(-w // stride)
    pad_h = max((oh - 1) * stride + 3 - h, 0)
    pad_w = max((ow - 1) * stride + 3 - w, 0)
    ph0, ph1 = pad_h // 2, pad_h - pad_h // 2
    pw0, pw1 = pad_w // 2, pad_w - pad_w // 2
    xp = jnp.pad(x_nhwc, ((0, 0), (ph0, ph1), (pw0, pw1), (0, 0)))
    cols = []
    for kh in range(3):
        for kw in range(3):
            cols.append(xp[:,
                           kh:kh + (oh - 1) * stride + 1:stride,
                           kw:kw + (ow - 1) * stride + 1:stride, :])
    return jnp.stack(cols, axis=0), oh, ow


def conv3x3_bn(x_nhwc, w, bn, stride, act):
    n = x_nhwc.shape[0]
    cin = x_nhwc.shape[-1]
    cout = w.shape[-1]
    patches, oh, ow = _im2col_3x3(x_nhwc, stride)
    p = patches.reshape(9, n * oh * ow, cin)         # K-major, no transpose
    out = _tapconv_bn(p, w, bn["scale"], bn["shift"], act)
    return out.reshape(n, oh, ow, cout)


def conv1x1_bn(x_nhwc, w, bn, act, residual=None):
    n, h, wd, cin = x_nhwc.shape
    cout = w.shape[-1]
    a = x_nhwc.reshape(n * h * wd, cin)
    res = None if residual is None else residual.reshape(n * h * wd, cout)
    out = _matmul_bn(a, w, bn["scale"], bn["shift"], act, residual=res)
    return out.reshape(n, h, wd, cout)


def dwconv3x3_bn(x_nhwc, w, bn, stride, act):
    n, _, _, c = x_nhwc.shape
    patches, oh, ow = _im2col_3x3(x_nhwc, stride)
    p = patches.reshape(9, n * oh * ow, c)
    out = _dwconv_bn(p, w, bn["scale"], bn["shift"], act)
    return out.reshape(n, oh, ow, c)


def se_block(x_nhwc, se):
    n, h, w, c = x_nhwc.shape
    hw = h * w
    flat = x_nhwc.reshape(n, hw, c)
    cr = se["w1"].shape[-1]
    out = pl.pallas_call(
        se_kernel,
        out_shape=jax.ShapeDtypeStruct((n, hw, c), flat.dtype),
        grid=(n,),
        in_specs=[
            pl.BlockSpec((1, hw, c), lambda i: (i, 0, 0)),
            pl.BlockSpec((c, cr), lambda i: (0, 0)),
            pl.BlockSpec((1, cr), lambda i: (0, 0)),
            pl.BlockSpec((cr, c), lambda i: (0, 0)),
            pl.BlockSpec((1, c), lambda i: (0, 0)),
        ],
        out_specs=pl.BlockSpec((1, hw, c), lambda i: (i, 0, 0)),
        compiler_params=_compiler_params(),
    )(flat, se["w1"], se["b1"], se["w2"], se["b2"])
    return out.reshape(n, h, w, c)


def head_pool(x_nhwc, w, bn):
    n, h, wd, cin = x_nhwc.shape
    hw = h * wd
    cout = w.shape[-1]
    flat = x_nhwc.reshape(n, hw, cin)
    out = pl.pallas_call(
        head_pool_kernel,
        out_shape=jax.ShapeDtypeStruct((n, 1, cout), jnp.float32),
        grid=(n,),
        in_specs=[
            pl.BlockSpec((1, hw, cin), lambda i: (i, 0, 0)),
            pl.BlockSpec((cin, cout), lambda i: (0, 0)),
            pl.BlockSpec((1, cout), lambda i: (0, 0)),
            pl.BlockSpec((1, cout), lambda i: (0, 0)),
        ],
        out_specs=pl.BlockSpec((1, 1, cout), lambda i: (i, 0, 0)),
        compiler_params=_compiler_params(),
    )(flat, w, bn["scale"], bn["shift"])
    return out.reshape(n, cout)


# ----------------------------------------------------------------------------
# Deterministic parameter construction (folded BN; bf16 matmul weights)
# ----------------------------------------------------------------------------
def _bn_params(key, c):
    k1, k2, k3, k4 = jax.random.split(key, 4)
    gamma = 1.0 + 0.1 * jax.random.normal(k1, (c,))
    beta = 0.1 * jax.random.normal(k2, (c,))
    mean = 0.1 * jax.random.normal(k3, (c,))
    var = 1.0 + 0.1 * jnp.abs(jax.random.normal(k4, (c,)))
    scale = gamma / jnp.sqrt(var + 1e-3)
    shift = beta - mean * scale
    return {"scale": scale.reshape(1, c).astype(jnp.float32),
            "shift": shift.reshape(1, c).astype(jnp.float32)}


def _conv3_w(key, cin, cout):
    std = 1.0 / math.sqrt(9 * cin)
    return (std * jax.random.normal(key, (9, cin, cout))).astype(ACT_DTYPE)


def _conv1_w(key, cin, cout):
    std = 1.0 / math.sqrt(cin)
    return (std * jax.random.normal(key, (cin, cout))).astype(ACT_DTYPE)


def _dw_w(key, c):
    return ((1.0 / 3.0) * jax.random.normal(key, (9, 1, c))).astype(jnp.float32)


def _se_params(key, c, cr):
    k1, k2, k3, k4 = jax.random.split(key, 4)
    return {"w1": (jax.random.normal(k1, (c, cr)) / math.sqrt(c)).astype(jnp.float32),
            "b1": (0.01 * jax.random.normal(k2, (1, cr))).astype(jnp.float32),
            "w2": (jax.random.normal(k3, (cr, c)) / math.sqrt(cr)).astype(jnp.float32),
            "b2": (0.01 * jax.random.normal(k4, (1, c))).astype(jnp.float32)}


def make_params(key):
    ks = jax.random.split(key, 32)
    p = {}
    # stem: 3 -> 24, s2
    p["stem_w"] = _conv3_w(ks[0], 3, 24)
    p["stem_bn"] = _bn_params(ks[1], 24)
    # stage1: ConvBnAct 24 -> 24, s1
    p["s1_w"] = _conv3_w(ks[2], 24, 24)
    p["s1_bn"] = _bn_params(ks[3], 24)
    # stage2: Fused-MBConv, expand x4, s2, 24 -> 48
    p["s2_exp_w"] = _conv3_w(ks[4], 24, 96)
    p["s2_exp_bn"] = _bn_params(ks[5], 96)
    p["s2_pw_w"] = _conv1_w(ks[6], 96, 48)
    p["s2_pw_bn"] = _bn_params(ks[7], 48)
    # stage3: MBConv + SE, expand x4, s2, 48 -> 64
    p["s3_exp_w"] = _conv1_w(ks[8], 48, 192)
    p["s3_exp_bn"] = _bn_params(ks[9], 192)
    p["s3_dw_w"] = _dw_w(ks[10], 192)
    p["s3_dw_bn"] = _bn_params(ks[11], 192)
    p["s3_se"] = _se_params(ks[12], 192, 12)
    p["s3_pw_w"] = _conv1_w(ks[13], 192, 64)
    p["s3_pw_bn"] = _bn_params(ks[14], 64)
    # stage4: MBConv + SE, expand x4, s1, 64 -> 64 (residual)
    p["s4_exp_w"] = _conv1_w(ks[15], 64, 256)
    p["s4_exp_bn"] = _bn_params(ks[16], 256)
    p["s4_dw_w"] = _dw_w(ks[17], 256)
    p["s4_dw_bn"] = _bn_params(ks[18], 256)
    p["s4_se"] = _se_params(ks[19], 256, 16)
    p["s4_pw_w"] = _conv1_w(ks[20], 256, 64)
    p["s4_pw_bn"] = _bn_params(ks[21], 64)
    # head: 1x1, 64 -> 128 (stand-in for 1280) — lane-dense output
    p["head_w"] = _conv1_w(ks[22], 64, 128)
    p["head_bn"] = _bn_params(ks[23], 128)
    return p


# ----------------------------------------------------------------------------
# Forward pass (matches nn.Sequential(*children[:-1]) => pooled feature vector)
# ----------------------------------------------------------------------------
def feature_extractor_forward(x_nchw, p):
    x = jnp.transpose(x_nchw, (0, 2, 3, 1)).astype(ACT_DTYPE)   # NCHW -> NHWC, bf16

    # conv_stem + bn1 + SiLU (fused)
    x = conv3x3_bn(x, p["stem_w"], p["stem_bn"], stride=2, act=True)

    # stage1: ConvBnAct (fused)
    x = conv3x3_bn(x, p["s1_w"], p["s1_bn"], stride=1, act=True)

    # stage2: Fused-MBConv (3x3 expand -> 1x1 project), stride 2
    h = conv3x3_bn(x, p["s2_exp_w"], p["s2_exp_bn"], stride=2, act=True)
    x = conv1x1_bn(h, p["s2_pw_w"], p["s2_pw_bn"], act=False)

    # stage3: MBConv (1x1 expand -> dw3x3 -> SE -> 1x1 project), stride 2
    h = conv1x1_bn(x, p["s3_exp_w"], p["s3_exp_bn"], act=True)
    h = dwconv3x3_bn(h, p["s3_dw_w"], p["s3_dw_bn"], stride=2, act=True)
    h = se_block(h, p["s3_se"])
    x = conv1x1_bn(h, p["s3_pw_w"], p["s3_pw_bn"], act=False)

    # stage4: MBConv with residual (skip-add fused into projection epilogue), stride 1
    h = conv1x1_bn(x, p["s4_exp_w"], p["s4_exp_bn"], act=True)
    h = dwconv3x3_bn(h, p["s4_dw_w"], p["s4_dw_bn"], stride=1, act=True)
    h = se_block(h, p["s4_se"])
    x = conv1x1_bn(h, p["s4_pw_w"], p["s4_pw_bn"], act=False, residual=x)

    # conv_head + bn2 + SiLU + global average pool (fused) -> (N, 128) f32
    return head_pool(x, p["head_w"], p["head_bn"])


if __name__ == "__main__":
    key = jax.random.PRNGKey(0)
    k_params, k_input = jax.random.split(key)
    params = make_params(k_params)

    x = jax.random.normal(k_input, (2, 3, 32, 32), dtype=jnp.float32)  # NCHW like PyTorch

    feats = feature_extractor_forward(x, params)
    feats = jax.block_until_ready(feats)

    assert feats.shape == (2, 128), feats.shape
    assert feats.dtype == jnp.float32
    assert bool(jnp.all(jnp.isfinite(feats)))
    print("KERNEL_OK")
</pallas_src>

<mosaic_0001>
module attributes {stable_mosaic.version = 11 : i64} {
  func.func @tapconv_bn_kernel(%arg0: i32, %arg1: memref<9x512x3xbf16, #tpu.memory_space<vmem>>, %arg2: memref<9x3x24xbf16, #tpu.memory_space<vmem>>, %arg3: memref<1x24xf32, #tpu.memory_space<vmem>>, %arg4: memref<1x24xf32, #tpu.memory_space<vmem>>, %arg5: memref<512x24xbf16, #tpu.memory_space<vmem>>) attributes {dimension_semantics = [#tpu.dimension_semantics<parallel>], iteration_bounds = array<i64: 1>, scalar_prefetch = 0 : i64, scratch_operands = 0 : i64, tpu.core_type = #tpu.core_type<tc>, window_params = [{transform_indices = @transform_0, window_bounds = array<i64: 9, 512, 3>}, {pipeline_mode = #tpu.pipeline_mode<synchronous>, transform_indices = @transform_1, window_bounds = array<i64: 9, 3, 24>}, {pipeline_mode = #tpu.pipeline_mode<synchronous>, transform_indices = @transform_2, window_bounds = array<i64: 1, 24>}, {pipeline_mode = #tpu.pipeline_mode<synchronous>, transform_indices = @transform_3, window_bounds = array<i64: 1, 24>}, {transform_indices = @transform_4, window_bounds = array<i64: 512, 24>}]} {
    %cst = arith.constant 0.000000e+00 : f32
    %0 = vector.broadcast %cst : f32 to vector<512x24xf32>
    %c0 = arith.constant 0 : index
    %c0_0 = arith.constant 0 : index
    %c0_1 = arith.constant 0 : index
    %1 = vector.load %arg1[%c0, %c0_0, %c0_1] : memref<9x512x3xbf16, #tpu.memory_space<vmem>>, vector<1x512x3xbf16>
    %2 = vector.shape_cast %1 : vector<1x512x3xbf16> to vector<512x3xbf16>
    %c0_2 = arith.constant 0 : index
    %c0_3 = arith.constant 0 : index
    %c0_4 = arith.constant 0 : index
    %3 = vector.load %arg2[%c0_2, %c0_3, %c0_4] : memref<9x3x24xbf16, #tpu.memory_space<vmem>>, vector<1x3x24xbf16>
    %4 = vector.shape_cast %3 : vector<1x3x24xbf16> to vector<3x24xbf16>
    %cst_5 = arith.constant dense<0.000000e+00> : vector<512x24xf32>
    %5 = tpu.matmul %2, %4, %cst_5 {dimension_numbers = #tpu.dot_dimension_numbers<[1], [0], [0], [1], [0, 0, 1, 1], [], []>} : vector<512x3xbf16>, vector<3x24xbf16>, vector<512x24xf32> -> vector<512x24xf32>
    %6 = arith.addf %0, %5 : vector<512x24xf32>
    %c1 = arith.constant 1 : index
    %c0_6 = arith.constant 0 : index
    %c0_7 = arith.constant 0 : index
    %7 = vector.load %arg1[%c1, %c0_6, %c0_7] : memref<9x512x3xbf16, #tpu.memory_space<vmem>>, vector<1x512x3xbf16>
    %8 = vector.shape_cast %7 : vector<1x512x3xbf16> to vector<512x3xbf16>
    %c1_8 = arith.constant 1 : index
    %c0_9 = arith.constant 0 : index
    %c0_10 = arith.constant 0 : index
    %9 = vector.load %arg2[%c1_8, %c0_9, %c0_10] : memref<9x3x24xbf16, #tpu.memory_space<vmem>>, vector<1x3x24xbf16>
    %10 = vector.shape_cast %9 : vector<1x3x24xbf16> to vector<3x24xbf16>
    %cst_11 = arith.constant dense<0.000000e+00> : vector<512x24xf32>
    %11 = tpu.matmul %8, %10, %cst_11 {dimension_numbers = #tpu.dot_dimension_numbers<[1], [0], [0], [1], [0, 0, 1, 1], [], []>} : vector<512x3xbf16>, vector<3x24xbf16>, vector<512x24xf32> -> vector<512x24xf32>
    %12 = arith.addf %6, %11 : vector<512x24xf32>
    %c2 = arith.constant 2 : index
    %c0_12 = arith.constant 0 : index
    %c0_13 = arith.constant 0 : index
    %13 = vector.load %arg1[%c2, %c0_12, %c0_13] : memref<9x512x3xbf16, #tpu.memory_space<vmem>>, vector<1x512x3xbf16>
    %14 = vector.shape_cast %13 : vector<1x512x3xbf16> to vector<512x3xbf16>
    %c2_14 = arith.constant 2 : index
    %c0_15 = arith.constant 0 : index
    %c0_16 = arith.constant 0 : index
    %15 = vector.load %arg2[%c2_14, %c0_15, %c0_16] : memref<9x3x24xbf16, #tpu.memory_space<vmem>>, vector<1x3x24xbf16>
    %16 = vector.shape_cast %15 : vector<1x3x24xbf16> to vector<3x24xbf16>
    %cst_17 = arith.constant dense<0.000000e+00> : vector<512x24xf32>
    %17 = tpu.matmul %14, %16, %cst_17 {dimension_numbers = #tpu.dot_dimension_numbers<[1], [0], [0], [1], [0, 0, 1, 1], [], []>} : vector<512x3xbf16>, vector<3x24xbf16>, vector<512x24xf32> -> vector<512x24xf32>
    %18 = arith.addf %12, %17 : vector<512x24xf32>
    %c3 = arith.constant 3 : index
    %c0_18 = arith.constant 0 : index
    %c0_19 = arith.constant 0 : index
    %19 = vector.load %arg1[%c3, %c0_18, %c0_19] : memref<9x512x3xbf16, #tpu.memory_space<vmem>>, vector<1x512x3xbf16>
    %20 = vector.shape_cast %19 : vector<1x512x3xbf16> to vector<512x3xbf16>
    %c3_20 = arith.constant 3 : index
    %c0_21 = arith.constant 0 : index
    %c0_22 = arith.constant 0 : index
    %21 = vector.load %arg2[%c3_20, %c0_21, %c0_22] : memref<9x3x24xbf16, #tpu.memory_space<vmem>>, vector<1x3x24xbf16>
    %22 = vector.shape_cast %21 : vector<1x3x24xbf16> to vector<3x24xbf16>
    %cst_23 = arith.constant dense<0.000000e+00> : vector<512x24xf32>
    %23 = tpu.matmul %20, %22, %cst_23 {dimension_numbers = #tpu.dot_dimension_numbers<[1], [0], [0], [1], [0, 0, 1, 1], [], []>} : vector<512x3xbf16>, vector<3x24xbf16>, vector<512x24xf32> -> vector<512x24xf32>
    %24 = arith.addf %18, %23 : vector<512x24xf32>
    %c4 = arith.constant 4 : index
    %c0_24 = arith.constant 0 : index
    %c0_25 = arith.constant 0 : index
    %25 = vector.load %arg1[%c4, %c0_24, %c0_25] : memref<9x512x3xbf16, #tpu.memory_space<vmem>>, vector<1x512x3xbf16>
    %26 = vector.shape_cast %25 : vector<1x512x3xbf16> to vector<512x3xbf16>
    %c4_26 = arith.constant 4 : index
    %c0_27 = arith.constant 0 : index
    %c0_28 = arith.constant 0 : index
    %27 = vector.load %arg2[%c4_26, %c0_27, %c0_28] : memref<9x3x24xbf16, #tpu.memory_space<vmem>>, vector<1x3x24xbf16>
    %28 = vector.shape_cast %27 : vector<1x3x24xbf16> to vector<3x24xbf16>
    %cst_29 = arith.constant dense<0.000000e+00> : vector<512x24xf32>
    %29 = tpu.matmul %26, %28, %cst_29 {dimension_numbers = #tpu.dot_dimension_numbers<[1], [0], [0], [1], [0, 0, 1, 1], [], []>} : vector<512x3xbf16>, vector<3x24xbf16>, vector<512x24xf32> -> vector<512x24xf32>
    %30 = arith.addf %24, %29 : vector<512x24xf32>
    %c5 = arith.constant 5 : index
    %c0_30 = arith.constant 0 : index
    %c0_31 = arith.constant 0 : index
    %31 = vector.load %arg1[%c5, %c0_30, %c0_31] : memref<9x512x3xbf16, #tpu.memory_space<vmem>>, vector<1x512x3xbf16>
    %32 = vector.shape_cast %31 : vector<1x512x3xbf16> to vector<512x3xbf16>
    %c5_32 = arith.constant 5 : index
    %c0_33 = arith.constant 0 : index
    %c0_34 = arith.constant 0 : index
    %33 = vector.load %arg2[%c5_32, %c0_33, %c0_34] : memref<9x3x24xbf16, #tpu.memory_space<vmem>>, vector<1x3x24xbf16>
    %34 = vector.shape_cast %33 : vector<1x3x24xbf16> to vector<3x24xbf16>
    %cst_35 = arith.constant dense<0.000000e+00> : vector<512x24xf32>
    %35 = tpu.matmul %32, %34, %cst_35 {dimension_numbers = #tpu.dot_dimension_numbers<[1], [0], [0], [1], [0, 0, 1, 1], [], []>} : vector<512x3xbf16>, vector<3x24xbf16>, vector<512x24xf32> -> vector<512x24xf32>
    %36 = arith.addf %30, %35 : vector<512x24xf32>
    %c6 = arith.constant 6 : index
    %c0_36 = arith.constant 0 : index
    %c0_37 = arith.constant 0 : index
    %37 = vector.load %arg1[%c6, %c0_36, %c0_37] : memref<9x512x3xbf16, #tpu.memory_space<vmem>>, vector<1x512x3xbf16>
    %38 = vector.shape_cast %37 : vector<1x512x3xbf16> to vector<512x3xbf16>
    %c6_38 = arith.constant 6 : index
    %c0_39 = arith.constant 0 : index
    %c0_40 = arith.constant 0 : index
    %39 = vector.load %arg2[%c6_38, %c0_39, %c0_40] : memref<9x3x24xbf16, #tpu.memory_space<vmem>>, vector<1x3x24xbf16>
    %40 = vector.shape_cast %39 : vector<1x3x24xbf16> to vector<3x24xbf16>
    %cst_41 = arith.constant dense<0.000000e+00> : vector<512x24xf32>
    %41 = tpu.matmul %38, %40, %cst_41 {dimension_numbers = #tpu.dot_dimension_numbers<[1], [0], [0], [1], [0, 0, 1, 1], [], []>} : vector<512x3xbf16>, vector<3x24xbf16>, vector<512x24xf32> -> vector<512x24xf32>
    %42 = arith.addf %36, %41 : vector<512x24xf32>
    %c7 = arith.constant 7 : index
    %c0_42 = arith.constant 0 : index
    %c0_43 = arith.constant 0 : index
    %43 = vector.load %arg1[%c7, %c0_42, %c0_43] : memref<9x512x3xbf16, #tpu.memory_space<vmem>>, vector<1x512x3xbf16>
    %44 = vector.shape_cast %43 : vector<1x512x3xbf16> to vector<512x3xbf16>
    %c7_44 = arith.constant 7 : index
    %c0_45 = arith.constant 0 : index
    %c0_46 = arith.constant 0 : index
    %45 = vector.load %arg2[%c7_44, %c0_45, %c0_46] : memref<9x3x24xbf16, #tpu.memory_space<vmem>>, vector<1x3x24xbf16>
    %46 = vector.shape_cast %45 : vector<1x3x24xbf16> to vector<3x24xbf16>
    %cst_47 = arith.constant dense<0.000000e+00> : vector<512x24xf32>
    %47 = tpu.matmul %44, %46, %cst_47 {dimension_numbers = #tpu.dot_dimension_numbers<[1], [0], [0], [1], [0, 0, 1, 1], [], []>} : vector<512x3xbf16>, vector<3x24xbf16>, vector<512x24xf32> -> vector<512x24xf32>
    %48 = arith.addf %42, %47 : vector<512x24xf32>
    %c8 = arith.constant 8 : index
    %c0_48 = arith.constant 0 : index
    %c0_49 = arith.constant 0 : index
    %49 = vector.load %arg1[%c8, %c0_48, %c0_49] : memref<9x512x3xbf16, #tpu.memory_space<vmem>>, vector<1x512x3xbf16>
    %50 = vector.shape_cast %49 : vector<1x512x3xbf16> to vector<512x3xbf16>
    %c8_50 = arith.constant 8 : index
    %c0_51 = arith.constant 0 : index
    %c0_52 = arith.constant 0 : index
    %51 = vector.load %arg2[%c8_50, %c0_51, %c0_52] : memref<9x3x24xbf16, #tpu.memory_space<vmem>>, vector<1x3x24xbf16>
    %52 = vector.shape_cast %51 : vector<1x3x24xbf16> to vector<3x24xbf16>
    %cst_53 = arith.constant dense<0.000000e+00> : vector<512x24xf32>
    %53 = tpu.matmul %50, %52, %cst_53 {dimension_numbers = #tpu.dot_dimension_numbers<[1], [0], [0], [1], [0, 0, 1, 1], [], []>} : vector<512x3xbf16>, vector<3x24xbf16>, vector<512x24xf32> -> vector<512x24xf32>
    %54 = arith.addf %48, %53 : vector<512x24xf32>
    %c0_54 = arith.constant 0 : index
    %c0_55 = arith.constant 0 : index
    %55 = vector.load %arg3[%c0_54, %c0_55] : memref<1x24xf32, #tpu.memory_space<vmem>>, vector<1x24xf32>
    %56 = vector.broadcast %55 : vector<1x24xf32> to vector<512x24xf32>
    %57 = arith.mulf %54, %56 : vector<512x24xf32>
    %c0_56 = arith.constant 0 : index
    %c0_57 = arith.constant 0 : index
    %58 = vector.load %arg4[%c0_56, %c0_57] : memref<1x24xf32, #tpu.memory_space<vmem>>, vector<1x24xf32>
    %59 = vector.broadcast %58 : vector<1x24xf32> to vector<512x24xf32>
    %60 = arith.addf %57, %59 : vector<512x24xf32>
    %61 = arith.negf %60 : vector<512x24xf32>
    %62 = math.exp %61 : vector<512x24xf32>
    %cst_58 = arith.constant 1.000000e+00 : f32
    %63 = vector.broadcast %cst_58 : f32 to vector<512x24xf32>
    %64 = arith.addf %63, %62 : vector<512x24xf32>
    %65 = arith.divf %63, %64 : vector<512x24xf32>
    %66 = arith.mulf %60, %65 : vector<512x24xf32>
    %67 = arith.truncf %66 : vector<512x24xf32> to vector<512x24xbf16>
    %c0_59 = arith.constant 0 : index
    %c0_60 = arith.constant 0 : index
    %68 = vector.load %arg5[%c0_59, %c0_60] : memref<512x24xbf16, #tpu.memory_space<vmem>>, vector<512x24xbf16>
    tpu.vector_store %arg5[%c0_59, %c0_60], %67 {strides = array<i32>} : memref<512x24xbf16, #tpu.memory_space<vmem>>, vector<512x24xbf16>,
    return
  }
  func.func @transform_0(%arg0: i32) -> (i32, i32, i32) {
    %c0_i32 = arith.constant 0 : i32
    %c0_i32_0 = arith.constant 0 : i32
    %c0_i32_1 = arith.constant 0 : i32
    return %c0_i32, %arg0, %c0_i32_0 : i32, i32, i32
  }
  func.func @transform_1(%arg0: i32) -> (i32, i32, i32) {
    %c0_i32 = arith.constant 0 : i32
    %c0_i32_0 = arith.constant 0 : i32
    %c0_i32_1 = arith.constant 0 : i32
    %c0_i32_2 = arith.constant 0 : i32
    return %c0_i32, %c0_i32_0, %c0_i32_1 : i32, i32, i32
  }
  func.func @transform_2(%arg0: i32) -> (i32, i32) {
    %c0_i32 = arith.constant 0 : i32
    %c0_i32_0 = arith.constant 0 : i32
    %c0_i32_1 = arith.constant 0 : i32
    return %c0_i32, %c0_i32_0 : i32, i32
  }
  func.func @transform_3(%arg0: i32) -> (i32, i32) {
    %c0_i32 = arith.constant 0 : i32
    %c0_i32_0 = arith.constant 0 : i32
    %c0_i32_1 = arith.constant 0 : i32
    return %c0_i32, %c0_i32_0 : i32, i32
  }
  func.func @transform_4(%arg0: i32) -> (i32, i32) {
    %c0_i32 = arith.constant 0 : i32
    %c0_i32_0 = arith.constant 0 : i32
    return %arg0, %c0_i32 : i32, i32
  }
}

</mosaic_0001>

<llo_original>
// kernel: tpu_custom_call.1
$region0: #{tpu_custom_call.1}
  #allocation0 [shape = 'u32[]', space=smem, size = 0x4, offset = 0x4, fixed_abs, tag = 'smem constant byte address 0x4 - core index']
  #allocation1 [shape = 'u32[144,128]{1,0:T(1,128)}', space=vmem, size = 0x12000, scoped, tag = 'internal scratch']
  %s0 = inlined_call_operand.vmem [shape: bf16[9,512,3], index: 0, kind: input, shape index: {}]
  %s1 = inlined_call_operand.vmem [shape: bf16[9,3,24], index: 1, kind: input, shape index: {}]
  %s2 = inlined_call_operand.vmem [shape: f32[1,24], index: 2, kind: input, shape index: {}]
  %s3 = inlined_call_operand.vmem [shape: f32[1,24], index: 3, kind: input, shape index: {}]
  %s4 = inlined_call_operand.vmem [shape: bf16[512,24], index: 4, kind: output, shape index: {}]
  %s5 = sld [smem:[#allocation0]]
  $region26: #{tpu_custom_call.1} parent=0
    _
  %s7 = ssub.s32 1, %s5
  %s8 = scalar_select 0, %s7, %s5
  // Predicated region
  $region2: #{tpu_custom_call.1} parent=0 // pred_check
    _
  $region3: #{tpu_custom_call.1} parent=0 // pred_check_branch
    %10 = sbr.rel (0) target = $region5
  $region4: #{tpu_custom_call.1} parent=0 // pred_region
    _
  $region5: #{tpu_custom_call.1} parent=0 // pred_fallthru
    _
  // Predicated region
  $region6: #{tpu_custom_call.1} parent=0 // pred_check
    _
  $region7: #{tpu_custom_call.1} parent=0 // pred_check_branch
    %12 = sbr.rel (0) target = $region9
  $region8: #{tpu_custom_call.1} parent=0 // pred_region
    _
  $region9: #{tpu_custom_call.1} parent=0 // pred_fallthru
    _
  // Predicated region
  $region10: #{tpu_custom_call.1} parent=0 // pred_check
    _
  $region11: #{tpu_custom_call.1} parent=0 // pred_check_branch
    %14 = sbr.rel (0) target = $region13
  $region12: #{tpu_custom_call.1} parent=0 // pred_region
    _
  $region13: #{tpu_custom_call.1} parent=0 // pred_fallthru
    _
  // Predicated region
  $region14: #{tpu_custom_call.1} parent=0 // pred_check
    _
  $region15: #{tpu_custom_call.1} parent=0 // pred_check_branch
    %16 = sbr.rel (0) target = $region17
  $region16: #{tpu_custom_call.1} parent=0 // pred_region
    _
  $region17: #{tpu_custom_call.1} parent=0 // pred_fallthru
    _
  %v18 = vld [vmem:[%s0] sm:$0xf]
  %v19 = vld [vmem:[%s0 + $0x4] sm:$0xf]
  %v20 = vld [vmem:[%s0 + $0x8] sm:$0xf]
  %v21 = vld [vmem:[%s0 + $0xc] sm:$0xf]
  %v22 = vld [vmem:[%s0 + $0x10] sm:$0xf]
  %v23 = vld [vmem:[%s0 + $0x14] sm:$0xf]
  %v24 = vld [vmem:[%s0 + $0x18] sm:$0xf]
  %v25 = vld [vmem:[%s0 + $0x1c] sm:$0xf]
  %v26 = vld [vmem:[%s0 + $0x20] sm:$0xf]
  %v27 = vld [vmem:[%s0 + $0x24] sm:$0xf]
  %v28 = vld [vmem:[%s0 + $0x28] sm:$0xf]
  %v29 = vld [vmem:[%s0 + $0x2c] sm:$0xf]
  %v30 = vld [vmem:[%s0 + $0x30] sm:$0xf]
  %v31 = vld [vmem:[%s0 + $0x34] sm:$0xf]
  %v32 = vld [vmem:[%s0 + $0x38] sm:$0xf]
  %v33 = vld [vmem:[%s0 + $0x3c] sm:$0xf]
  %v34 = vld [vmem:[%s0 + $0x40] sm:$0xf]
  %v35 = vld [vmem:[%s0 + $0x44] sm:$0xf]
  %v36 = vld [vmem:[%s0 + $0x48] sm:$0xf]
  %v37 = vld [vmem:[%s0 + $0x4c] sm:$0xf]
  %v38 = vld [vmem:[%s0 + $0x50] sm:$0xf]
  %v39 = vld [vmem:[%s0 + $0x54] sm:$0xf]
  %v40 = vld [vmem:[%s0 + $0x58] sm:$0xf]
  %v41 = vld [vmem:[%s0 + $0x5c] sm:$0xf]
  %v42 = vld [vmem:[%s0 + $0x60] sm:$0xf]
  %v43 = vld [vmem:[%s0 + $0x64] sm:$0xf]
  %v44 = vld [vmem:[%s0 + $0x68] sm:$0xf]
  %v45 = vld [vmem:[%s0 + $0x6c] sm:$0xf]
  %v46 = vld [vmem:[%s0 + $0x70] sm:$0xf]
  %v47 = vld [vmem:[%s0 + $0x74] sm:$0xf]
  %v48 = vld [vmem:[%s0 + $0x78] sm:$0xf]
  %v49 = vld [vmem:[%s0 + $0x7c] sm:$0xf]
  %v50 = vld [vmem:[%s0 + $0x80] sm:$0xf]
  %v51 = vld [vmem:[%s0 + $0x84] sm:$0xf]
  %v52 = vld [vmem:[%s0 + $0x88] sm:$0xf]
  %v53 = vld [vmem:[%s0 + $0x8c] sm:$0xf]
  %v54 = vld [vmem:[%s0 + $0x90] sm:$0xf]
  %v55 = vld [vmem:[%s0 + $0x94] sm:$0xf]
  %v56 = vld [vmem:[%s0 + $0x98] sm:$0xf]
  %v57 = vld [vmem:[%s0 + $0x9c] sm:$0xf]
  %v58 = vld [vmem:[%s0 + $0xa0] sm:$0xf]
  %v59 = vld [vmem:[%s0 + $0xa4] sm:$0xf]
  %v60 = vld [vmem:[%s0 + $0xa8] sm:$0xf]
  %v61 = vld [vmem:[%s0 + $0xac] sm:$0xf]
  %v62 = vld [vmem:[%s0 + $0xb0] sm:$0xf]
  %v63 = vld [vmem:[%s0 + $0xb4] sm:$0xf]
  %v64 = vld [vmem:[%s0 + $0xb8] sm:$0xf]
  %v65 = vld [vmem:[%s0 + $0xbc] sm:$0xf]
  %v66 = vld [vmem:[%s0 + $0xc0] sm:$0xf]
  %v67 = vld [vmem:[%s0 + $0xc4] sm:$0xf]
  %v68 = vld [vmem:[%s0 + $0xc8] sm:$0xf]
  %v69 = vld [vmem:[%s0 + $0xcc] sm:$0xf]
  %v70 = vld [vmem:[%s0 + $0xd0] sm:$0xf]
  %v71 = vld [vmem:[%s0 + $0xd4] sm:$0xf]
  %v72 = vld [vmem:[%s0 + $0xd8] sm:$0xf]
  %v73 = vld [vmem:[%s0 + $0xdc] sm:$0xf]
  %v74 = vld [vmem:[%s0 + $0xe0] sm:$0xf]
  %v75 = vld [vmem:[%s0 + $0xe4] sm:$0xf]
  %v76 = vld [vmem:[%s0 + $0xe8] sm:$0xf]
  %v77 = vld [vmem:[%s0 + $0xec] sm:$0xf]
  %v78 = vld [vmem:[%s0 + $0xf0] sm:$0xf]
  %v79 = vld [vmem:[%s0 + $0xf4] sm:$0xf]
  %v80 = vld [vmem:[%s0 + $0xf8] sm:$0xf]
  %v81 = vld [vmem:[%s0 + $0xfc] sm:$0xf]
  %v82 = vld [vmem:[%s1] sm:$0x3]
  %s83 = scalar_lea.vmem %s0, 256
  %v84 = vld [vmem:[%s83] sm:$0xf]
  %v85 = vld [vmem:[%s83 + $0x4] sm:$0xf]
  %v86 = vld [vmem:[%s83 + $0x8] sm:$0xf]
  %v87 = vld [vmem:[%s83 + $0xc] sm:$0xf]
  %v88 = vld [vmem:[%s83 + $0x10] sm:$0xf]
  %v89 = vld [vmem:[%s83 + $0x14] sm:$0xf]
  %v90 = vld [vmem:[%s83 + $0x18] sm:$0xf]
  %v91 = vld [vmem:[%s83 + $0x1c] sm:$0xf]
  %v92 = vld [vmem:[%s83 + $0x20] sm:$0xf]
  %v93 = vld [vmem:[%s83 + $0x24] sm:$0xf]
  %v94 = vld [vmem:[%s83 + $0x28] sm:$0xf]
  %v95 = vld [vmem:[%s83 + $0x2c] sm:$0xf]
  %v96 = vld [vmem:[%s83 + $0x30] sm:$0xf]
  %v97 = vld [vmem:[%s83 + $0x34] sm:$0xf]
  %v98 = vld [vmem:[%s83 + $0x38] sm:$0xf]
  %v99 = vld [vmem:[%s83 + $0x3c] sm:$0xf]
  %v100 = vld [vmem:[%s83 + $0x40] sm:$0xf]
  %v101 = vld [vmem:[%s83 + $0x44] sm:$0xf]
  %v102 = vld [vmem:[%s83 + $0x48] sm:$0xf]
  %v103 = vld [vmem:[%s83 + $0x4c] sm:$0xf]
  %v104 = vld [vmem:[%s83 + $0x50] sm:$0xf]
  %v105 = vld [vmem:[%s83 + $0x54] sm:$0xf]
  %v106 = vld [vmem:[%s83 + $0x58] sm:$0xf]
  %v107 = vld [vmem:[%s83 + $0x5c] sm:$0xf]
  %v108 = vld [vmem:[%s83 + $0x60] sm:$0xf]
  %v109 = vld [vmem:[%s83 + $0x64] sm:$0xf]
  %v110 = vld [vmem:[%s83 + $0x68] sm:$0xf]
  %v111 = vld [vmem:[%s83 + $0x6c] sm:$0xf]
  %v112 = vld [vmem:[%s83 + $0x70] sm:$0xf]
  %v113 = vld [vmem:[%s83 + $0x74] sm:$0xf]
  %v114 = vld [vmem:[%s83 + $0x78] sm:$0xf]
  %v115 = vld [vmem:[%s83 + $0x7c] sm:$0xf]
  %v116 = vld [vmem:[%s83 + $0x80] sm:$0xf]
  %v117 = vld [vmem:[%s83 + $0x84] sm:$0xf]
  %v118 = vld [vmem:[%s83 + $0x88] sm:$0xf]
  %v119 = vld [vmem:[%s83 + $0x8c] sm:$0xf]
  %v120 = vld [vmem:[%s83 + $0x90] sm:$0xf]
  %v121 = vld [vmem:[%s83 + $0x94] sm:$0xf]
  %v122 = vld [vmem:[%s83 + $0x98] sm:$0xf]
  %v123 = vld [vmem:[%s83 + $0x9c] sm:$0xf]
  %v124 = vld [vmem:[%s83 + $0xa0] sm:$0xf]
  %v125 = vld [vmem:[%s83 + $0xa4] sm:$0xf]
  %v126 = vld [vmem:[%s83 + $0xa8] sm:$0xf]
  %v127 = vld [vmem:[%s83 + $0xac] sm:$0xf]
  %v128 = vld [vmem:[%s83 + $0xb0] sm:$0xf]
  %v129 = vld [vmem:[%s83 + $0xb4] sm:$0xf]
  %v130 = vld [vmem:[%s83 + $0xb8] sm:$0xf]
  %v131 = vld [vmem:[%s83 + $0xbc] sm:$0xf]
  %v132 = vld [vmem:[%s83 + $0xc0] sm:$0xf]
  %v133 = vld [vmem:[%s83 + $0xc4] sm:$0xf]
  %v134 = vld [vmem:[%s83 + $0xc8] sm:$0xf]
  %v135 = vld [vmem:[%s83 + $0xcc] sm:$0xf]
  %v136 = vld [vmem:[%s83 + $0xd0] sm:$0xf]
  %v137 = vld [vmem:[%s83 + $0xd4] sm:$0xf]
  %v138 = vld [vmem:[%s83 + $0xd8] sm:$0xf]
  %v139 = vld [vmem:[%s83 + $0xdc] sm:$0xf]
  %v140 = vld [vmem:[%s83 + $0xe0] sm:$0xf]
  %v141 = vld [vmem:[%s83 + $0xe4] sm:$0xf]
  %v142 = vld [vmem:[%s83 + $0xe8] sm:$0xf]
  %v143 = vld [vmem:[%s83 + $0xec] sm:$0xf]
  %v144 = vld [vmem:[%s83 + $0xf0] sm:$0xf]
  %v145 = vld [vmem:[%s83 + $0xf4] sm:$0xf]
  %v146 = vld [vmem:[%s83 + $0xf8] sm:$0xf]
  %v147 = vld [vmem:[%s83 + $0xfc] sm:$0xf]
  %s148 = scalar_lea.vmem %s1, 2
  %v149 = vld [vmem:[%s148] sm:$0x3]
  %v214 = vunpack.c.l.b16 %v84
  %v215 = vunpack.c.l.b16 %v85
  %v216 = vunpack.c.l.b16 %v86
  %v217 = vunpack.c.l.b16 %v87
  %v218 = vunpack.c.l.b16 %v88
  %v219 = vunpack.c.l.b16 %v89
  %v220 = vunpack.c.l.b16 %v90
  %v221 = vunpack.c.l.b16 %v91
  %v222 = vunpack.c.l.b16 %v92
  %v223 = vunpack.c.l.b16 %v93
  %v224 = vunpack.c.l.b16 %v94
  %v225 = vunpack.c.l.b16 %v95
  %v226 = vunpack.c.l.b16 %v96
  %v227 = vunpack.c.l.b16 %v97
  %v228 = vunpack.c.l.b16 %v98
  %v229 = vunpack.c.l.b16 %v99
  %v230 = vunpack.c.l.b16 %v100
  %v231 = vunpack.c.l.b16 %v101
  %v232 = vunpack.c.l.b16 %v102
  %v233 = vunpack.c.l.b16 %v103
  %v234 = vunpack.c.l.b16 %v104
  %v235 = vunpack.c.l.b16 %v105
  %v236 = vunpack.c.l.b16 %v106
  %v237 = vunpack.c.l.b16 %v107
  %v238 = vunpack.c.l.b16 %v108
  %v239 = vunpack.c.l.b16 %v109
  %v240 = vunpack.c.l.b16 %v110
  %v241 = vunpack.c.l.b16 %v111
  %v242 = vunpack.c.l.b16 %v112
  %v243 = vunpack.c.l.b16 %v113
  %v244 = vunpack.c.l.b16 %v114
  %v245 = vunpack.c.l.b16 %v115
  %v246 = vunpack.c.l.b16 %v116
  %v247 = vunpack.c.l.b16 %v117
  %v248 = vunpack.c.l.b16 %v118
  %v249 = vunpack.c.l.b16 %v119
  %v250 = vunpack.c.l.b16 %v120
  %v251 = vunpack.c.l.b16 %v121
  %v252 = vunpack.c.l.b16 %v122
  %v253 = vunpack.c.l.b16 %v123
  %v254 = vunpack.c.l.b16 %v124
  %v255 = vunpack.c.l.b16 %v125
  %v256 = vunpack.c.l.b16 %v126
  %v257 = vunpack.c.l.b16 %v127
  %v258 = vunpack.c.l.b16 %v128
  %v259 = vunpack.c.l.b16 %v129
  %v260 = vunpack.c.l.b16 %v130
  %v261 = vunpack.c.l.b16 %v131
  %v262 = vunpack.c.l.b16 %v132
  %v263 = vunpack.c.l.b16 %v133
  %v264 = vunpack.c.l.b16 %v134
  %v265 = vunpack.c.l.b16 %v135
  %v266 = vunpack.c.l.b16 %v136
  %v267 = vunpack.c.l.b16 %v137
  %v268 = vunpack.c.l.b16 %v138
  %v269 = vunpack.c.l.b16 %v139
  %v270 = vunpack.c.l.b16 %v140
  %v271 = vunpack.c.l.b16 %v141
  %v272 = vunpack.c.l.b16 %v142
  %v273 = vunpack.c.l.b16 %v143
  %v274 = vunpack.c.l.b16 %v144
  %v275 = vunpack.c.l.b16 %v145
  %v276 = vunpack.c.l.b16 %v146
  %v277 = vunpack.c.l.b16 %v147
  %v278 = vpack.c.b16 %v215, %v214
  %v279 = vpack.c.b16 %v217, %v216
  %v280 = vpack.c.b16 %v219, %v218
  %v281 = vpack.c.b16 %v221, %v220
  %v282 = vpack.c.b16 %v223, %v222
  %v283 = vpack.c.b16 %v225, %v224
  %v284 = vpack.c.b16 %v227, %v226
  %v285 = vpack.c.b16 %v229, %v228
  %v286 = vpack.c.b16 %v231, %v230
  %v287 = vpack.c.b16 %v233, %v232
  %v288 = vpack.c.b16 %v235, %v234
  %v289 = vpack.c.b16 %v237, %v236
  %v290 = vpack.c.b16 %v239, %v238
  %v291 = vpack.c.b16 %v241, %v240
  %v292 = vpack.c.b16 %v243, %v242
  %v293 = vpack.c.b16 %v245, %v244
  %v294 = vpack.c.b16 %v247, %v246
  %v295 = vpack.c.b16 %v249, %v248
  %v296 = vpack.c.b16 %v251, %v250
  %v297 = vpack.c.b16 %v253, %v252
  %v298 = vpack.c.b16 %v255, %v254
  %v299 = vpack.c.b16 %v257, %v256
  %v300 = vpack.c.b16 %v259, %v258
  %v301 = vpack.c.b16 %v261, %v260
  %v302 = vpack.c.b16 %v263, %v262
  %v303 = vpack.c.b16 %v265, %v264
  %v304 = vpack.c.b16 %v267, %v266
  %v305 = vpack.c.b16 %v269, %v268
  %v306 = vpack.c.b16 %v271, %v270
  %v307 = vpack.c.b16 %v273, %v272
  %v308 = vpack.c.b16 %v275, %v274
  %v309 = vpack.c.b16 %v277, %v276
  %vm310 = vcmask 23552
  %v312 = vsel %vm310, %v278, 0
  %v315 = vsel %vm310, %v279, 0
  %v318 = vsel %vm310, %v280, 0
  %v321 = vsel %vm310, %v281, 0
  %v324 = vsel %vm310, %v282, 0
  %v327 = vsel %vm310, %v283, 0
  %v330 = vsel %vm310, %v284, 0
  %v333 = vsel %vm310, %v285, 0
  %v336 = vsel %vm310, %v286, 0
  %v339 = vsel %vm310, %v287, 0
  %v342 = vsel %vm310, %v288, 0
  %v345 = vsel %vm310, %v289, 0
  %v348 = vsel %vm310, %v290, 0
  %v351 = vsel %vm310, %v291, 0
  %v354 = vsel %vm310, %v292, 0
  %v357 = vsel %vm310, %v293, 0
  %v360 = vsel %vm310, %v294, 0
  %v363 = vsel %vm310, %v295, 0
  %v366 = vsel %vm310, %v296, 0
  %v369 = vsel %vm310, %v297, 0
  %v372 = vsel %vm310, %v298, 0
  %v375 = vsel %vm310, %v299, 0
  %v378 = vsel %vm310, %v300, 0
  %v381 = vsel %vm310, %v301, 0
  %v384 = vsel %vm310, %v302, 0
  %v387 = vsel %vm310, %v303, 0
  %v390 = vsel %vm310, %v304, 0
  %v393 = vsel %vm310, %v305, 0
  %v396 = vsel %vm310, %v306, 0
  %v399 = vsel %vm310, %v307, 0
  %v402 = vsel %vm310, %v308, 0
  %v405 = vsel %vm310, %v309, 0
  %vm407 = vcmask 1040384
  %vm408 = vcmask 1041408
  %v409 = vsel %vm407, 4294967295, 65535
  %v410 = vsel %vm408, %v409, 0
  %v412 = vand.u32 %v149, %v410
  %414 = vmatprep.subr.bf16.mxu0 0
  %415 = vmatpush1.bf16.msra.mxu0 0
  %416 = vmatprep.subr.bf16.mxu0 0
  %417 = vmatpush1.bf16.msra.mxu0 0
  %418 = vmatprep.subr.bf16.mxu0 0
  %419 = vmatpush1.bf16.msra.mxu0 0
  %420 = vmatprep.subr.bf16.mxu0 0
  %421 = vmatpush1.bf16.msra.mxu0 0
  %422 = vmatprep.subr.bf16.mxu0 0
  %423 = vmatpush1.bf16.msra.mxu0 0
  %424 = vmatprep.subr.bf16.mxu0 0
  %425 = vmatpush1.bf16.msra.mxu0 0
  %426 = vmatprep.subr.bf16.mxu0 0
  %427 = vmatpush1.bf16.msra.mxu0 0
  %428 = vmatprep.subr.bf16.mxu0 0
  %429 = vmatpush1.bf16.msra.mxu0 %v412
  %430 = vmatprep.subr.bf16.mxu0 0
  %431 = vmatpush2.bf16.msra.mxu0 0
  %432 = vmatprep.subr.bf16.mxu0 0
  %433 = vmatpush2.bf16.msra.mxu0 0
  %434 = vmatprep.subr.bf16.mxu0 0
  %435 = vmatpush2.bf16.msra.mxu0 0
  %436 = vmatprep.subr.bf16.mxu0 0
  %437 = vmatpush2.bf16.msra.mxu0 0
  %438 = vmatprep.subr.bf16.mxu0 0
  %439 = vmatpush2.bf16.msra.mxu0 0
  %440 = vmatprep.subr.bf16.mxu0 0
  %441 = vmatpush2.bf16.msra.mxu0 0
  %442 = vmatprep.subr.bf16.mxu0 0
  %443 = vmatpush2.bf16.msra.mxu0 0
  %444 = vmatprep.subr.bf16.mxu0 0
  %445 = vmatpush2.bf16.msra.mxu0 0
  %446 = vmatprep.mubr.bf16.mxu0 0
  %447 = vmatmul.mubr.bf16.gmra.mxu0 %v312
  %v448 = vpop.f32.mrf.mxu0
  %v449 = vadd.f32 0.0, %v448
  %v450 = vpop.f32.mrf.mxu0
  %v451 = vpop.f32.mrf.mxu0
  %v452 = vadd.f32 0.0, %v451
  %v453 = vpop.f32.mrf.mxu0
  %454 = vmatprep.mubr.bf16.mxu0 0
  %455 = vmatmul.mubr.bf16.gmra.mxu0 %v315
  %v456 = vpop.f32.mrf.mxu0
  %v457 = vadd.f32 0.0, %v456
  %v458 = vpop.f32.mrf.mxu0
  %v459 = vpop.f32.mrf.mxu0
  %v460 = vadd.f32 0.0, %v459
  %v461 = vpop.f32.mrf.mxu0
  %462 = vmatprep.mubr.bf16.mxu0 0
  %463 = vmatmul.mubr.bf16.gmra.mxu0 %v318
  %v464 = vpop.f32.mrf.mxu0
  %v465 = vadd.f32 0.0, %v464
  %v466 = vpop.f32.mrf.mxu0
  %v467 = vpop.f32.mrf.mxu0
  %v468 = vadd.f32 0.0, %v467
  %v469 = vpop.f32.mrf.mxu0
  %470 = vmatprep.mubr.bf16.mxu0 0
  %471 = vmatmul.mubr.bf16.gmra.mxu0 %v321
  %v472 = vpop.f32.mrf.mxu0
  %v473 = vadd.f32 0.0, %v472
  %v474 = vpop.f32.mrf.mxu0
  %v475 = vpop.f32.mrf.mxu0
  %v476 = vadd.f32 0.0, %v475
  %v477 = vpop.f32.mrf.mxu0
  %478 = vmatprep.mubr.bf16.mxu0 0
  %479 = vmatmul.mubr.bf16.gmra.mxu0 %v324
  %v480 = vpop.f32.mrf.mxu0
  %v481 = vadd.f32 0.0, %v480
  %v482 = vpop.f32.mrf.mxu0
  %v483 = vpop.f32.mrf.mxu0
  %v484 = vadd.f32 0.0, %v483
  %v485 = vpop.f32.mrf.mxu0
  %486 = vmatprep.mubr.bf16.mxu0 0
  %487 = vmatmul.mubr.bf16.gmra.mxu0 %v327
  %v488 = vpop.f32.mrf.mxu0
  %v489 = vadd.f32 0.0, %v488
  %v490 = vpop.f32.mrf.mxu0
  %v491 = vpop.f32.mrf.mxu0
  %v492 = vadd.f32 0.0, %v491
  %v493 = vpop.f32.mrf.mxu0
  %494 = vmatprep.mubr.bf16.mxu0 0
  %495 = vmatmul.mubr.bf16.gmra.mxu0 %v330
  %v496 = vpop.f32.mrf.mxu0
  %v497 = vadd.f32 0.0, %v496
  %v498 = vpop.f32.mrf.mxu0
  %v499 = vpop.f32.mrf.mxu0
  %v500 = vadd.f32 0.0, %v499
  %v501 = vpop.f32.mrf.mxu0
  %502 = vmatprep.mubr.bf16.mxu0 0
  %503 = vmatmul.mubr.bf16.gmra.mxu0 %v333
  %v504 = vpop.f32.mrf.mxu0
  %v505 = vadd.f32 0.0, %v504
  %v506 = vpop.f32.mrf.mxu0
  %v507 = vpop.f32.mrf.mxu0
  %v508 = vadd.f32 0.0, %v507
  %v509 = vpop.f32.mrf.mxu0
  %510 = vmatprep.mubr.bf16.mxu0 0
  %511 = vmatmul.mubr.bf16.gmra.mxu0 %v336
  %v512 = vpop.f32.mrf.mxu0
  %v513 = vadd.f32 0.0, %v512
  %v514 = vpop.f32.mrf.mxu0
  %v515 = vpop.f32.mrf.mxu0
  %v516 = vadd.f32 0.0, %v515
  %v517 = vpop.f32.mrf.mxu0
  %518 = vmatprep.mubr.bf16.mxu0 0
  %519 = vmatmul.mubr.bf16.gmra.mxu0 %v339
  %v520 = vpop.f32.mrf.mxu0
  %v521 = vadd.f32 0.0, %v520
  %v522 = vpop.f32.mrf.mxu0
  %v523 = vpop.f32.mrf.mxu0
  %v524 = vadd.f32 0.0, %v523
  %v525 = vpop.f32.mrf.mxu0
  %526 = vmatprep.mubr.bf16.mxu0 0
  %527 = vmatmul.mubr.bf16.gmra.mxu0 %v342
  %v528 = vpop.f32.mrf.mxu0
  %v529 = vadd.f32 0.0, %v528
  %v530 = vpop.f32.mrf.mxu0
  %v531 = vpop.f32.mrf.mxu0
  %v532 = vadd.f32 0.0, %v531
  %v533 = vpop.f32.mrf.mxu0
  %534 = vmatprep.mubr.bf16.mxu0 0
  %535 = vmatmul.mubr.bf16.gmra.mxu0 %v345
  %v536 = vpop.f32.mrf.mxu0
  %v537 = vadd.f32 0.0, %v536
  %v538 = vpop.f32.mrf.mxu0
  %v539 = vpop.f32.mrf.mxu0
  %v540 = vadd.f32 0.0, %v539
  %v541 = vpop.f32.mrf.mxu0
  %542 = vmatprep.mubr.bf16.mxu0 0
  %543 = vmatmul.mubr.bf16.gmra.mxu0 %v348
  %v544 = vpop.f32.mrf.mxu0
  %v545 = vadd.f32 0.0, %v544
  %v546 = vpop.f32.mrf.mxu0
  %v547 = vpop.f32.mrf.mxu0
  %v548 = vadd.f32 0.0, %v547
  %v549 = vpop.f32.mrf.mxu0
  %550 = vmatprep.mubr.bf16.mxu0 0
  %551 = vmatmul.mubr.bf16.gmra.mxu0 %v351
  %v552 = vpop.f32.mrf.mxu0
  %v553 = vadd.f32 0.0, %v552
  %v554 = vpop.f32.mrf.mxu0
  %v555 = vpop.f32.mrf.mxu0
  %v556 = vadd.f32 0.0, %v555
  %v557 = vpop.f32.mrf.mxu0
  %558 = vmatprep.mubr.bf16.mxu0 0
  %559 = vmatmul.mubr.bf16.gmra.mxu0 %v354
  %v560 = vpop.f32.mrf.mxu0
  %v561 = vadd.f32 0.0, %v560
  %v562 = vpop.f32.mrf.mxu0
  %v563 = vpop.f32.mrf.mxu0
  %v564 = vadd.f32 0.0, %v563
  %v565 = vpop.f32.mrf.mxu0
  %566 = vmatprep.mubr.bf16.mxu0 0
  %567 = vmatmul.mubr.bf16.gmra.mxu0 %v357
  %v568 = vpop.f32.mrf.mxu0
  %v569 = vadd.f32 0.0, %v568
  %v570 = vpop.f32.mrf.mxu0
  %v571 = vpop.f32.mrf.mxu0
  %v572 = vadd.f32 0.0, %v571
  %v573 = vpop.f32.mrf.mxu0
  %574 = vmatprep.mubr.bf16.mxu0 0
  %575 = vmatmul.mubr.bf16.gmra.mxu0 %v360
  %v576 = vpop.f32.mrf.mxu0
  %v577 = vadd.f32 0.0, %v576
  %v578 = vpop.f32.mrf.mxu0
  %v579 = vpop.f32.mrf.mxu0
  %v580 = vadd.f32 0.0, %v579
  %v581 = vpop.f32.mrf.mxu0
  %582 = vmatprep.mubr.bf16.mxu0 0
  %583 = vmatmul.mubr.bf16.gmra.mxu0 %v363
  %v584 = vpop.f32.mrf.mxu0
  %v585 = vadd.f32 0.0, %v584
  %v586 = vpop.f32.mrf.mxu0
  %v587 = vpop.f32.mrf.mxu0
  %v588 = vadd.f32 0.0, %v587
  %v589 = vpop.f32.mrf.mxu0
  %590 = vmatprep.mubr.bf16.mxu0 0
  %591 = vmatmul.mubr.bf16.gmra.mxu0 %v366
  %v592 = vpop.f32.mrf.mxu0
  %v593 = vadd.f32 0.0, %v592
  %v594 = vpop.f32.mrf.mxu0
  %v595 = vpop.f32.mrf.mxu0
  %v596 = vadd.f32 0.0, %v595
  %v597 = vpop.f32.mrf.mxu0
  %598 = vmatprep.mubr.bf16.mxu0 0
  %599 = vmatmul.mubr.bf16.gmra.mxu0 %v369
  %v600 = vpop.f32.mrf.mxu0
  %v601 = vadd.f32 0.0, %v600
  %v602 = vpop.f32.mrf.mxu0
  %v603 = vpop.f32.mrf.mxu0
  %v604 = vadd.f32 0.0, %v603
  %v605 = vpop.f32.mrf.mxu0
  %606 = vmatprep.mubr.bf16.mxu0 0
  %607 = vmatmul.mubr.bf16.gmra.mxu0 %v372
  %v608 = vpop.f32.mrf.mxu0
  %v609 = vadd.f32 0.0, %v608
  %v610 = vpop.f32.mrf.mxu0
  %v611 = vpop.f32.mrf.mxu0
  %v612 = vadd.f32 0.0, %v611
  %v613 = vpop.f32.mrf.mxu0
  %614 = vmatprep.mubr.bf16.mxu0 0
  %615 = vmatmul.mubr.bf16.gmra.mxu0 %v375
  %v616 = vpop.f32.mrf.mxu0
  %v617 = vadd.f32 0.0, %v616
  %v618 = vpop.f32.mrf.mxu0
  %v619 = vpop.f32.mrf.mxu0
  %v620 = vadd.f32 0.0, %v619
  %v621 = vpop.f32.mrf.mxu0
  %622 = vmatprep.mubr.bf16.mxu0 0
  %623 = vmatmul.mubr.bf16.gmra.mxu0 %v378
  %v624 = vpop.f32.mrf.mxu0
  %v625 = vadd.f32 0.0, %v624
  %v626 = vpop.f32.mrf.mxu0
  %v627 = vpop.f32.mrf.mxu0
  %v628 = vadd.f32 0.0, %v627
  %v629 = vpop.f32.mrf.mxu0
  %630 = vmatprep.mubr.bf16.mxu0 0
  %631 = vmatmul.mubr.bf16.gmra.mxu0 %v381
  %v632 = vpop.f32.mrf.mxu0
  %v633 = vadd.f32 0.0, %v632
  %v634 = vpop.f32.mrf.mxu0
  %v635 = vpop.f32.mrf.mxu0
  %v636 = vadd.f32 0.0, %v635
  %v637 = vpop.f32.mrf.mxu0
  %638 = vmatprep.mubr.bf16.mxu0 0
  %639 = vmatmul.mubr.bf16.gmra.mxu0 %v384
  %v640 = vpop.f32.mrf.mxu0
  %v641 = vadd.f32 0.0, %v640
  %v642 = vpop.f32.mrf.mxu0
  %v643 = vpop.f32.mrf.mxu0
  %v644 = vadd.f32 0.0, %v643
  %v645 = vpop.f32.mrf.mxu0
  %646 = vmatprep.mubr.bf16.mxu0 0
  %647 = vmatmul.mubr.bf16.gmra.mxu0 %v387
  %v648 = vpop.f32.mrf.mxu0
  %v649 = vadd.f32 0.0, %v648
  %v650 = vpop.f32.mrf.mxu0
  %v651 = vpop.f32.mrf.mxu0
  %v652 = vadd.f32 0.0, %v651
  %v653 = vpop.f32.mrf.mxu0
  %654 = vmatprep.mubr.bf16.mxu0 0
  %655 = vmatmul.mubr.bf16.gmra.mxu0 %v390
  %v656 = vpop.f32.mrf.mxu0
  %v657 = vadd.f32 0.0, %v656
  %v658 = vpop.f32.mrf.mxu0
  %v659 = vpop.f32.mrf.mxu0
  %v660 = vadd.f32 0.0, %v659
  %v661 = vpop.f32.mrf.mxu0
  %662 = vmatprep.mubr.bf16.mxu0 0
  %663 = vmatmul.mubr.bf16.gmra.mxu0 %v393
  %v664 = vpop.f32.mrf.mxu0
  %v665 = vadd.f32 0.0, %v664
  %v666 = vpop.f32.mrf.mxu0
  %v667 = vpop.f32.mrf.mxu0
  %v668 = vadd.f32 0.0, %v667
  %v669 = vpop.f32.mrf.mxu0
  %670 = vmatprep.mubr.bf16.mxu0 0
  %671 = vmatmul.mubr.bf16.gmra.mxu0 %v396
  %v672 = vpop.f32.mrf.mxu0
  %v673 = vadd.f32 0.0, %v672
  %v674 = vpop.f32.mrf.mxu0
  %v675 = vpop.f32.mrf.mxu0
  %v676 = vadd.f32 0.0, %v675
  %v677 = vpop.f32.mrf.mxu0
  %678 = vmatprep.mubr.bf16.mxu0 0
  %679 = vmatmul.mubr.bf16.gmra.mxu0 %v399
  %v680 = vpop.f32.mrf.mxu0
  %v681 = vadd.f32 0.0, %v680
  %v682 = vpop.f32.mrf.mxu0
  %v683 = vpop.f32.mrf.mxu0
  %v684 = vadd.f32 0.0, %v683
  %v685 = vpop.f32.mrf.mxu0
  %686 = vmatprep.mubr.bf16.mxu0 0
  %687 = vmatmul.mubr.bf16.gmra.mxu0 %v402
  %v688 = vpop.f32.mrf.mxu0
  %v689 = vadd.f32 0.0, %v688
  %v690 = vpop.f32.mrf.mxu0
  %v691 = vpop.f32.mrf.mxu0
  %v692 = vadd.f32 0.0, %v691
  %v693 = vpop.f32.mrf.mxu0
  %694 = vmatprep.mubr.bf16.mxu0 0
  %695 = vmatmul.mubr.bf16.gmra.mxu0 %v405
  %v696 = vpop.f32.mrf.mxu0
  %v697 = vadd.f32 0.0, %v696
  %v698 = vpop.f32.mrf.mxu0
  %v699 = vpop.f32.mrf.mxu0
  %v700 = vadd.f32 0.0, %v699
  %v701 = vpop.f32.mrf.mxu0
  %702 = vdwg.mxu0
  %v767 = vunpack.c.l.b16 %v18
  %v768 = vunpack.c.l.b16 %v19
  %v769 = vunpack.c.l.b16 %v20
  %v770 = vunpack.c.l.b16 %v21
  %v771 = vunpack.c.l.b16 %v22
  %v772 = vunpack.c.l.b16 %v23
  %v773 = vunpack.c.l.b16 %v24
  %v774 = vunpack.c.l.b16 %v25
  %v775 = vunpack.c.l.b16 %v26
  %v776 = vunpack.c.l.b16 %v27
  %v777 = vunpack.c.l.b16 %v28
  %v778 = vunpack.c.l.b16 %v29
  %v779 = vunpack.c.l.b16 %v30
  %v780 = vunpack.c.l.b16 %v31
  %v781 = vunpack.c.l.b16 %v32
  %v782 = vunpack.c.l.b16 %v33
  %v783 = vunpack.c.l.b16 %v34
  %v784 = vunpack.c.l.b16 %v35
  %v785 = vunpack.c.l.b16 %v36
  %v786 = vunpack.c.l.b16 %v37
  %v787 = vunpack.c.l.b16 %v38
  %v788 = vunpack.c.l.b16 %v39
  %v789 = vunpack.c.l.b16 %v40
  %v790 = vunpack.c.l.b16 %v41
  %v791 = vunpack.c.l.b16 %v42
  %v792 = vunpack.c.l.b16 %v43
  %v793 = vunpack.c.l.b16 %v44
  %v794 = vunpack.c.l.b16 %v45
  %v795 = vunpack.c.l.b16 %v46
  %v796 = vunpack.c.l.b16 %v47
  %v797 = vunpack.c.l.b16 %v48
  %v798 = vunpack.c.l.b16 %v49
  %v799 = vunpack.c.l.b16 %v50
  %v800 = vunpack.c.l.b16 %v51
  %v801 = vunpack.c.l.b16 %v52
  %v802 = vunpack.c.l.b16 %v53
  %v803 = vunpack.c.l.b16 %v54
  %v804 = vunpack.c.l.b16 %v55
  %v805 = vunpack.c.l.b16 %v56
  %v806 = vunpack.c.l.b16 %v57
  %v807 = vunpack.c.l.b16 %v58
  %v808 = vunpack.c.l.b16 %v59
  %v809 = vunpack.c.l.b16 %v60
  %v810 = vunpack.c.l.b16 %v61
  %v811 = vunpack.c.l.b16 %v62
  %v812 = vunpack.c.l.b16 %v63
  %v813 = vunpack.c.l.b16 %v64
  %v814 = vunpack.c.l.b16 %v65
  %v815 = vunpack.c.l.b16 %v66
  %v816 = vunpack.c.l.b16 %v67
  %v817 = vunpack.c.l.b16 %v68
  %v818 = vunpack.c.l.b16 %v69
  %v819 = vunpack.c.l.b16 %v70
  %v820 = vunpack.c.l.b16 %v71
  %v821 = vunpack.c.l.b16 %v72
  %v822 = vunpack.c.l.b16 %v73
  %v823 = vunpack.c.l.b16 %v74
  %v824 = vunpack.c.l.b16 %v75
  %v825 = vunpack.c.l.b16 %v76
  %v826 = vunpack.c.l.b16 %v77
  %v827 = vunpack.c.l.b16 %v78
  %v828 = vunpack.c.l.b16 %v79
  %v829 = vunpack.c.l.b16 %v80
  %v830 = vunpack.c.l.b16 %v81
  %v831 = vpack.c.b16 %v768, %v767
  %v832 = vpack.c.b16 %v770, %v769
  %v833 = vpack.c.b16 %v772, %v771
  %v834 = vpack.c.b16 %v774, %v773
  %v835 = vpack.c.b16 %v776, %v775
  %v836 = vpack.c.b16 %v778, %v777
  %v837 = vpack.c.b16 %v780, %v779
  %v838 = vpack.c.b16 %v782, %v781
  %v839 = vpack.c.b16 %v784, %v783
  %v840 = vpack.c.b16 %v786, %v785
  %v841 = vpack.c.b16 %v788, %v787
  %v842 = vpack.c.b16 %v790, %v789
  %v843 = vpack.c.b16 %v792, %v791
  %v844 = vpack.c.b16 %v794, %v793
  %v845 = vpack.c.b16 %v796, %v795
  %v846 = vpack.c.b16 %v798, %v797
  %v847 = vpack.c.b16 %v800, %v799
  %v848 = vpack.c.b16 %v802, %v801
  %v849 = vpack.c.b16 %v804, %v803
  %v850 = vpack.c.b16 %v806, %v805
  %v851 = vpack.c.b16 %v808, %v807
  %v852 = vpack.c.b16 %v810, %v809
  %v853 = vpack.c.b16 %v812, %v811
  %v854 = vpack.c.b16 %v814, %v813
  %v855 = vpack.c.b16 %v816, %v815
  %v856 = vpack.c.b16 %v818, %v817
  %v857 = vpack.c.b16 %v820, %v819
  %v858 = vpack.c.b16 %v822, %v821
  %v859 = vpack.c.b16 %v824, %v823
  %v860 = vpack.c.b16 %v826, %v825
  %v861 = vpack.c.b16 %v828, %v827
  %v862 = vpack.c.b16 %v830, %v829
  %v864 = vsel %vm310, %v831, 0
  %v867 = vsel %vm310, %v832, 0
  %v870 = vsel %vm310, %v833, 0
  %v873 = vsel %vm310, %v834, 0
  %v876 = vsel %vm310, %v835, 0
  %v879 = vsel %vm310, %v836, 0
  %v882 = vsel %vm310, %v837, 0
  %v885 = vsel %vm310, %v838, 0
  %v888 = vsel %vm310, %v839, 0
  %v891 = vsel %vm310, %v840, 0
  %v894 = vsel %vm310, %v841, 0
  %v897 = vsel %vm310, %v842, 0
  %v900 = vsel %vm310, %v843, 0
  %v903 = vsel %vm310, %v844, 0
  %v906 = vsel %vm310, %v845, 0
  %v909 = vsel %vm310, %v846, 0
  %v912 = vsel %vm310, %v847, 0
  %v915 = vsel %vm310, %v848, 0
  %v918 = vsel %vm310, %v849, 0
  %v921 = vsel %vm310, %v850, 0
  %v924 = vsel %vm310, %v851, 0
  %v927 = vsel %vm310, %v852, 0
  %v930 = vsel %vm310, %v853, 0
  %v933 = vsel %vm310, %v854, 0
  %v936 = vsel %vm310, %v855, 0
  %v939 = vsel %vm310, %v856, 0
  %v942 = vsel %vm310, %v857, 0
  %v945 = vsel %vm310, %v858, 0
  %v948 = vsel %vm310, %v859, 0
  %v951 = vsel %vm310, %v860, 0
  %v954 = vsel %vm310, %v861, 0
  %v957 = vsel %vm310, %v862, 0
  %v960 = vand.u32 %v82, %v410
  %962 = vmatprep.subr.bf16.mxu0 0
  %963 = vmatpush1.bf16.msra.mxu0 0
  %964 = vmatprep.subr.bf16.mxu0 0
  %965 = vmatpush1.bf16.msra.mxu0 0
  %966 = vmatprep.subr.bf16.mxu0 0
  %967 = vmatpush1.bf16.msra.mxu0 0
  %968 = vmatprep.subr.bf16.mxu0 0
  %969 = vmatpush1.bf16.msra.mxu0 0
  %970 = vmatprep.subr.bf16.mxu0 0
  %971 = vmatpush1.bf16.msra.mxu0 0
  %972 = vmatprep.subr.bf16.mxu0 0
  %973 = vmatpush1.bf16.msra.mxu0 0
  %974 = vmatprep.subr.bf16.mxu0 0
  %975 = vmatpush1.bf16.msra.mxu0 0
  %976 = vmatprep.subr.bf16.mxu0 0
  %977 = vmatpush1.bf16.msra.mxu0 %v960
  %978 = vmatprep.subr.bf16.mxu0 0
  %979 = vmatpush2.bf16.msra.mxu0 0
  %980 = vmatprep.subr.bf16.mxu0 0
  %981 = vmatpush2.bf16.msra.mxu0 0
  %982 = vmatprep.subr.bf16.mxu0 0
  %983 = vmatpush2.bf16.msra.mxu0 0
  %984 = vmatprep.subr.bf16.mxu0 0
  %985 = vmatpush2.bf16.msra.mxu0 0
  %986 = vmatprep.subr.bf16.mxu0 0
  %987 = vmatpush2.bf16.msra.mxu0 0
  %988 = vmatprep.subr.bf16.mxu0 0
  %989 = vmatpush2.bf16.msra.mxu0 0
  %990 = vmatprep.subr.bf16.mxu0 0
  %991 = vmatpush2.bf16.msra.mxu0 0
  %992 = vmatprep.subr.bf16.mxu0 0
  %993 = vmatpush2.bf16.msra.mxu0 0
  %994 = vmatprep.mubr.bf16.mxu0 0
  %995 = vmatmul.mubr.bf16.gmra.mxu0 %v864
  %v996 = vpop.f32.mrf.mxu0
  %v997 = vadd.f32 %v449, %v996
  %v998 = vpop.f32.mrf.mxu0
  %v999 = vpop.f32.mrf.mxu0
  %v1000 = vadd.f32 %v452, %v999
  %v1001 = vpop.f32.mrf.mxu0
  %1002 = vmatprep.mubr.bf16.mxu0 0
  %1003 = vmatmul.mubr.bf16.gmra.mxu0 %v867
  %v1004 = vpop.f32.mrf.mxu0
  %v1005 = vadd.f32 %v457, %v1004
  %v1006 = vpop.f32.mrf.mxu0
  %v1007 = vpop.f32.mrf.mxu0
  %v1008 = vadd.f32 %v460, %v1007
  %v1009 = vpop.f32.mrf.mxu0
  %1010 = vmatprep.mubr.bf16.mxu0 0
  %1011 = vmatmul.mubr.bf16.gmra.mxu0 %v870
  %v1012 = vpop.f32.mrf.mxu0
  %v1013 = vadd.f32 %v465, %v1012
  %v1014 = vpop.f32.mrf.mxu0
  %v1015 = vpop.f32.mrf.mxu0
  %v1016 = vadd.f32 %v468, %v1015
  %v1017 = vpop.f32.mrf.mxu0
  %1018 = vmatprep.mubr.bf16.mxu0 0
  %1019 = vmatmul.mubr.bf16.gmra.mxu0 %v873
  %v1020 = vpop.f32.mrf.mxu0
  %v1021 = vadd.f32 %v473, %v1020
  %v1022 = vpop.f32.mrf.mxu0
  %v1023 = vpop.f32.mrf.mxu0
  %v1024 = vadd.f32 %v476, %v1023
  %v1025 = vpop.f32.mrf.mxu0
  %1026 = vmatprep.mubr.bf16.mxu0 0
  %1027 = vmatmul.mubr.bf16.gmra.mxu0 %v876
  %v1028 = vpop.f32.mrf.mxu0
  %v1029 = vadd.f32 %v481, %v1028
  %v1030 = vpop.f32.mrf.mxu0
  %v1031 = vpop.f32.mrf.mxu0
  %v1032 = vadd.f32 %v484, %v1031
  %v1033 = vpop.f32.mrf.mxu0
  %1034 = vmatprep.mubr.bf16.mxu0 0
  %1035 = vmatmul.mubr.bf16.gmra.mxu0 %v879
  %v1036 = vpop.f32.mrf.mxu0
  %v1037 = vadd.f32 %v489, %v1036
  %v1038 = vpop.f32.mrf.mxu0
  %v1039 = vpop.f32.mrf.mxu0
  %v1040 = vadd.f32 %v492, %v1039
  %v1041 = vpop.f32.mrf.mxu0
  %1042 = vmatprep.mubr.bf16.mxu0 0
  %1043 = vmatmul.mubr.bf16.gmra.mxu0 %v882
  %v1044 = vpop.f32.mrf.mxu0
  %v1045 = vadd.f32 %v497, %v1044
  %v1046 = vpop.f32.mrf.mxu0
  %v1047 = vpop.f32.mrf.mxu0
  %v1048 = vadd.f32 %v500, %v1047
  %v1049 = vpop.f32.mrf.mxu0
  %1050 = vmatprep.mubr.bf16.mxu0 0
  %1051 = vmatmul.mubr.bf16.gmra.mxu0 %v885
  %v1052 = vpop.f32.mrf.mxu0
  %v1053 = vadd.f32 %v505, %v1052
  %v1054 = vpop.f32.mrf.mxu0
  %v1055 = vpop.f32.mrf.mxu0
  %v1056 = vadd.f32 %v508, %v1055
  %v1057 = vpop.f32.mrf.mxu0
  %1058 = vmatprep.mubr.bf16.mxu0 0
  %1059 = vmatmul.mubr.bf16.gmra.mxu0 %v888
  %v1060 = vpop.f32.mrf.mxu0
  %v1061 = vadd.f32 %v513, %v1060
  %v1062 = vpop.f32.mrf.mxu0
  %v1063 = vpop.f32.mrf.mxu0
  %v1064 = vadd.f32 %v516, %v1063
  %v1065 = vpop.f32.mrf.mxu0
  %1066 = vmatprep.mubr.bf16.mxu0 0
  %1067 = vmatmul.mubr.bf16.gmra.mxu0 %v891
  %v1068 = vpop.f32.mrf.mxu0
  %v1069 = vadd.f32 %v521, %v1068
  %v1070 = vpop.f32.mrf.mxu0
  %v1071 = vpop.f32.mrf.mxu0
  %v1072 = vadd.f32 %v524, %v1071
  %v1073 = vpop.f32.mrf.mxu0
  %1074 = vmatprep.mubr.bf16.mxu0 0
  %1075 = vmatmul.mubr.bf16.gmra.mxu0 %v894
  %v1076 = vpop.f32.mrf.mxu0
  %v1077 = vadd.f32 %v529, %v1076
  %v1078 = vpop.f32.mrf.mxu0
  %v1079 = vpop.f32.mrf.mxu0
  %v1080 = vadd.f32 %v532, %v1079
  %v1081 = vpop.f32.mrf.mxu0
  %1082 = vmatprep.mubr.bf16.mxu0 0
  %1083 = vmatmul.mubr.bf16.gmra.mxu0 %v897
  %v1084 = vpop.f32.mrf.mxu0
  %v1085 = vadd.f32 %v537, %v1084
  %v1086 = vpop.f32.mrf.mxu0
  %v1087 = vpop.f32.mrf.mxu0
  %v1088 = vadd.f32 %v540, %v1087
  %v1089 = vpop.f32.mrf.mxu0
  %1090 = vmatprep.mubr.bf16.mxu0 0
  %1091 = vmatmul.mubr.bf16.gmra.mxu0 %v900
  %v1092 = vpop.f32.mrf.mxu0
  %v1093 = vadd.f32 %v545, %v1092
  %v1094 = vpop.f32.mrf.mxu0
  %v1095 = vpop.f32.mrf.mxu0
  %v1096 = vadd.f32 %v548, %v1095
  %v1097 = vpop.f32.mrf.mxu0
  %1098 = vmatprep.mubr.bf16.mxu0 0
  %1099 = vmatmul.mubr.bf16.gmra.mxu0 %v903
  %v1100 = vpop.f32.mrf.mxu0
  %v1101 = vadd.f32 %v553, %v1100
  %v1102 = vpop.f32.mrf.mxu0
  %v1103 = vpop.f32.mrf.mxu0
  %v1104 = vadd.f32 %v556, %v1103
  %v1105 = vpop.f32.mrf.mxu0
  %1106 = vmatprep.mubr.bf16.mxu0 0
  %1107 = vmatmul.mubr.bf16.gmra.mxu0 %v906
  %v1108 = vpop.f32.mrf.mxu0
  %v1109 = vadd.f32 %v561, %v1108
  %v1110 = vpop.f32.mrf.mxu0
  %v1111 = vpop.f32.mrf.mxu0
  %v1112 = vadd.f32 %v564, %v1111
  %v1113 = vpop.f32.mrf.mxu0
  %1114 = vmatprep.mubr.bf16.mxu0 0
  %1115 = vmatmul.mubr.bf16.gmra.mxu0 %v909
  %v1116 = vpop.f32.mrf.mxu0
  %v1117 = vadd.f32 %v569, %v1116
  %v1118 = vpop.f32.mrf.mxu0
  %v1119 = vpop.f32.mrf.mxu0
  %v1120 = vadd.f32 %v572, %v1119
  %v1121 = vpop.f32.mrf.mxu0
  %1122 = vmatprep.mubr.bf16.mxu0 0
  %1123 = vmatmul.mubr.bf16.gmra.mxu0 %v912
  %v1124 = vpop.f32.mrf.mxu0
  %v1125 = vadd.f32 %v577, %v1124
  %v1126 = vpop.f32.mrf.mxu0
  %v1127 = vpop.f32.mrf.mxu0
  %v1128 = vadd.f32 %v580, %v1127
  %v1129 = vpop.f32.mrf.mxu0
  %1130 = vmatprep.mubr.bf16.mxu0 0
  %1131 = vmatmul.mubr.bf16.gmra.mxu0 %v915
  %v1132 = vpop.f32.mrf.mxu0
  %v1133 = vadd.f32 %v585, %v1132
  %v1134 = vpop.f32.mrf.mxu0
  %v1135 = vpop.f32.mrf.mxu0
  %v1136 = vadd.f32 %v588, %v1135
  %v1137 = vpop.f32.mrf.mxu0
  %1138 = vmatprep.mubr.bf16.mxu0 0
  %1139 = vmatmul.mubr.bf16.gmra.mxu0 %v918
  %v1140 = vpop.f32.mrf.mxu0
  %v1141 = vadd.f32 %v593, %v1140
  %v1142 = vpop.f32.mrf.mxu0
  %v1143 = vpop.f32.mrf.mxu0
  %v1144 = vadd.f32 %v596, %v1143
  %v1145 = vpop.f32.mrf.mxu0
  %1146 = vmatprep.mubr.bf16.mxu0 0
  %1147 = vmatmul.mubr.bf16.gmra.mxu0 %v921
  %v1148 = vpop.f32.mrf.mxu0
  %v1149 = vadd.f32 %v601, %v1148
  %v1150 = vpop.f32.mrf.mxu0
  %v1151 = vpop.f32.mrf.mxu0
  %v1152 = vadd.f32 %v604, %v1151
  %v1153 = vpop.f32.mrf.mxu0
  %1154 = vmatprep.mubr.bf16.mxu0 0
  %1155 = vmatmul.mubr.bf16.gmra.mxu0 %v924
  %v1156 = vpop.f32.mrf.mxu0
  %v1157 = vadd.f32 %v609, %v1156
  %v1158 = vpop.f32.mrf.mxu0
  %v1159 = vpop.f32.mrf.mxu0
  %v1160 = vadd.f32 %v612, %v1159
  %v1161 = vpop.f32.mrf.mxu0
  %1162 = vmatprep.mubr.bf16.mxu0 0
  %1163 = vmatmul.mubr.bf16.gmra.mxu0 %v927
  %v1164 = vpop.f32.mrf.mxu0
  %v1165 = vadd.f32 %v617, %v1164
  %v1166 = vpop.f32.mrf.mxu0
  %v1167 = vpop.f32.mrf.mxu0
  %v1168 = vadd.f32 %v620, %v1167
  %v1169 = vpop.f32.mrf.mxu0
  %1170 = vmatprep.mubr.bf16.mxu0 0
  %1171 = vmatmul.mubr.bf16.gmra.mxu0 %v930
  %v1172 = vpop.f32.mrf.mxu0
  %v1173 = vadd.f32 %v625, %v1172
  %v1174 = vpop.f32.mrf.mxu0
  %v1175 = vpop.f32.mrf.mxu0
  %v1176 = vadd.f32 %v628, %v1175
  %v1177 = vpop.f32.mrf.mxu0
  %1178 = vmatprep.mubr.bf16.mxu0 0
  %1179 = vmatmul.mubr.bf16.gmra.mxu0 %v933
  %v1180 = vpop.f32.mrf.mxu0
  %v1181 = vadd.f32 %v633, %v1180
  %v1182 = vpop.f32.mrf.mxu0
  %v1183 = vpop.f32.mrf.mxu0
  %v1184 = vadd.f32 %v636, %v1183
  %v1185 = vpop.f32.mrf.mxu0
  %1186 = vmatprep.mubr.bf16.mxu0 0
  %1187 = vmatmul.mubr.bf16.gmra.mxu0 %v936
  %v1188 = vpop.f32.mrf.mxu0
  %v1189 = vadd.f32 %v641, %v1188
  %v1190 = vpop.f32.mrf.mxu0
  %v1191 = vpop.f32.mrf.mxu0
  %v1192 = vadd.f32 %v644, %v1191
  %v1193 = vpop.f32.mrf.mxu0
  %1194 = vmatprep.mubr.bf16.mxu0 0
  %1195 = vmatmul.mubr.bf16.gmra.mxu0 %v939
  %v1196 = vpop.f32.mrf.mxu0
  %v1197 = vadd.f32 %v649, %v1196
  %v1198 = vpop.f32.mrf.mxu0
  %v1199 = vpop.f32.mrf.mxu0
  %v1200 = vadd.f32 %v652, %v1199
  %v1201 = vpop.f32.mrf.mxu0
  %1202 = vmatprep.mubr.bf16.mxu0 0
  %1203 = vmatmul.mubr.bf16.gmra.mxu0 %v942
  %v1204 = vpop.f32.mrf.mxu0
  %v1205 = vadd.f32 %v657, %v1204
  %v1206 = vpop.f32.mrf.mxu0
  %v1207 = vpop.f32.mrf.mxu0
  %v1208 = vadd.f32 %v660, %v1207
  %v1209 = vpop.f32.mrf.mxu0
  %1210 = vmatprep.mubr.bf16.mxu0 0
  %1211 = vmatmul.mubr.bf16.gmra.mxu0 %v945
  %v1212 = vpop.f32.mrf.mxu0
  %v1213 = vadd.f32 %v665, %v1212
  %v1214 = vpop.f32.mrf.mxu0
  %v1215 = vpop.f32.mrf.mxu0
  %v1216 = vadd.f32 %v668, %v1215
  %v1217 = vpop.f32.mrf.mxu0
  %1218 = vmatprep.mubr.bf16.mxu0 0
  %1219 = vmatmul.mubr.bf16.gmra.mxu0 %v948
  %v1220 = vpop.f32.mrf.mxu0
  %v1221 = vadd.f32 %v673, %v1220
  %v1222 = vpop.f32.mrf.mxu0
  %v1223 = vpop.f32.mrf.mxu0
  %v1224 = vadd.f32 %v676, %v1223
  %v1225 = vpop.f32.mrf.mxu0
  %1226 = vmatprep.mubr.bf16.mxu0 0
  %1227 = vmatmul.mubr.bf16.gmra.mxu0 %v951
  %v1228 = vpop.f32.mrf.mxu0
  %v1229 = vadd.f32 %v681, %v1228
  %v1230 = vpop.f32.mrf.mxu0
  %v1231 = vpop.f32.mrf.mxu0
  %v1232 = vadd.f32 %v684, %v1231
  %v1233 = vpop.f32.mrf.mxu0
  %1234 = vmatprep.mubr.bf16.mxu0 0
  %1235 = vmatmul.mubr.bf16.gmra.mxu0 %v954
  %v1236 = vpop.f32.mrf.mxu0
  %v1237 = vadd.f32 %v689, %v1236
  %v1238 = vpop.f32.mrf.mxu0
  %v1239 = vpop.f32.mrf.mxu0
  %v1240 = vadd.f32 %v692, %v1239
  %v1241 = vpop.f32.mrf.mxu0
  %1242 = vmatprep.mubr.bf16.mxu0 0
  %1243 = vmatmul.mubr.bf16.gmra.mxu0 %v957
  %v1244 = vpop.f32.mrf.mxu0
  %v1245 = vadd.f32 %v697, %v1244
  %v1246 = vpop.f32.mrf.mxu0
  %v1247 = vpop.f32.mrf.mxu0
  %v1248 = vadd.f32 %v700, %v1247
  %v1249 = vpop.f32.mrf.mxu0
  %1250 = vdwg.mxu0
  %s1251 = scalar_lea.vmem %s0, 512
  %v1252 = vld [vmem:[%s1251] sm:$0xf]
  %v1253 = vld [vmem:[%s1251 + $0x4] sm:$0xf]
  %v1254 = vld [vmem:[%s1251 + $0x8] sm:$0xf]
  %v1255 = vld [vmem:[%s1251 + $0xc] sm:$0xf]
  %v1256 = vld [vmem:[%s1251 + $0x10] sm:$0xf]
  %v1257 = vld [vmem:[%s1251 + $0x14] sm:$0xf]
  %v1258 = vld [vmem:[%s1251 + $0x18] sm:$0xf]
  %v1259 = vld [vmem:[%s1251 + $0x1c] sm:$0xf]
  %v1260 = vld [vmem:[%s1251 + $0x20] sm:$0xf]
  %v1261 = vld [vmem:[%s1251 + $0x24] sm:$0xf]
  %v1262 = vld [vmem:[%s1251 + $0x28] sm:$0xf]
  %v1263 = vld [vmem:[%s1251 + $0x2c] sm:$0xf]
  %v1264 = vld [vmem:[%s1251 + $0x30] sm:$0xf]
  %v1265 = vld [vmem:[%s1251 + $0x34] sm:$0xf]
  %v1266 = vld [vmem:[%s1251 + $0x38] sm:$0xf]
  %v1267 = vld [vmem:[%s1251 + $0x3c] sm:$0xf]
  %v1268 = vld [vmem:[%s1251 + $0x40] sm:$0xf]
  %v1269 = vld [vmem:[%s1251 + $0x44] sm:$0xf]
  %v1270 = vld [vmem:[%s1251 + $0x48] sm:$0xf]
  %v1271 = vld [vmem:[%s1251 + $0x4c] sm:$0xf]
  %v1272 = vld [vmem:[%s1251 + $0x50] sm:$0xf]
  %v1273 = vld [vmem:[%s1251 + $0x54] sm:$0xf]
  %v1274 = vld [vmem:[%s1251 + $0x58] sm:$0xf]
  %v1275 = vld [vmem:[%s1251 + $0x5c] sm:$0xf]
  %v1276 = vld [vmem:[%s1251 + $0x60] sm:$0xf]
  %v1277 = vld [vmem:[%s1251 + $0x64] sm:$0xf]
  %v1278 = vld [vmem:[%s1251 + $0x68] sm:$0xf]
  %v1279 = vld [vmem:[%s1251 + $0x6c] sm:$0xf]
  %v1280 = vld [vmem:[%s1251 + $0x70] sm:$0xf]
  %v1281 = vld [vmem:[%s1251 + $0x74] sm:$0xf]
  %v1282 = vld [vmem:[%s1251 + $0x78] sm:$0xf]
  %v1283 = vld [vmem:[%s1251 + $0x7c] sm:$0xf]
  %v1284 = vld [vmem:[%s1251 + $0x80] sm:$0xf]
  %v1285 = vld [vmem:[%s1251 + $0x84] sm:$0xf]
  %v1286 = vld [vmem:[%s1251 + $0x88] sm:$0xf]
  %v1287 = vld [vmem:[%s1251 + $0x8c] sm:$0xf]
  %v1288 = vld [vmem:[%s1251 + $0x90] sm:$0xf]
  %v1289 = vld [vmem:[%s1251 + $0x94] sm:$0xf]
  %v1290 = vld [vmem:[%s1251 + $0x98] sm:$0xf]
  %v1291 = vld [vmem:[%s1251 + $0x9c] sm:$0xf]
  %v1292 = vld [vmem:[%s1251 + $0xa0] sm:$0xf]
  %v1293 = vld [vmem:[%s1251 + $0xa4] sm:$0xf]
  %v1294 = vld [vmem:[%s1251 + $0xa8] sm:$0xf]
  %v1295 = vld [vmem:[%s1251 + $0xac] sm:$0xf]
  %v1296 = vld [vmem:[%s1251 + $0xb0] sm:$0xf]
  %v1297 = vld [vmem:[%s1251 + $0xb4] sm:$0xf]
  %v1298 = vld [vmem:[%s1251 + $0xb8] sm:$0xf]
  %v1299 = vld [vmem:[%s1251 + $0xbc] sm:$0xf]
  %v1300 = vld [vmem:[%s1251 + $0xc0] sm:$0xf]
  %v1301 = vld [vmem:[%s1251 + $0xc4] sm:$0xf]
  %v1302 = vld [vmem:[%s1251 + $0xc8] sm:$0xf]
  %v1303 = vld [vmem:[%s1251 + $0xcc] sm:$0xf]
  %v1304 = vld [vmem:[%s1251 + $0xd0] sm:$0xf]
  %v1305 = vld [vmem:[%s1251 + $0xd4] sm:$0xf]
  %v1306 = vld [vmem:[%s1251 + $0xd8] sm:$0xf]
  %v1307 = vld [vmem:[%s1251 + $0xdc] sm:$0xf]
  %v1308 = vld [vmem:[%s1251 + $0xe0] sm:$0xf]
  %v1309 = vld [vmem:[%s1251 + $0xe4] sm:$0xf]
  %v1310 = vld [vmem:[%s1251 + $0xe8] sm:$0xf]
  %v1311 = vld [vmem:[%s1251 + $0xec] sm:$0xf]
  %v1312 = vld [vmem:[%s1251 + $0xf0] sm:$0xf]
  %v1313 = vld [vmem:[%s1251 + $0xf4] sm:$0xf]
  %v1314 = vld [vmem:[%s1251 + $0xf8] sm:$0xf]
  %v1315 = vld [vmem:[%s1251 + $0xfc] sm:$0xf]
  %s1316 = scalar_lea.vmem %s1, 4
  %v1317 = vld [vmem:[%s1316] sm:$0x3]
  %v1382 = vunpack.c.l.b16 %v1252
  %v1383 = vunpack.c.l.b16 %v1253
  %v1384 = vunpack.c.l.b16 %v1254
  %v1385 = vunpack.c.l.b16 %v1255
  %v1386 = vunpack.c.l.b16 %v1256
  %v1387 = vunpack.c.l.b16 %v1257
  %v1388 = vunpack.c.l.b16 %v1258
  %v1389 = vunpack.c.l.b16 %v1259
  %v1390 = vunpack.c.l.b16 %v1260
  %v1391 = vunpack.c.l.b16 %v1261
  %v1392 = vunpack.c.l.b16 %v1262
  %v1393 = vunpack.c.l.b16 %v1263
  %v1394 = vunpack.c.l.b16 %v1264
  %v1395 = vunpack.c.l.b16 %v1265
  %v1396 = vunpack.c.l.b16 %v1266
  %v1397 = vunpack.c.l.b16 %v1267
  %v1398 = vunpack.c.l.b16 %v1268
  %v1399 = vunpack.c.l.b16 %v1269
  %v1400 = vunpack.c.l.b16 %v1270
  %v1401 = vunpack.c.l.b16 %v1271
  %v1402 = vunpack.c.l.b16 %v1272
  %v1403 = vunpack.c.l.b16 %v1273
  %v1404 = vunpack.c.l.b16 %v1274
  %v1405 = vunpack.c.l.b16 %v1275
  %v1406 = vunpack.c.l.b16 %v1276
  %v1407 = vunpack.c.l.b16 %v1277
  %v1408 = vunpack.c.l.b16 %v1278
  %v1409 = vunpack.c.l.b16 %v1279
  %v1410 = vunpack.c.l.b16 %v1280
  %v1411 = vunpack.c.l.b16 %v1281
  %v1412 = vunpack.c.l.b16 %v1282
  %v1413 = vunpack.c.l.b16 %v1283
  %v1414 = vunpack.c.l.b16 %v1284
  %v1415 = vunpack.c.l.b16 %v1285
  %v1416 = vunpack.c.l.b16 %v1286
  %v1417 = vunpack.c.l.b16 %v1287
  %v1418 = vunpack.c.l.b16 %v1288
  %v1419 = vunpack.c.l.b16 %v1289
  %v1420 = vunpack.c.l.b16 %v1290
  %v1421 = vunpack.c.l.b16 %v1291
  %v1422 = vunpack.c.l.b16 %v1292
  %v1423 = vunpack.c.l.b16 %v1293
  %v1424 = vunpack.c.l.b16 %v1294
  %v1425 = vunpack.c.l.b16 %v1295
  %v1426 = vunpack.c.l.b16 %v1296
  %v1427 = vunpack.c.l.b16 %v1297
  %v1428 = vunpack.c.l.b16 %v1298
  %v1429 = vunpack.c.l.b16 %v1299
  %v1430 = vunpack.c.l.b16 %v1300
  %v1431 = vunpack.c.l.b16 %v1301
  %v1432 = vunpack.c.l.b16 %v1302
  %v1433 = vunpack.c.l.b16 %v1303
  %v1434 = vunpack.c.l.b16 %v1304
  %v1435 = vunpack.c.l.b16 %v1305
  %v1436 = vunpack.c.l.b16 %v1306
  %v1437 = vunpack.c.l.b16 %v1307
  %v1438 = vunpack.c.l.b16 %v1308
  %v1439 = vunpack.c.l.b16 %v1309
  %v1440 = vunpack.c.l.b16 %v1310
  %v1441 = vunpack.c.l.b16 %v1311
  %v1442 = vunpack.c.l.b16 %v1312
  %v1443 = vunpack.c.l.b16 %v1313
  %v1444 = vunpack.c.l.b16 %v1314
  %v1445 = vunpack.c.l.b16 %v1315
  %v1446 = vpack.c.b16 %v1383, %v1382
  %v1447 = vpack.c.b16 %v1385, %v1384
  %v1448 = vpack.c.b16 %v1387, %v1386
  %v1449 = vpack.c.b16 %v1389, %v1388
  %v1450 = vpack.c.b16 %v1391, %v1390
  %v1451 = vpack.c.b16 %v1393, %v1392
  %v1452 = vpack.c.b16 %v1395, %v1394
  %v1453 = vpack.c.b16 %v1397, %v1396
  %v1454 = vpack.c.b16 %v1399, %v1398
  %v1455 = vpack.c.b16 %v1401, %v1400
  %v1456 = vpack.c.b16 %v1403, %v1402
  %v1457 = vpack.c.b16 %v1405, %v1404
  %v1458 = vpack.c.b16 %v1407, %v1406
  %v1459 = vpack.c.b16 %v1409, %v1408
  %v1460 = vpack.c.b16 %v1411, %v1410
  %v1461 = vpack.c.b16 %v1413, %v1412
  %v1462 = vpack.c.b16 %v1415, %v1414
  %v1463 = vpack.c.b16 %v1417, %v1416
  %v1464 = vpack.c.b16 %v1419, %v1418
  %v1465 = vpack.c.b16 %v1421, %v1420
  %v1466 = vpack.c.b16 %v1423, %v1422
  %v1467 = vpack.c.b16 %v1425, %v1424
  %v1468 = vpack.c.b16 %v1427, %v1426
  %v1469 = vpack.c.b16 %v1429, %v1428
  %v1470 = vpack.c.b16 %v1431, %v1430
  %v1471 = vpack.c.b16 %v1433, %v1432
  %v1472 = vpack.c.b16 %v1435, %v1434
  %v1473 = vpack.c.b16 %v1437, %v1436
  %v1474 = vpack.c.b16 %v1439, %v1438
  %v1475 = vpack.c.b16 %v1441, %v1440
  %v1476 = vpack.c.b16 %v1443, %v1442
  %v1477 = vpack.c.b16 %v1445, %v1444
  %v1479 = vsel %vm310, %v1446, 0
  %v1482 = vsel %vm310, %v1447, 0
  %v1485 = vsel %vm310, %v1448, 0
  %v1488 = vsel %vm310, %v1449, 0
  %v1491 = vsel %vm310, %v1450, 0
  %v1494 = vsel %vm310, %v1451, 0
  %v1497 = vsel %vm310, %v1452, 0
  %v1500 = vsel %vm310, %v1453, 0
  %v1503 = vsel %vm310, %v1454, 0
  %v1506 = vsel %vm310, %v1455, 0
  %v1509 = vsel %vm310, %v1456, 0
  %v1512 = vsel %vm310, %v1457, 0
  %v1515 = vsel %vm310, %v1458, 0
  %v1518 = vsel %vm310, %v1459, 0
  %v1521 = vsel %vm310, %v1460, 0
  %v1524 = vsel %vm310, %v1461, 0
  %v1527 = vsel %vm310, %v1462, 0
  %v1530 = vsel %vm310, %v1463, 0
  %v1533 = vsel %vm310, %v1464, 0
  %v1536 = vsel %vm310, %v1465, 0
  %v1539 = vsel %vm310, %v1466, 0
  %v1542 = vsel %vm310, %v1467, 0
  %v1545 = vsel %vm310, %v1468, 0
  %v1548 = vsel %vm310, %v1469, 0
  %v1551 = vsel %vm310, %v1470, 0
  %v1554 = vsel %vm310, %v1471, 0
  %v1557 = vsel %vm310, %v1472, 0
  %v1560 = vsel %vm310, %v1473, 0
  %v1563 = vsel %vm310, %v1474, 0
  %v1566 = vsel %vm310, %v1475, 0
  %v1569 = vsel %vm310, %v1476, 0
  %v1572 = vsel %vm310, %v1477, 0
  %v1575 = vand.u32 %v1317, %v410
  %1577 = vmatprep.subr.bf16.mxu0 0
  %1578 = vmatpush1.bf16.msra.mxu0 0
  %1579 = vmatprep.subr.bf16.mxu0 0
  %1580 = vmatpush1.bf16.msra.mxu0 0
  %1581 = vmatprep.subr.bf16.mxu0 0
  %1582 = vmatpush1.bf16.msra.mxu0 0
  %1583 = vmatprep.subr.bf16.mxu0 0
  %1584 = vmatpush1.bf16.msra.mxu0 0
  %1585 = vmatprep.subr.bf16.mxu0 0
  %1586 = vmatpush1.bf16.msra.mxu0 0
  %1587 = vmatprep.subr.bf16.mxu0 0
  %1588 = vmatpush1.bf16.msra.mxu0 0
  %1589 = vmatprep.subr.bf16.mxu0 0
  %1590 = vmatpush1.bf16.msra.mxu0 0
  %1591 = vmatprep.subr.bf16.mxu0 0
  %1592 = vmatpush1.bf16.msra.mxu0 %v1575
  %1593 = vmatprep.subr.bf16.mxu0 0
  %1594 = vmatpush2.bf16.msra.mxu0 0
  %1595 = vmatprep.subr.bf16.mxu0 0
  %1596 = vmatpush2.bf16.msra.mxu0 0
  %1597 = vmatprep.subr.bf16.mxu0 0
  %1598 = vmatpush2.bf16.msra.mxu0 0
  %1599 = vmatprep.subr.bf16.mxu0 0
  %1600 = vmatpush2.bf16.msra.mxu0 0
  %1601 = vmatprep.subr.bf16.mxu0 0
  %1602 = vmatpush2.bf16.msra.mxu0 0
  %1603 = vmatprep.subr.bf16.mxu0 0
  %1604 = vmatpush2.bf16.msra.mxu0 0
  %1605 = vmatprep.subr.bf16.mxu0 0
  %1606 = vmatpush2.bf16.msra.mxu0 0
  %1607 = vmatprep.subr.bf16.mxu0 0
  %1608 = vmatpush2.bf16.msra.mxu0 0
  %1609 = vmatprep.mubr.bf16.mxu0 0
  %1610 = vmatmul.mubr.bf16.gmra.mxu0 %v1479
  %v1611 = vpop.f32.mrf.mxu0
  %v1612 = vadd.f32 0.0, %v1611
  %v1613 = vpop.f32.mrf.mxu0
  %v1614 = vpop.f32.mrf.mxu0
  %v1615 = vadd.f32 0.0, %v1614
  %v1616 = vpop.f32.mrf.mxu0
  %1617 = vmatprep.mubr.bf16.mxu0 0
  %1618 = vmatmul.mubr.bf16.gmra.mxu0 %v1482
  %v1619 = vpop.f32.mrf.mxu0
  %v1620 = vadd.f32 0.0, %v1619
  %v1621 = vpop.f32.mrf.mxu0
  %v1622 = vpop.f32.mrf.mxu0
  %v1623 = vadd.f32 0.0, %v1622
  %v1624 = vpop.f32.mrf.mxu0
  %1625 = vmatprep.mubr.bf16.mxu0 0
  %1626 = vmatmul.mubr.bf16.gmra.mxu0 %v1485
  %v1627 = vpop.f32.mrf.mxu0
  %v1628 = vadd.f32 0.0, %v1627
  %v1629 = vpop.f32.mrf.mxu0
  %v1630 = vpop.f32.mrf.mxu0
  %v1631 = vadd.f32 0.0, %v1630
  %v1632 = vpop.f32.mrf.mxu0
  %1633 = vmatprep.mubr.bf16.mxu0 0
  %1634 = vmatmul.mubr.bf16.gmra.mxu0 %v1488
  %v1635 = vpop.f32.mrf.mxu0
  %v1636 = vadd.f32 0.0, %v1635
  %v1637 = vpop.f32.mrf.mxu0
  %v1638 = vpop.f32.mrf.mxu0
  %v1639 = vadd.f32 0.0, %v1638
  %v1640 = vpop.f32.mrf.mxu0
  %1641 = vmatprep.mubr.bf16.mxu0 0
  %1642 = vmatmul.mubr.bf16.gmra.mxu0 %v1491
  %v1643 = vpop.f32.mrf.mxu0
  %v1644 = vadd.f32 0.0, %v1643
  %v1645 = vpop.f32.mrf.mxu0
  %v1646 = vpop.f32.mrf.mxu0
  %v1647 = vadd.f32 0.0, %v1646
  %v1648 = vpop.f32.mrf.mxu0
  %1649 = vmatprep.mubr.bf16.mxu0 0
  %1650 = vmatmul.mubr.bf16.gmra.mxu0 %v1494
  %v1651 = vpop.f32.mrf.mxu0
  %v1652 = vadd.f32 0.0, %v1651
  %v1653 = vpop.f32.mrf.mxu0
  %v1654 = vpop.f32.mrf.mxu0
  %v1655 = vadd.f32 0.0, %v1654
  %v1656 = vpop.f32.mrf.mxu0
  %1657 = vmatprep.mubr.bf16.mxu0 0
  %1658 = vmatmul.mubr.bf16.gmra.mxu0 %v1497
  %v1659 = vpop.f32.mrf.mxu0
  %v1660 = vadd.f32 0.0, %v1659
  %v1661 = vpop.f32.mrf.mxu0
  %v1662 = vpop.f32.mrf.mxu0
  %v1663 = vadd.f32 0.0, %v1662
  %v1664 = vpop.f32.mrf.mxu0
  %1665 = vmatprep.mubr.bf16.mxu0 0
  %1666 = vmatmul.mubr.bf16.gmra.mxu0 %v1500
  %v1667 = vpop.f32.mrf.mxu0
  %v1668 = vadd.f32 0.0, %v1667
  %v1669 = vpop.f32.mrf.mxu0
  %v1670 = vpop.f32.mrf.mxu0
  %v1671 = vadd.f32 0.0, %v1670
  %v1672 = vpop.f32.mrf.mxu0
  %1673 = vmatprep.mubr.bf16.mxu0 0
  %1674 = vmatmul.mubr.bf16.gmra.mxu0 %v1503
  %v1675 = vpop.f32.mrf.mxu0
  %v1676 = vadd.f32 0.0, %v1675
  %v1677 = vpop.f32.mrf.mxu0
  %v1678 = vpop.f32.mrf.mxu0
  %v1679 = vadd.f32 0.0, %v1678
  %v1680 = vpop.f32.mrf.mxu0
  %1681 = vmatprep.mubr.bf16.mxu0 0
  %1682 = vmatmul.mubr.bf16.gmra.mxu0 %v1506
  %v1683 = vpop.f32.mrf.mxu0
  %v1684 = vadd.f32 0.0, %v1683
  %v1685 = vpop.f32.mrf.mxu0
  %v1686 = vpop.f32.mrf.mxu0
  %v1687 = vadd.f32 0.0, %v1686
  %v1688 = vpop.f32.mrf.mxu0
  %1689 = vmatprep.mubr.bf16.mxu0 0
  %1690 = vmatmul.mubr.bf16.gmra.mxu0 %v1509
  %v1691 = vpop.f32.mrf.mxu0
  %v1692 = vadd.f32 0.0, %v1691
  %v1693 = vpop.f32.mrf.mxu0
  %v1694 = vpop.f32.mrf.mxu0
  %v1695 = vadd.f32 0.0, %v1694
  %v1696 = vpop.f32.mrf.mxu0
  %1697 = vmatprep.mubr.bf16.mxu0 0
  %1698 = vmatmul.mubr.bf16.gmra.mxu0 %v1512
  %v1699 = vpop.f32.mrf.mxu0
  %v1700 = vadd.f32 0.0, %v1699
  %v1701 = vpop.f32.mrf.mxu0
  %v1702 = vpop.f32.mrf.mxu0
  %v1703 = vadd.f32 0.0, %v1702
  %v1704 = vpop.f32.mrf.mxu0
  %1705 = vmatprep.mubr.bf16.mxu0 0
  %1706 = vmatmul.mubr.bf16.gmra.mxu0 %v1515
  %v1707 = vpop.f32.mrf.mxu0
  %v1708 = vadd.f32 0.0, %v1707
  %v1709 = vpop.f32.mrf.mxu0
  %v1710 = vpop.f32.mrf.mxu0
  %v1711 = vadd.f32 0.0, %v1710
  %v1712 = vpop.f32.mrf.mxu0
  %1713 = vmatprep.mubr.bf16.mxu0 0
  %1714 = vmatmul.mubr.bf16.gmra.mxu0 %v1518
  %v1715 = vpop.f32.mrf.mxu0
  %v1716 = vadd.f32 0.0, %v1715
  %v1717 = vpop.f32.mrf.mxu0
  %v1718 = vpop.f32.mrf.mxu0
  %v1719 = vadd.f32 0.0, %v1718
  %v1720 = vpop.f32.mrf.mxu0
  %1721 = vmatprep.mubr.bf16.mxu0 0
  %1722 = vmatmul.mubr.bf16.gmra.mxu0 %v1521
  %v1723 = vpop.f32.mrf.mxu0
  %v1724 = vadd.f32 0.0, %v1723
  %v1725 = vpop.f32.mrf.mxu0
  %v1726 = vpop.f32.mrf.mxu0
  %v1727 = vadd.f32 0.0, %v1726
  %v1728 = vpop.f32.mrf.mxu0
  %1729 = vmatprep.mubr.bf16.mxu0 0
  %1730 = vmatmul.mubr.bf16.gmra.mxu0 %v1524
  %v1731 = vpop.f32.mrf.mxu0
  %v1732 = vadd.f32 0.0, %v1731
  %v1733 = vpop.f32.mrf.mxu0
  %v1734 = vpop.f32.mrf.mxu0
  %v1735 = vadd.f32 0.0, %v1734
  %v1736 = vpop.f32.mrf.mxu0
  %1737 = vmatprep.mubr.bf16.mxu0 0
  %1738 = vmatmul.mubr.bf16.gmra.mxu0 %v1527
  %v1739 = vpop.f32.mrf.mxu0
  %v1740 = vadd.f32 0.0, %v1739
  %v1741 = vpop.f32.mrf.mxu0
  %v1742 = vpop.f32.mrf.mxu0
  %v1743 = vadd.f32 0.0, %v1742
  %v1744 = vpop.f32.mrf.mxu0
  %1745 = vmatprep.mubr.bf16.mxu0 0
  %1746 = vmatmul.mubr.bf16.gmra.mxu0 %v1530
  %v1747 = vpop.f32.mrf.mxu0
  %v1748 = vadd.f32 0.0, %v1747
  %v1749 = vpop.f32.mrf.mxu0
  %v1750 = vpop.f32.mrf.mxu0
  %v1751 = vadd.f32 0.0, %v1750
  %v1752 = vpop.f32.mrf.mxu0
  %1753 = vmatprep.mubr.bf16.mxu0 0
  %1754 = vmatmul.mubr.bf16.gmra.mxu0 %v1533
  %v1755 = vpop.f32.mrf.mxu0
  %v1756 = vadd.f32 0.0, %v1755
  %v1757 = vpop.f32.mrf.mxu0
  %v1758 = vpop.f32.mrf.mxu0
  %v1759 = vadd.f32 0.0, %v1758
  %v1760 = vpop.f32.mrf.mxu0
  %1761 = vmatprep.mubr.bf16.mxu0 0
  %1762 = vmatmul.mubr.bf16.gmra.mxu0 %v1536
  %v1763 = vpop.f32.mrf.mxu0
  %v1764 = vadd.f32 0.0, %v1763
  %v1765 = vpop.f32.mrf.mxu0
  %v1766 = vpop.f32.mrf.mxu0
  %v1767 = vadd.f32 0.0, %v1766
  %v1768 = vpop.f32.mrf.mxu0
  %1769 = vmatprep.mubr.bf16.mxu0 0
  %1770 = vmatmul.mubr.bf16.gmra.mxu0 %v1539
  %v1771 = vpop.f32.mrf.mxu0
  %v1772 = vadd.f32 0.0, %v1771
  %v1773 = vpop.f32.mrf.mxu0
  %v1774 = vpop.f32.mrf.mxu0
  %v1775 = vadd.f32 0.0, %v1774
  %v1776 = vpop.f32.mrf.mxu0
  %1777 = vmatprep.mubr.bf16.mxu0 0
  %1778 = vmatmul.mubr.bf16.gmra.mxu0 %v1542
  %v1779 = vpop.f32.mrf.mxu0
  %v1780 = vadd.f32 0.0, %v1779
  %v1781 = vpop.f32.mrf.mxu0
  %v1782 = vpop.f32.mrf.mxu0
  %v1783 = vadd.f32 0.0, %v1782
  %v1784 = vpop.f32.mrf.mxu0
  %1785 = vmatprep.mubr.bf16.mxu0 0
  %1786 = vmatmul.mubr.bf16.gmra.mxu0 %v1545
  %v1787 = vpop.f32.mrf.mxu0
  %v1788 = vadd.f32 0.0, %v1787
  %v1789 = vpop.f32.mrf.mxu0
  %v1790 = vpop.f32.mrf.mxu0
  %v1791 = vadd.f32 0.0, %v1790
  %v1792 = vpop.f32.mrf.mxu0
  %1793 = vmatprep.mubr.bf16.mxu0 0
  %1794 = vmatmul.mubr.bf16.gmra.mxu0 %v1548
  %v1795 = vpop.f32.mrf.mxu0
  %v1796 = vadd.f32 0.0, %v1795
  %v1797 = vpop.f32.mrf.mxu0
  %v1798 = vpop.f32.mrf.mxu0
  %v1799 = vadd.f32 0.0, %v1798
  %v1800 = vpop.f32.mrf.mxu0
  %1801 = vmatprep.mubr.bf16.mxu0 0
  %1802 = vmatmul.mubr.bf16.gmra.mxu0 %v1551
  %v1803 = vpop.f32.mrf.mxu0
  %v1804 = vadd.f32 0.0, %v1803
  %v1805 = vpop.f32.mrf.mxu0
  %v1806 = vpop.f32.mrf.mxu0
  %v1807 = vadd.f32 0.0, %v1806
  %v1808 = vpop.f32.mrf.mxu0
  %1809 = vmatprep.mubr.bf16.mxu0 0
  %1810 = vmatmul.mubr.bf16.gmra.mxu0 %v1554
  %v1811 = vpop.f32.mrf.mxu0
  %v1812 = vadd.f32 0.0, %v1811
  %v1813 = vpop.f32.mrf.mxu0
  %v1814 = vpop.f32.mrf.mxu0
  %v1815 = vadd.f32 0.0, %v1814
  %v1816 = vpop.f32.mrf.mxu0
  %1817 = vmatprep.mubr.bf16.mxu0 0
  %1818 = vmatmul.mubr.bf16.gmra.mxu0 %v1557
  %v1819 = vpop.f32.mrf.mxu0
  %v1820 = vadd.f32 0.0, %v1819
  %v1821 = vpop.f32.mrf.mxu0
  %v1822 = vpop.f32.mrf.mxu0
  %v1823 = vadd.f32 0.0, %v1822
  %v1824 = vpop.f32.mrf.mxu0
  %1825 = vmatprep.mubr.bf16.mxu0 0
  %1826 = vmatmul.mubr.bf16.gmra.mxu0 %v1560
  %v1827 = vpop.f32.mrf.mxu0
  %v1828 = vadd.f32 0.0, %v1827
  %v1829 = vpop.f32.mrf.mxu0
  %v1830 = vpop.f32.mrf.mxu0
  %v1831 = vadd.f32 0.0, %v1830
  %v1832 = vpop.f32.mrf.mxu0
  %1833 = vmatprep.mubr.bf16.mxu0 0
  %1834 = vmatmul.mubr.bf16.gmra.mxu0 %v1563
  %v1835 = vpop.f32.mrf.mxu0
  %v1836 = vadd.f32 0.0, %v1835
  %v1837 = vpop.f32.mrf.mxu0
  %v1838 = vpop.f32.mrf.mxu0
  %v1839 = vadd.f32 0.0, %v1838
  %v1840 = vpop.f32.mrf.mxu0
  %1841 = vmatprep.mubr.bf16.mxu0 0
  %1842 = vmatmul.mubr.bf16.gmra.mxu0 %v1566
  %v1843 = vpop.f32.mrf.mxu0
  %v1844 = vadd.f32 0.0, %v1843
  %v1845 = vpop.f32.mrf.mxu0
  %v1846 = vpop.f32.mrf.mxu0
  %v1847 = vadd.f32 0.0, %v1846
  %v1848 = vpop.f32.mrf.mxu0
  %1849 = vmatprep.mubr.bf16.mxu0 0
  %1850 = vmatmul.mubr.bf16.gmra.mxu0 %v1569
  %v1851 = vpop.f32.mrf.mxu0
  %v1852 = vadd.f32 0.0, %v1851
  %v1853 = vpop.f32.mrf.mxu0
  %v1854 = vpop.f32.mrf.mxu0
  %v1855 = vadd.f32 0.0, %v1854
  %v1856 = vpop.f32.mrf.mxu0
  %1857 = vmatprep.mubr.bf16.mxu0 0
  %1858 = vmatmul.mubr.bf16.gmra.mxu0 %v1572
  %v1859 = vpop.f32.mrf.mxu0
  %v1860 = vadd.f32 0.0, %v1859
  %v1861 = vpop.f32.mrf.mxu0
  %v1862 = vpop.f32.mrf.mxu0
  %v1863 = vadd.f32 0.0, %v1862
  %v1864 = vpop.f32.mrf.mxu0
  %1865 = vdwg.mxu0
  %v1866 = vadd.f32 %v997, %v1612
  %v1867 = vadd.f32 %v1000, %v1615
  %v1868 = vadd.f32 %v1005, %v1620
  %v1869 = vadd.f32 %v1008, %v1623
  %v1870 = vadd.f32 %v1013, %v1628
  %v1871 = vadd.f32 %v1016, %v1631
  %v1872 = vadd.f32 %v1021, %v1636
  %v1873 = vadd.f32 %v1024, %v1639
  %v1874 = vadd.f32 %v1029, %v1644
  %v1875 = vadd.f32 %v1032, %v1647
  %v1876 = vadd.f32 %v1037, %v1652
  %v1877 = vadd.f32 %v1040, %v1655
  %v1878 = vadd.f32 %v1045, %v1660
  %v1879 = vadd.f32 %v1048, %v1663
  %v1880 = vadd.f32 %v1053, %v1668
  %v1881 = vadd.f32 %v1056, %v1671
  %v1882 = vadd.f32 %v1061, %v1676
  %v1883 = vadd.f32 %v1064, %v1679
  %v1884 = vadd.f32 %v1069, %v1684
  %v1885 = vadd.f32 %v1072, %v1687
  %v1886 = vadd.f32 %v1077, %v1692
  %v1887 = vadd.f32 %v1080, %v1695
  %v1888 = vadd.f32 %v1085, %v1700
  %v1889 = vadd.f32 %v1088, %v1703
  %v1890 = vadd.f32 %v1093, %v1708
  %v1891 = vadd.f32 %v1096, %v1711
  %v1892 = vadd.f32 %v1101, %v1716
  %v1893 = vadd.f32 %v1104, %v1719
  %v1894 = vadd.f32 %v1109, %v1724
  %v1895 = vadd.f32 %v1112, %v1727
  %v1896 = vadd.f32 %v1117, %v1732
  %v1897 = vadd.f32 %v1120, %v1735
  %v1898 = vadd.f32 %v1125, %v1740
  %v1899 = vadd.f32 %v1128, %v1743
  %v1900 = vadd.f32 %v1133, %v1748
  %v1901 = vadd.f32 %v1136, %v1751
  %v1902 = vadd.f32 %v1141, %v1756
  %v1903 = vadd.f32 %v1144, %v1759
  %v1904 = vadd.f32 %v1149, %v1764
  %v1905 = vadd.f32 %v1152, %v1767
  %v1906 = vadd.f32 %v1157, %v1772
  %v1907 = vadd.f32 %v1160, %v1775
  %v1908 = vadd.f32 %v1165, %v1780
  %v1909 = vadd.f32 %v1168, %v1783
  %v1910 = vadd.f32 %v1173, %v1788
  %v1911 = vadd.f32 %v1176, %v1791
  %v1912 = vadd.f32 %v1181, %v1796
  %v1913 = vadd.f32 %v1184, %v1799
  %v1914 = vadd.f32 %v1189, %v1804
  %v1915 = vadd.f32 %v1192, %v1807
  %v1916 = vadd.f32 %v1197, %v1812
  %v1917 = vadd.f32 %v1200, %v1815
  %v1918 = vadd.f32 %v1205, %v1820
  %v1919 = vadd.f32 %v1208, %v1823
  %v1920 = vadd.f32 %v1213, %v1828
  %v1921 = vadd.f32 %v1216, %v1831
  %v1922 = vadd.f32 %v1221, %v1836
  %v1923 = vadd.f32 %v1224, %v1839
  %v1924 = vadd.f32 %v1229, %v1844
  %v1925 = vadd.f32 %v1232, %v1847
  %v1926 = vadd.f32 %v1237, %v1852
  %v1927 = vadd.f32 %v1240, %v1855
  %v1928 = vadd.f32 %v1245, %v1860
  %v1929 = vadd.f32 %v1248, %v1863
  %s1930 = scalar_lea.vmem %s0, 768
  %v1931 = vld [vmem:[%s1930] sm:$0xf]
  %v1932 = vld [vmem:[%s1930 + $0x4] sm:$0xf]
  %v1933 = vld [vmem:[%s1930 + $0x8] sm:$0xf]
  %v1934 = vld [vmem:[%s1930 + $0xc] sm:$0xf]
  %v1935 = vld [vmem:[%s1930 + $0x10] sm:$0xf]
  %v1936 = vld [vmem:[%s1930 + $0x14] sm:$0xf]
  %v1937 = vld [vmem:[%s1930 + $0x18] sm:$0xf]
  %v1938 = vld [vmem:[%s1930 + $0x1c] sm:$0xf]
  %v1939 = vld [vmem:[%s1930 + $0x20] sm:$0xf]
  %v1940 = vld [vmem:[%s1930 + $0x24] sm:$0xf]
  %v1941 = vld [vmem:[%s1930 + $0x28] sm:$0xf]
  %v1942 = vld [vmem:[%s1930 + $0x2c] sm:$0xf]
  %v1943 = vld [vmem:[%s1930 + $0x30] sm:$0xf]
  %v1944 = vld [vmem:[%s1930 + $0x34] sm:$0xf]
  %v1945 = vld [vmem:[%s1930 + $0x38] sm:$0xf]
  %v1946 = vld [vmem:[%s1930 + $0x3c] sm:$0xf]
  %v1947 = vld [vmem:[%s1930 + $0x40] sm:$0xf]
  %v1948 = vld [vmem:[%s1930 + $0x44] sm:$0xf]
  %v1949 = vld [vmem:[%s1930 + $0x48] sm:$0xf]
  %v1950 = vld [vmem:[%s1930 + $0x4c] sm:$0xf]
  %v1951 = vld [vmem:[%s1930 + $0x50] sm:$0xf]
  %v1952 = vld [vmem:[%s1930 + $0x54] sm:$0xf]
  %v1953 = vld [vmem:[%s1930 + $0x58] sm:$0xf]
  %v1954 = vld [vmem:[%s1930 + $0x5c] sm:$0xf]
  %v1955 = vld [vmem:[%s1930 + $0x60] sm:$0xf]
  %v1956 = vld [vmem:[%s1930 + $0x64] sm:$0xf]
  %v1957 = vld [vmem:[%s1930 + $0x68] sm:$0xf]
  %v1958 = vld [vmem:[%s1930 + $0x6c] sm:$0xf]
  %v1959 = vld [vmem:[%s1930 + $0x70] sm:$0xf]
  %v1960 = vld [vmem:[%s1930 + $0x74] sm:$0xf]
  %v1961 = vld [vmem:[%s1930 + $0x78] sm:$0xf]
  %v1962 = vld [vmem:[%s1930 + $0x7c] sm:$0xf]
  %v1963 = vld [vmem:[%s1930 + $0x80] sm:$0xf]
  %v1964 = vld [vmem:[%s1930 + $0x84] sm:$0xf]
  %v1965 = vld [vmem:[%s1930 + $0x88] sm:$0xf]
  %v1966 = vld [vmem:[%s1930 + $0x8c] sm:$0xf]
  %v1967 = vld [vmem:[%s1930 + $0x90] sm:$0xf]
  %v1968 = vld [vmem:[%s1930 + $0x94] sm:$0xf]
  %v1969 = vld [vmem:[%s1930 + $0x98] sm:$0xf]
  %v1970 = vld [vmem:[%s1930 + $0x9c] sm:$0xf]
  %v1971 = vld [vmem:[%s1930 + $0xa0] sm:$0xf]
  %v1972 = vld [vmem:[%s1930 + $0xa4] sm:$0xf]
  %v1973 = vld [vmem:[%s1930 + $0xa8] sm:$0xf]
  %v1974 = vld [vmem:[%s1930 + $0xac] sm:$0xf]
  %v1975 = vld [vmem:[%s1930 + $0xb0] sm:$0xf]
  %v1976 = vld [vmem:[%s1930 + $0xb4] sm:$0xf]
  %v1977 = vld [vmem:[%s1930 + $0xb8] sm:$0xf]
  %v1978 = vld [vmem:[%s1930 + $0xbc] sm:$0xf]
  %v1979 = vld [vmem:[%s1930 + $0xc0] sm:$0xf]
  %v1980 = vld [vmem:[%s1930 + $0xc4] sm:$0xf]
  %v1981 = vld [vmem:[%s1930 + $0xc8] sm:$0xf]
  %v1982 = vld [vmem:[%s1930 + $0xcc] sm:$0xf]
  %v1983 = vld [vmem:[%s1930 + $0xd0] sm:$0xf]
  %v1984 = vld [vmem:[%s1930 + $0xd4] sm:$0xf]
  %v1985 = vld [vmem:[%s1930 + $0xd8] sm:$0xf]
  %v1986 = vld [vmem:[%s1930 + $0xdc] sm:$0xf]
  %v1987 = vld [vmem:[%s1930 + $0xe0] sm:$0xf]
  %v1988 = vld [vmem:[%s1930 + $0xe4] sm:$0xf]
  %v1989 = vld [vmem:[%s1930 + $0xe8] sm:$0xf]
  %v1990 = vld [vmem:[%s1930 + $0xec] sm:$0xf]
  %v1991 = vld [vmem:[%s1930 + $0xf0] sm:$0xf]
  %v1992 = vld [vmem:[%s1930 + $0xf4] sm:$0xf]
  %v1993 = vld [vmem:[%s1930 + $0xf8] sm:$0xf]
  %v1994 = vld [vmem:[%s1930 + $0xfc] sm:$0xf]
  %s1995 = scalar_lea.vmem %s1, 6
  %v1996 = vld [vmem:[%s1995] sm:$0x3]
  %v2061 = vunpack.c.l.b16 %v1931
  %v2062 = vunpack.c.l.b16 %v1932
  %v2063 = vunpack.c.l.b16 %v1933
  %v2064 = vunpack.c.l.b16 %v1934
  %v2065 = vunpack.c.l.b16 %v1935
  %v2066 = vunpack.c.l.b16 %v1936
  %v2067 = vunpack.c.l.b16 %v1937
  %v2068 = vunpack.c.l.b16 %v1938
  %v2069 = vunpack.c.l.b16 %v1939
  %v2070 = vunpack.c.l.b16 %v1940
  %v2071 = vunpack.c.l.b16 %v1941
  %v2072 = vunpack.c.l.b16 %v1942
  %v2073 = vunpack.c.l.b16 %v1943
  %v2074 = vunpack.c.l.b16 %v1944
  %v2075 = vunpack.c.l.b16 %v1945
  %v2076 = vunpack.c.l.b16 %v1946
  %v2077 = vunpack.c.l.b16 %v1947
  %v2078 = vunpack.c.l.b16 %v1948
  %v2079 = vunpack.c.l.b16 %v1949
  %v2080 = vunpack.c.l.b16 %v1950
  %v2081 = vunpack.c.l.b16 %v1951
  %v2082 = vunpack.c.l.b16 %v1952
  %v2083 = vunpack.c.l.b16 %v1953
  %v2084 = vunpack.c.l.b16 %v1954
  %v2085 = vunpack.c.l.b16 %v1955
  %v2086 = vunpack.c.l.b16 %v1956
  %v2087 = vunpack.c.l.b16 %v1957
  %v2088 = vunpack.c.l.b16 %v1958
  %v2089 = vunpack.c.l.b16 %v1959
  %v2090 = vunpack.c.l.b16 %v1960
  %v2091 = vunpack.c.l.b16 %v1961
  %v2092 = vunpack.c.l.b16 %v1962
  %v2093 = vunpack.c.l.b16 %v1963
  %v2094 = vunpack.c.l.b16 %v1964
  %v2095 = vunpack.c.l.b16 %v1965
  %v2096 = vunpack.c.l.b16 %v1966
  %v2097 = vunpack.c.l.b16 %v1967
  %v2098 = vunpack.c.l.b16 %v1968
  %v2099 = vunpack.c.l.b16 %v1969
  %v2100 = vunpack.c.l.b16 %v1970
  %v2101 = vunpack.c.l.b16 %v1971
  %v2102 = vunpack.c.l.b16 %v1972
  %v2103 = vunpack.c.l.b16 %v1973
  %v2104 = vunpack.c.l.b16 %v1974
  %v2105 = vunpack.c.l.b16 %v1975
  %v2106 = vunpack.c.l.b16 %v1976
  %v2107 = vunpack.c.l.b16 %v1977
  %v2108 = vunpack.c.l.b16 %v1978
  %v2109 = vunpack.c.l.b16 %v1979
  %v2110 = vunpack.c.l.b16 %v1980
  %v2111 = vunpack.c.l.b16 %v1981
  %v2112 = vunpack.c.l.b16 %v1982
  %v2113 = vunpack.c.l.b16 %v1983
  %v2114 = vunpack.c.l.b16 %v1984
  %v2115 = vunpack.c.l.b16 %v1985
  %v2116 = vunpack.c.l.b16 %v1986
  %v2117 = vunpack.c.l.b16 %v1987
  %v2118 = vunpack.c.l.b16 %v1988
  %v2119 = vunpack.c.l.b16 %v1989
  %v2120 = vunpack.c.l.b16 %v1990
  %v2121 = vunpack.c.l.b16 %v1991
  %v2122 = vunpack.c.l.b16 %v1992
  %v2123 = vunpack.c.l.b16 %v1993
  %v2124 = vunpack.c.l.b16 %v1994
  %v2125 = vpack.c.b16 %v2062, %v2061
  %v2126 = vpack.c.b16 %v2064, %v2063
  %v2127 = vpack.c.b16 %v2066, %v2065
  %v2128 = vpack.c.b16 %v2068, %v2067
  %v2129 = vpack.c.b16 %v2070, %v2069
  %v2130 = vpack.c.b16 %v2072, %v2071
  %v2131 = vpack.c.b16 %v2074, %v2073
  %v2132 = vpack.c.b16 %v2076, %v2075
  %v2133 = vpack.c.b16 %v2078, %v2077
  %v2134 = vpack.c.b16 %v2080, %v2079
  %v2135 = vpack.c.b16 %v2082, %v2081
  %v2136 = vpack.c.b16 %v2084, %v2083
  %v2137 = vpack.c.b16 %v2086, %v2085
  %v2138 = vpack.c.b16 %v2088, %v2087
  %v2139 = vpack.c.b16 %v2090, %v2089
  %v2140 = vpack.c.b16 %v2092, %v2091
  %v2141 = vpack.c.b16 %v2094, %v2093
  %v2142 = vpack.c.b16 %v2096, %v2095
  %v2143 = vpack.c.b16 %v2098, %v2097
  %v2144 = vpack.c.b16 %v2100, %v2099
  %v2145 = vpack.c.b16 %v2102, %v2101
  %v2146 = vpack.c.b16 %v2104, %v2103
  %v2147 = vpack.c.b16 %v2106, %v2105
  %v2148 = vpack.c.b16 %v2108, %v2107
  %v2149 = vpack.c.b16 %v2110, %v2109
  %v2150 = vpack.c.b16 %v2112, %v2111
  %v2151 = vpack.c.b16 %v2114, %v2113
  %v2152 = vpack.c.b16 %v2116, %v2115
  %v2153 = vpack.c.b16 %v2118, %v2117
  %v2154 = vpack.c.b16 %v2120, %v2119
  %v2155 = vpack.c.b16 %v2122, %v2121
  %v2156 = vpack.c.b16 %v2124, %v2123
  %v2158 = vsel %vm310, %v2125, 0
  %v2161 = vsel %vm310, %v2126, 0
  %v2164 = vsel %vm310, %v2127, 0
  %v2167 = vsel %vm310, %v2128, 0
  %v2170 = vsel %vm310, %v2129, 0
  %v2173 = vsel %vm310, %v2130, 0
  %v2176 = vsel %vm310, %v2131, 0
  %v2179 = vsel %vm310, %v2132, 0
  %v2182 = vsel %vm310, %v2133, 0
  %v2185 = vsel %vm310, %v2134, 0
  %v2188 = vsel %vm310, %v2135, 0
  %v2191 = vsel %vm310, %v2136, 0
  %v2194 = vsel %vm310, %v2137, 0
  %v2197 = vsel %vm310, %v2138, 0
  %v2200 = vsel %vm310, %v2139, 0
  %v2203 = vsel %vm310, %v2140, 0
  %v2206 = vsel %vm310, %v2141, 0
  %v2209 = vsel %vm310, %v2142, 0
  %v2212 = vsel %vm310, %v2143, 0
  %v2215 = vsel %vm310, %v2144, 0
  %v2218 = vsel %vm310, %v2145, 0
  %v2221 = vsel %vm310, %v2146, 0
  %v2224 = vsel %vm310, %v2147, 0
  %v2227 = vsel %vm310, %v2148, 0
  %v2230 = vsel %vm310, %v2149, 0
  %v2233 = vsel %vm310, %v2150, 0
  %v2236 = vsel %vm310, %v2151, 0
  %v2239 = vsel %vm310, %v2152, 0
  %v2242 = vsel %vm310, %v2153, 0
  %v2245 = vsel %vm310, %v2154, 0
  %v2248 = vsel %vm310, %v2155, 0
  %v2251 = vsel %vm310, %v2156, 0
  %v2254 = vand.u32 %v1996, %v410
  %2256 = vmatprep.subr.bf16.mxu0 0
  %2257 = vmatpush1.bf16.msra.mxu0 0
  %2258 = vmatprep.subr.bf16.mxu0 0
  %2259 = vmatpush1.bf16.msra.mxu0 0
  %2260 = vmatprep.subr.bf16.mxu0 0
  %2261 = vmatpush1.bf16.msra.mxu0 0
  %2262 = vmatprep.subr.bf16.mxu0 0
  %2263 = vmatpush1.bf16.msra.mxu0 0
  %2264 = vmatprep.subr.bf16.mxu0 0
  %2265 = vmatpush1.bf16.msra.mxu0 0
  %2266 = vmatprep.subr.bf16.mxu0 0
  %2267 = vmatpush1.bf16.msra.mxu0 0
  %2268 = vmatprep.subr.bf16.mxu0 0
  %2269 = vmatpush1.bf16.msra.mxu0 0
  %2270 = vmatprep.subr.bf16.mxu0 0
  %2271 = vmatpush1.bf16.msra.mxu0 %v2254
  %2272 = vmatprep.subr.bf16.mxu0 0
  %2273 = vmatpush2.bf16.msra.mxu0 0
  %2274 = vmatprep.subr.bf16.mxu0 0
  %2275 = vmatpush2.bf16.msra.mxu0 0
  %2276 = vmatprep.subr.bf16.mxu0 0
  %2277 = vmatpush2.bf16.msra.mxu0 0
  %2278 = vmatprep.subr.bf16.mxu0 0
  %2279 = vmatpush2.bf16.msra.mxu0 0
  %2280 = vmatprep.subr.bf16.mxu0 0
  %2281 = vmatpush2.bf16.msra.mxu0 0
  %2282 = vmatprep.subr.bf16.mxu0 0
  %2283 = vmatpush2.bf16.msra.mxu0 0
  %2284 = vmatprep.subr.bf16.mxu0 0
  %2285 = vmatpush2.bf16.msra.mxu0 0
  %2286 = vmatprep.subr.bf16.mxu0 0
  %2287 = vmatpush2.bf16.msra.mxu0 0
  %2288 = vmatprep.mubr.bf16.mxu0 0
  %2289 = vmatmul.mubr.bf16.gmra.mxu0 %v2158
  %v2290 = vpop.f32.mrf.mxu0
  %v2291 = vadd.f32 0.0, %v2290
  %v2292 = vpop.f32.mrf.mxu0
  %v2293 = vpop.f32.mrf.mxu0
  %v2294 = vadd.f32 0.0, %v2293
  %v2295 = vpop.f32.mrf.mxu0
  %2296 = vmatprep.mubr.bf16.mxu0 0
  %2297 = vmatmul.mubr.bf16.gmra.mxu0 %v2161
  %v2298 = vpop.f32.mrf.mxu0
  %v2299 = vadd.f32 0.0, %v2298
  %v2300 = vpop.f32.mrf.mxu0
  %v2301 = vpop.f32.mrf.mxu0
  %v2302 = vadd.f32 0.0, %v2301
  %v2303 = vpop.f32.mrf.mxu0
  %2304 = vmatprep.mubr.bf16.mxu0 0
  %2305 = vmatmul.mubr.bf16.gmra.mxu0 %v2164
  %v2306 = vpop.f32.mrf.mxu0
  %v2307 = vadd.f32 0.0, %v2306
  %v2308 = vpop.f32.mrf.mxu0
  %v2309 = vpop.f32.mrf.mxu0
  %v2310 = vadd.f32 0.0, %v2309
  %v2311 = vpop.f32.mrf.mxu0
  %2312 = vmatprep.mubr.bf16.mxu0 0
  %2313 = vmatmul.mubr.bf16.gmra.mxu0 %v2167
  %v2314 = vpop.f32.mrf.mxu0
  %v2315 = vadd.f32 0.0, %v2314
  %v2316 = vpop.f32.mrf.mxu0
  %v2317 = vpop.f32.mrf.mxu0
  %v2318 = vadd.f32 0.0, %v2317
  %v2319 = vpop.f32.mrf.mxu0
  %2320 = vmatprep.mubr.bf16.mxu0 0
  %2321 = vmatmul.mubr.bf16.gmra.mxu0 %v2170
  %v2322 = vpop.f32.mrf.mxu0
  %v2323 = vadd.f32 0.0, %v2322
  %v2324 = vpop.f32.mrf.mxu0
  %v2325 = vpop.f32.mrf.mxu0
  %v2326 = vadd.f32 0.0, %v2325
  %v2327 = vpop.f32.mrf.mxu0
  %2328 = vmatprep.mubr.bf16.mxu0 0
  %2329 = vmatmul.mubr.bf16.gmra.mxu0 %v2173
  %v2330 = vpop.f32.mrf.mxu0
  %v2331 = vadd.f32 0.0, %v2330
  %v2332 = vpop.f32.mrf.mxu0
  %v2333 = vpop.f32.mrf.mxu0
  %v2334 = vadd.f32 0.0, %v2333
  %v2335 = vpop.f32.mrf.mxu0
  %2336 = vmatprep.mubr.bf16.mxu0 0
  %2337 = vmatmul.mubr.bf16.gmra.mxu0 %v2176
  %v2338 = vpop.f32.mrf.mxu0
  %v2339 = vadd.f32 0.0, %v2338
  %v2340 = vpop.f32.mrf.mxu0
  %v2341 = vpop.f32.mrf.mxu0
  %v2342 = vadd.f32 0.0, %v2341
  %v2343 = vpop.f32.mrf.mxu0
  %2344 = vmatprep.mubr.bf16.mxu0 0
  %2345 = vmatmul.mubr.bf16.gmra.mxu0 %v2179
  %v2346 = vpop.f32.mrf.mxu0
  %v2347 = vadd.f32 0.0, %v2346
  %v2348 = vpop.f32.mrf.mxu0
  %v2349 = vpop.f32.mrf.mxu0
  %v2350 = vadd.f32 0.0, %v2349
  %v2351 = vpop.f32.mrf.mxu0
  %2352 = vmatprep.mubr.bf16.mxu0 0
  %2353 = vmatmul.mubr.bf16.gmra.mxu0 %v2182
  %v2354 = vpop.f32.mrf.mxu0
  %v2355 = vadd.f32 0.0, %v2354
  %v2356 = vpop.f32.mrf.mxu0
  %v2357 = vpop.f32.mrf.mxu0
  %v2358 = vadd.f32 0.0, %v2357
  %v2359 = vpop.f32.mrf.mxu0
  %2360 = vmatprep.mubr.bf16.mxu0 0
  %2361 = vmatmul.mubr.bf16.gmra.mxu0 %v2185
  %v2362 = vpop.f32.mrf.mxu0
  %v2363 = vadd.f32 0.0, %v2362
  %v2364 = vpop.f32.mrf.mxu0
  %v2365 = vpop.f32.mrf.mxu0
  %v2366 = vadd.f32 0.0, %v2365
  %v2367 = vpop.f32.mrf.mxu0
  %2368 = vmatprep.mubr.bf16.mxu0 0
  %2369 = vmatmul.mubr.bf16.gmra.mxu0 %v2188
  %v2370 = vpop.f32.mrf.mxu0
  %v2371 = vadd.f32 0.0, %v2370
  %v2372 = vpop.f32.mrf.mxu0
  %v2373 = vpop.f32.mrf.mxu0
  %v2374 = vadd.f32 0.0, %v2373
  %v2375 = vpop.f32.mrf.mxu0
  %2376 = vmatprep.mubr.bf16.mxu0 0
  %2377 = vmatmul.mubr.bf16.gmra.mxu0 %v2191
  %v2378 = vpop.f32.mrf.mxu0
  %v2379 = vadd.f32 0.0, %v2378
  %v2380 = vpop.f32.mrf.mxu0
  %v2381 = vpop.f32.mrf.mxu0
  %v2382 = vadd.f32 0.0, %v2381
  %v2383 = vpop.f32.mrf.mxu0
  %2384 = vmatprep.mubr.bf16.mxu0 0
  %2385 = vmatmul.mubr.bf16.gmra.mxu0 %v2194
  %v2386 = vpop.f32.mrf.mxu0
  %v2387 = vadd.f32 0.0, %v2386
  %v2388 = vpop.f32.mrf.mxu0
  %v2389 = vpop.f32.mrf.mxu0
  %v2390 = vadd.f32 0.0, %v2389
  %v2391 = vpop.f32.mrf.mxu0
  %2392 = vmatprep.mubr.bf16.mxu0 0
  %2393 = vmatmul.mubr.bf16.gmra.mxu0 %v2197
  %v2394 = vpop.f32.mrf.mxu0
  %v2395 = vadd.f32 0.0, %v2394
  %v2396 = vpop.f32.mrf.mxu0
  %v2397 = vpop.f32.mrf.mxu0
  %v2398 = vadd.f32 0.0, %v2397
  %v2399 = vpop.f32.mrf.mxu0
  %2400 = vmatprep.mubr.bf16.mxu0 0
  %2401 = vmatmul.mubr.bf16.gmra.mxu0 %v2200
  %v2402 = vpop.f32.mrf.mxu0
  %v2403 = vadd.f32 0.0, %v2402
  %v2404 = vpop.f32.mrf.mxu0
  %v2405 = vpop.f32.mrf.mxu0
  %v2406 = vadd.f32 0.0, %v2405
  %v2407 = vpop.f32.mrf.mxu0
  %2408 = vmatprep.mubr.bf16.mxu0 0
  %2409 = vmatmul.mubr.bf16.gmra.mxu0 %v2203
  %v2410 = vpop.f32.mrf.mxu0
  %v2411 = vadd.f32 0.0, %v2410
  %v2412 = vpop.f32.mrf.mxu0
  %v2413 = vpop.f32.mrf.mxu0
  %v2414 = vadd.f32 0.0, %v2413
  %v2415 = vpop.f32.mrf.mxu0
  %2416 = vmatprep.mubr.bf16.mxu0 0
  %2417 = vmatmul.mubr.bf16.gmra.mxu0 %v2206
  %v2418 = vpop.f32.mrf.mxu0
  %v2419 = vadd.f32 0.0, %v2418
  %v2420 = vpop.f32.mrf.mxu0
  %v2421 = vpop.f32.mrf.mxu0
  %v2422 = vadd.f32 0.0, %v2421
  %v2423 = vpop.f32.mrf.mxu0
  %2424 = vmatprep.mubr.bf16.mxu0 0
  %2425 = vmatmul.mubr.bf16.gmra.mxu0 %v2209
  %v2426 = vpop.f32.mrf.mxu0
  %v2427 = vadd.f32 0.0, %v2426
  %v2428 = vpop.f32.mrf.mxu0
  %v2429 = vpop.f32.mrf.mxu0
  %v2430 = vadd.f32 0.0, %v2429
  %v2431 = vpop.f32.mrf.mxu0
  %2432 = vmatprep.mubr.bf16.mxu0 0
  %2433 = vmatmul.mubr.bf16.gmra.mxu0 %v2212
  %v2434 = vpop.f32.mrf.mxu0
  %v2435 = vadd.f32 0.0, %v2434
  %v2436 = vpop.f32.mrf.mxu0
  %v2437 = vpop.f32.mrf.mxu0
  %v2438 = vadd.f32 0.0, %v2437
  %v2439 = vpop.f32.mrf.mxu0
  %2440 = vmatprep.mubr.bf16.mxu0 0
  %2441 = vmatmul.mubr.bf16.gmra.mxu0 %v2215
  %v2442 = vpop.f32.mrf.mxu0
  %v2443 = vadd.f32 0.0, %v2442
  %v2444 = vpop.f32.mrf.mxu0
  %v2445 = vpop.f32.mrf.mxu0
  %v2446 = vadd.f32 0.0, %v2445
  %v2447 = vpop.f32.mrf.mxu0
  %2448 = vmatprep.mubr.bf16.mxu0 0
  %2449 = vmatmul.mubr.bf16.gmra.mxu0 %v2218
  %v2450 = vpop.f32.mrf.mxu0
  %v2451 = vadd.f32 0.0, %v2450
  %v2452 = vpop.f32.mrf.mxu0
  %v2453 = vpop.f32.mrf.mxu0
  %v2454 = vadd.f32 0.0, %v2453
  %v2455 = vpop.f32.mrf.mxu0
  %2456 = vmatprep.mubr.bf16.mxu0 0
  %2457 = vmatmul.mubr.bf16.gmra.mxu0 %v2221
  %v2458 = vpop.f32.mrf.mxu0
  %v2459 = vadd.f32 0.0, %v2458
  %v2460 = vpop.f32.mrf.mxu0
  %v2461 = vpop.f32.mrf.mxu0
  %v2462 = vadd.f32 0.0, %v2461
  %v2463 = vpop.f32.mrf.mxu0
  %2464 = vmatprep.mubr.bf16.mxu0 0
  %2465 = vmatmul.mubr.bf16.gmra.mxu0 %v2224
  %v2466 = vpop.f32.mrf.mxu0
  %v2467 = vadd.f32 0.0, %v2466
  %v2468 = vpop.f32.mrf.mxu0
  %v2469 = vpop.f32.mrf.mxu0
  %v2470 = vadd.f32 0.0, %v2469
  %v2471 = vpop.f32.mrf.mxu0
  %2472 = vmatprep.mubr.bf16.mxu0 0
  %2473 = vmatmul.mubr.bf16.gmra.mxu0 %v2227
  %v2474 = vpop.f32.mrf.mxu0
  %v2475 = vadd.f32 0.0, %v2474
  %v2476 = vpop.f32.mrf.mxu0
  %v2477 = vpop.f32.mrf.mxu0
  %v2478 = vadd.f32 0.0, %v2477
  %v2479 = vpop.f32.mrf.mxu0
  %2480 = vmatprep.mubr.bf16.mxu0 0
  %2481 = vmatmul.mubr.bf16.gmra.mxu0 %v2230
  %v2482 = vpop.f32.mrf.mxu0
  %v2483 = vadd.f32 0.0, %v2482
  %v2484 = vpop.f32.mrf.mxu0
  %v2485 = vpop.f32.mrf.mxu0
  %v2486 = vadd.f32 0.0, %v2485
  %v2487 = vpop.f32.mrf.mxu0
  %2488 = vmatprep.mubr.bf16.mxu0 0
  %2489 = vmatmul.mubr.bf16.gmra.mxu0 %v2233
  %v2490 = vpop.f32.mrf.mxu0
  %v2491 = vadd.f32 0.0, %v2490
  %v2492 = vpop.f32.mrf.mxu0
  %v2493 = vpop.f32.mrf.mxu0
  %v2494 = vadd.f32 0.0, %v2493
  %v2495 = vpop.f32.mrf.mxu0
  %2496 = vmatprep.mubr.bf16.mxu0 0
  %2497 = vmatmul.mubr.bf16.gmra.mxu0 %v2236
  %v2498 = vpop.f32.mrf.mxu0
  %v2499 = vadd.f32 0.0, %v2498
  %v2500 = vpop.f32.mrf.mxu0
  %v2501 = vpop.f32.mrf.mxu0
  %v2502 = vadd.f32 0.0, %v2501
  %v2503 = vpop.f32.mrf.mxu0
  %2504 = vmatprep.mubr.bf16.mxu0 0
  %2505 = vmatmul.mubr.bf16.gmra.mxu0 %v2239
  %v2506 = vpop.f32.mrf.mxu0
  %v2507 = vadd.f32 0.0, %v2506
  %v2508 = vpop.f32.mrf.mxu0
  %v2509 = vpop.f32.mrf.mxu0
  %v2510 = vadd.f32 0.0, %v2509
  %v2511 = vpop.f32.mrf.mxu0
  %2512 = vmatprep.mubr.bf16.mxu0 0
  %2513 = vmatmul.mubr.bf16.gmra.mxu0 %v2242
  %v2514 = vpop.f32.mrf.mxu0
  %v2515 = vadd.f32 0.0, %v2514
  %v2516 = vpop.f32.mrf.mxu0
  %v2517 = vpop.f32.mrf.mxu0
  %v2518 = vadd.f32 0.0, %v2517
  %v2519 = vpop.f32.mrf.mxu0
  %2520 = vmatprep.mubr.bf16.mxu0 0
  %2521 = vmatmul.mubr.bf16.gmra.mxu0 %v2245
  %v2522 = vpop.f32.mrf.mxu0
  %v2523 = vadd.f32 0.0, %v2522
  %v2524 = vpop.f32.mrf.mxu0
  %v2525 = vpop.f32.mrf.mxu0
  %v2526 = vadd.f32 0.0, %v2525
  %v2527 = vpop.f32.mrf.mxu0
  %2528 = vmatprep.mubr.bf16.mxu0 0
  %2529 = vmatmul.mubr.bf16.gmra.mxu0 %v2248
  %v2530 = vpop.f32.mrf.mxu0
  %v2531 = vadd.f32 0.0, %v2530
  %v2532 = vpop.f32.mrf.mxu0
  %v2533 = vpop.f32.mrf.mxu0
  %v2534 = vadd.f32 0.0, %v2533
  %v2535 = vpop.f32.mrf.mxu0
  %2536 = vmatprep.mubr.bf16.mxu0 0
  %2537 = vmatmul.mubr.bf16.gmra.mxu0 %v2251
  %v2538 = vpop.f32.mrf.mxu0
  %v2539 = vadd.f32 0.0, %v2538
  %v2540 = vpop.f32.mrf.mxu0
  %v2541 = vpop.f32.mrf.mxu0
  %v2542 = vadd.f32 0.0, %v2541
  %v2543 = vpop.f32.mrf.mxu0
  %2544 = vdwg.mxu0
  %v2545 = vadd.f32 %v1866, %v2291
  %v2546 = vadd.f32 %v1867, %v2294
  %v2547 = vadd.f32 %v1868, %v2299
  %v2548 = vadd.f32 %v1869, %v2302
  %v2549 = vadd.f32 %v1870, %v2307
  %v2550 = vadd.f32 %v1871, %v2310
  %v2551 = vadd.f32 %v1872, %v2315
  %v2552 = vadd.f32 %v1873, %v2318
  %v2553 = vadd.f32 %v1874, %v2323
  %v2554 = vadd.f32 %v1875, %v2326
  %v2555 = vadd.f32 %v1876, %v2331
  %v2556 = vadd.f32 %v1877, %v2334
  %v2557 = vadd.f32 %v1878, %v2339
  %v2558 = vadd.f32 %v1879, %v2342
  %v2559 = vadd.f32 %v1880, %v2347
  %v2560 = vadd.f32 %v1881, %v2350
  %v2561 = vadd.f32 %v1882, %v2355
  %v2562 = vadd.f32 %v1883, %v2358
  %v2563 = vadd.f32 %v1884, %v2363
  %v2564 = vadd.f32 %v1885, %v2366
  %v2565 = vadd.f32 %v1886, %v2371
  %v2566 = vadd.f32 %v1887, %v2374
  %v2567 = vadd.f32 %v1888, %v2379
  %v2568 = vadd.f32 %v1889, %v2382
  %v2569 = vadd.f32 %v1890, %v2387
  %v2570 = vadd.f32 %v1891, %v2390
  %v2571 = vadd.f32 %v1892, %v2395
  %v2572 = vadd.f32 %v1893, %v2398
  %v2573 = vadd.f32 %v1894, %v2403
  %v2574 = vadd.f32 %v1895, %v2406
  %v2575 = vadd.f32 %v1896, %v2411
  %v2576 = vadd.f32 %v1897, %v2414
  %v2577 = vadd.f32 %v1898, %v2419
  %v2578 = vadd.f32 %v1899, %v2422
  %v2579 = vadd.f32 %v1900, %v2427
  %v2580 = vadd.f32 %v1901, %v2430
  %v2581 = vadd.f32 %v1902, %v2435
  %v2582 = vadd.f32 %v1903, %v2438
  %v2583 = vadd.f32 %v1904, %v2443
  %v2584 = vadd.f32 %v1905, %v2446
  %v2585 = vadd.f32 %v1906, %v2451
  %v2586 = vadd.f32 %v1907, %v2454
  %v2587 = vadd.f32 %v1908, %v2459
  %v2588 = vadd.f32 %v1909, %v2462
  %v2589 = vadd.f32 %v1910, %v2467
  %v2590 = vadd.f32 %v1911, %v2470
  %v2591 = vadd.f32 %v1912, %v2475
  %v2592 = vadd.f32 %v1913, %v2478
  %v2593 = vadd.f32 %v1914, %v2483
  %v2594 = vadd.f32 %v1915, %v2486
  %v2595 = vadd.f32 %v1916, %v2491
  %v2596 = vadd.f32 %v1917, %v2494
  %v2597 = vadd.f32 %v1918, %v2499
  %v2598 = vadd.f32 %v1919, %v2502
  %v2599 = vadd.f32 %v1920, %v2507
  %v2600 = vadd.f32 %v1921, %v2510
  %v2601 = vadd.f32 %v1922, %v2515
  %v2602 = vadd.f32 %v1923, %v2518
  %v2603 = vadd.f32 %v1924, %v2523
  %v2604 = vadd.f32 %v1925, %v2526
  %v2605 = vadd.f32 %v1926, %v2531
  %v2606 = vadd.f32 %v1927, %v2534
  %v2607 = vadd.f32 %v1928, %v2539
  %v2608 = vadd.f32 %v1929, %v2542
  %s2609 = scalar_lea.vmem %s0, 1024
  %v2610 = vld [vmem:[%s2609] sm:$0xf]
  %v2611 = vld [vmem:[%s2609 + $0x4] sm:$0xf]
  %v2612 = vld [vmem:[%s2609 + $0x8] sm:$0xf]
  %v2613 = vld [vmem:[%s2609 + $0xc] sm:$0xf]
  %v2614 = vld [vmem:[%s2609 + $0x10] sm:$0xf]
  %v2615 = vld [vmem:[%s2609 + $0x14] sm:$0xf]
  %v2616 = vld [vmem:[%s2609 + $0x18] sm:$0xf]
  %v2617 = vld [vmem:[%s2609 + $0x1c] sm:$0xf]
  %v2618 = vld [vmem:[%s2609 + $0x20] sm:$0xf]
  %v2619 = vld [vmem:[%s2609 + $0x24] sm:$0xf]
  %v2620 = vld [vmem:[%s2609 + $0x28] sm:$0xf]
  %v2621 = vld [vmem:[%s2609 + $0x2c] sm:$0xf]
  %v2622 = vld [vmem:[%s2609 + $0x30] sm:$0xf]
  %v2623 = vld [vmem:[%s2609 + $0x34] sm:$0xf]
  %v2624 = vld [vmem:[%s2609 + $0x38] sm:$0xf]
  %v2625 = vld [vmem:[%s2609 + $0x3c] sm:$0xf]
  %v2626 = vld [vmem:[%s2609 + $0x40] sm:$0xf]
  %v2627 = vld [vmem:[%s2609 + $0x44] sm:$0xf]
  %v2628 = vld [vmem:[%s2609 + $0x48] sm:$0xf]
  %v2629 = vld [vmem:[%s2609 + $0x4c] sm:$0xf]
  %v2630 = vld [vmem:[%s2609 + $0x50] sm:$0xf]
  %v2631 = vld [vmem:[%s2609 + $0x54] sm:$0xf]
  %v2632 = vld [vmem:[%s2609 + $0x58] sm:$0xf]
  %v2633 = vld [vmem:[%s2609 + $0x5c] sm:$0xf]
  %v2634 = vld [vmem:[%s2609 + $0x60] sm:$0xf]
  %v2635 = vld [vmem:[%s2609 + $0x64] sm:$0xf]
  %v2636 = vld [vmem:[%s2609 + $0x68] sm:$0xf]
  %v2637 = vld [vmem:[%s2609 + $0x6c] sm:$0xf]
  %v2638 = vld [vmem:[%s2609 + $0x70] sm:$0xf]
  %v2639 = vld [vmem:[%s2609 + $0x74] sm:$0xf]
  %v2640 = vld [vmem:[%s2609 + $0x78] sm:$0xf]
  %v2641 = vld [vmem:[%s2609 + $0x7c] sm:$0xf]
  %v2642 = vld [vmem:[%s2609 + $0x80] sm:$0xf]
  %v2643 = vld [vmem:[%s2609 + $0x84] sm:$0xf]
  %v2644 = vld [vmem:[%s2609 + $0x88] sm:$0xf]
  %v2645 = vld [vmem:[%s2609 + $0x8c] sm:$0xf]
  %v2646 = vld [vmem:[%s2609 + $0x90] sm:$0xf]
  %v2647 = vld [vmem:[%s2609 + $0x94] sm:$0xf]
  %v2648 = vld [vmem:[%s2609 + $0x98] sm:$0xf]
  %v2649 = vld [vmem:[%s2609 + $0x9c] sm:$0xf]
  %v2650 = vld [vmem:[%s2609 + $0xa0] sm:$0xf]
  %v2651 = vld [vmem:[%s2609 + $0xa4] sm:$0xf]
  %v2652 = vld [vmem:[%s2609 + $0xa8] sm:$0xf]
  %v2653 = vld [vmem:[%s2609 + $0xac] sm:$0xf]
  %v2654 = vld [vmem:[%s2609 + $0xb0] sm:$0xf]
  %v2655 = vld [vmem:[%s2609 + $0xb4] sm:$0xf]
  %v2656 = vld [vmem:[%s2609 + $0xb8] sm:$0xf]
  %v2657 = vld [vmem:[%s2609 + $0xbc] sm:$0xf]
  %v2658 = vld [vmem:[%s2609 + $0xc0] sm:$0xf]
  %v2659 = vld [vmem:[%s2609 + $0xc4] sm:$0xf]
  %v2660 = vld [vmem:[%s2609 + $0xc8] sm:$0xf]
  %v2661 = vld [vmem:[%s2609 + $0xcc] sm:$0xf]
  %v2662 = vld [vmem:[%s2609 + $0xd0] sm:$0xf]
  %v2663 = vld [vmem:[%s2609 + $0xd4] sm:$0xf]
  %v2664 = vld [vmem:[%s2609 + $0xd8] sm:$0xf]
  %v2665 = vld [vmem:[%s2609 + $0xdc] sm:$0xf]
  %v2666 = vld [vmem:[%s2609 + $0xe0] sm:$0xf]
  %v2667 = vld [vmem:[%s2609 + $0xe4] sm:$0xf]
  %v2668 = vld [vmem:[%s2609 + $0xe8] sm:$0xf]
  %v2669 = vld [vmem:[%s2609 + $0xec] sm:$0xf]
  %v2670 = vld [vmem:[%s2609 + $0xf0] sm:$0xf]
  %v2671 = vld [vmem:[%s2609 + $0xf4] sm:$0xf]
  %v2672 = vld [vmem:[%s2609 + $0xf8] sm:$0xf]
  %v2673 = vld [vmem:[%s2609 + $0xfc] sm:$0xf]
  %s2674 = scalar_lea.vmem %s1, 8
  %v2675 = vld [vmem:[%s2674] sm:$0x3]
  %v2740 = vunpack.c.l.b16 %v2610
  %v2741 = vunpack.c.l.b16 %v2611
  %v2742 = vunpack.c.l.b16 %v2612
  %v2743 = vunpack.c.l.b16 %v2613
  %v2744 = vunpack.c.l.b16 %v2614
  %v2745 = vunpack.c.l.b16 %v2615
  %v2746 = vunpack.c.l.b16 %v2616
  %v2747 = vunpack.c.l.b16 %v2617
  %v2748 = vunpack.c.l.b16 %v2618
  %v2749 = vunpack.c.l.b16 %v2619
  %v2750 = vunpack.c.l.b16 %v2620
  %v2751 = vunpack.c.l.b16 %v2621
  %v2752 = vunpack.c.l.b16 %v2622
  %v2753 = vunpack.c.l.b16 %v2623
  %v2754 = vunpack.c.l.b16 %v2624
  %v2755 = vunpack.c.l.b16 %v2625
  %v2756 = vunpack.c.l.b16 %v2626
  %v2757 = vunpack.c.l.b16 %v2627
  %v2758 = vunpack.c.l.b16 %v2628
  %v2759 = vunpack.c.l.b16 %v2629
  %v2760 = vunpack.c.l.b16 %v2630
  %v2761 = vunpack.c.l.b16 %v2631
  %v2762 = vunpack.c.l.b16 %v2632
  %v2763 = vunpack.c.l.b16 %v2633
  %v2764 = vunpack.c.l.b16 %v2634
  %v2765 = vunpack.c.l.b16 %v2635
  %v2766 = vunpack.c.l.b16 %v2636
  %v2767 = vunpack.c.l.b16 %v2637
  %v2768 = vunpack.c.l.b16 %v2638
  %v2769 = vunpack.c.l.b16 %v2639
  %v2770 = vunpack.c.l.b16 %v2640
  %v2771 = vunpack.c.l.b16 %v2641
  %v2772 = vunpack.c.l.b16 %v2642
  %v2773 = vunpack.c.l.b16 %v2643
  %v2774 = vunpack.c.l.b16 %v2644
  %v2775 = vunpack.c.l.b16 %v2645
  %v2776 = vunpack.c.l.b16 %v2646
  %v2777 = vunpack.c.l.b16 %v2647
  %v2778 = vunpack.c.l.b16 %v2648
  %v2779 = vunpack.c.l.b16 %v2649
  %v2780 = vunpack.c.l.b16 %v2650
  %v2781 = vunpack.c.l.b16 %v2651
  %v2782 = vunpack.c.l.b16 %v2652
  %v2783 = vunpack.c.l.b16 %v2653
  %v2784 = vunpack.c.l.b16 %v2654
  %v2785 = vunpack.c.l.b16 %v2655
  %v2786 = vunpack.c.l.b16 %v2656
  %v2787 = vunpack.c.l.b16 %v2657
  %v2788 = vunpack.c.l.b16 %v2658
  %v2789 = vunpack.c.l.b16 %v2659
  %v2790 = vunpack.c.l.b16 %v2660
  %v2791 = vunpack.c.l.b16 %v2661
  %v2792 = vunpack.c.l.b16 %v2662
  %v2793 = vunpack.c.l.b16 %v2663
  %v2794 = vunpack.c.l.b16 %v2664
  %v2795 = vunpack.c.l.b16 %v2665
  %v2796 = vunpack.c.l.b16 %v2666
  %v2797 = vunpack.c.l.b16 %v2667
  %v2798 = vunpack.c.l.b16 %v2668
  %v2799 = vunpack.c.l.b16 %v2669
  %v2800 = vunpack.c.l.b16 %v2670
  %v2801 = vunpack.c.l.b16 %v2671
  %v2802 = vunpack.c.l.b16 %v2672
  %v2803 = vunpack.c.l.b16 %v2673
  %v2804 = vpack.c.b16 %v2741, %v2740
  %v2805 = vpack.c.b16 %v2743, %v2742
  %v2806 = vpack.c.b16 %v2745, %v2744
  %v2807 = vpack.c.b16 %v2747, %v2746
  %v2808 = vpack.c.b16 %v2749, %v2748
  %v2809 = vpack.c.b16 %v2751, %v2750
  %v2810 = vpack.c.b16 %v2753, %v2752
  %v2811 = vpack.c.b16 %v2755, %v2754
  %v2812 = vpack.c.b16 %v2757, %v2756
  %v2813 = vpack.c.b16 %v2759, %v2758
  %v2814 = vpack.c.b16 %v2761, %v2760
  %v2815 = vpack.c.b16 %v2763, %v2762
  %v2816 = vpack.c.b16 %v2765, %v2764
  %v2817 = vpack.c.b16 %v2767, %v2766
  %v2818 = vpack.c.b16 %v2769, %v2768
  %v2819 = vpack.c.b16 %v2771, %v2770
  %v2820 = vpack.c.b16 %v2773, %v2772
  %v2821 = vpack.c.b16 %v2775, %v2774
  %v2822 = vpack.c.b16 %v2777, %v2776
  %v2823 = vpack.c.b16 %v2779, %v2778
  %v2824 = vpack.c.b16 %v2781, %v2780
  %v2825 = vpack.c.b16 %v2783, %v2782
  %v2826 = vpack.c.b16 %v2785, %v2784
  %v2827 = vpack.c.b16 %v2787, %v2786
  %v2828 = vpack.c.b16 %v2789, %v2788
  %v2829 = vpack.c.b16 %v2791, %v2790
  %v2830 = vpack.c.b16 %v2793, %v2792
  %v2831 = vpack.c.b16 %v2795, %v2794
  %v2832 = vpack.c.b16 %v2797, %v2796
  %v2833 = vpack.c.b16 %v2799, %v2798
  %v2834 = vpack.c.b16 %v2801, %v2800
  %v2835 = vpack.c.b16 %v2803, %v2802
  %v2837 = vsel %vm310, %v2804, 0
  %v2840 = vsel %vm310, %v2805, 0
  %v2843 = vsel %vm310, %v2806, 0
  %v2846 = vsel %vm310, %v2807, 0
  %v2849 = vsel %vm310, %v2808, 0
  %v2852 = vsel %vm310, %v2809, 0
  %v2855 = vsel %vm310, %v2810, 0
  %v2858 = vsel %vm310, %v2811, 0
  %v2861 = vsel %vm310, %v2812, 0
  %v2864 = vsel %vm310, %v2813, 0
  %v2867 = vsel %vm310, %v2814, 0
  %v2870 = vsel %vm310, %v2815, 0
  %v2873 = vsel %vm310, %v2816, 0
  %v2876 = vsel %vm310, %v2817, 0
  %v2879 = vsel %vm310, %v2818, 0
  %v2882 = vsel %vm310, %v2819, 0
  %v2885 = vsel %vm310, %v2820, 0
  %v2888 = vsel %vm310, %v2821, 0
  %v2891 = vsel %vm310, %v2822, 0
  %v2894 = vsel %vm310, %v2823, 0
  %v2897 = vsel %vm310, %v2824, 0
  %v2900 = vsel %vm310, %v2825, 0
  %v2903 = vsel %vm310, %v2826, 0
  %v2906 = vsel %vm310, %v2827, 0
  %v2909 = vsel %vm310, %v2828, 0
  %v2912 = vsel %vm310, %v2829, 0
  %v2915 = vsel %vm310, %v2830, 0
  %v2918 = vsel %vm310, %v2831, 0
  %v2921 = vsel %vm310, %v2832, 0
  %v2924 = vsel %vm310, %v2833, 0
  %v2927 = vsel %vm310, %v2834, 0
  %v2930 = vsel %vm310, %v2835, 0
  %v2933 = vand.u32 %v2675, %v410
  %2935 = vmatprep.subr.bf16.mxu0 0
  %2936 = vmatpush1.bf16.msra.mxu0 0
  %2937 = vmatprep.subr.bf16.mxu0 0
  %2938 = vmatpush1.bf16.msra.mxu0 0
  %2939 = vmatprep.subr.bf16.mxu0 0
  %2940 = vmatpush1.bf16.msra.mxu0 0
  %2941 = vmatprep.subr.bf16.mxu0 0
  %2942 = vmatpush1.bf16.msra.mxu0 0
  %2943 = vmatprep.subr.bf16.mxu0 0
  %2944 = vmatpush1.bf16.msra.mxu0 0
  %2945 = vmatprep.subr.bf16.mxu0 0
  %2946 = vmatpush1.bf16.msra.mxu0 0
  %2947 = vmatprep.subr.bf16.mxu0 0
  %2948 = vmatpush1.bf16.msra.mxu0 0
  %2949 = vmatprep.subr.bf16.mxu0 0
  %2950 = vmatpush1.bf16.msra.mxu0 %v2933
  %2951 = vmatprep.subr.bf16.mxu0 0
  %2952 = vmatpush2.bf16.msra.mxu0 0
  %2953 = vmatprep.subr.bf16.mxu0 0
  %2954 = vmatpush2.bf16.msra.mxu0 0
  %2955 = vmatprep.subr.bf16.mxu0 0
  %2956 = vmatpush2.bf16.msra.mxu0 0
  %2957 = vmatprep.subr.bf16.mxu0 0
  %2958 = vmatpush2.bf16.msra.mxu0 0
  %2959 = vmatprep.subr.bf16.mxu0 0
  %2960 = vmatpush2.bf16.msra.mxu0 0
  %2961 = vmatprep.subr.bf16.mxu0 0
  %2962 = vmatpush2.bf16.msra.mxu0 0
  %2963 = vmatprep.subr.bf16.mxu0 0
  %2964 = vmatpush2.bf16.msra.mxu0 0
  %2965 = vmatprep.subr.bf16.mxu0 0
  %2966 = vmatpush2.bf16.msra.mxu0 0
  %2967 = vmatprep.mubr.bf16.mxu0 0
  %2968 = vmatmul.mubr.bf16.gmra.mxu0 %v2837
  %v2969 = vpop.f32.mrf.mxu0
  %v2970 = vadd.f32 0.0, %v2969
  %v2971 = vpop.f32.mrf.mxu0
  %v2972 = vpop.f32.mrf.mxu0
  %v2973 = vadd.f32 0.0, %v2972
  %v2974 = vpop.f32.mrf.mxu0
  %2975 = vmatprep.mubr.bf16.mxu0 0
  %2976 = vmatmul.mubr.bf16.gmra.mxu0 %v2840
  %v2977 = vpop.f32.mrf.mxu0
  %v2978 = vadd.f32 0.0, %v2977
  %v2979 = vpop.f32.mrf.mxu0
  %v2980 = vpop.f32.mrf.mxu0
  %v2981 = vadd.f32 0.0, %v2980
  %v2982 = vpop.f32.mrf.mxu0
  %2983 = vmatprep.mubr.bf16.mxu0 0
  %2984 = vmatmul.mubr.bf16.gmra.mxu0 %v2843
  %v2985 = vpop.f32.mrf.mxu0
  %v2986 = vadd.f32 0.0, %v2985
  %v2987 = vpop.f32.mrf.mxu0
  %v2988 = vpop.f32.mrf.mxu0
  %v2989 = vadd.f32 0.0, %v2988
  %v2990 = vpop.f32.mrf.mxu0
  %2991 = vmatprep.mubr.bf16.mxu0 0
  %2992 = vmatmul.mubr.bf16.gmra.mxu0 %v2846
  %v2993 = vpop.f32.mrf.mxu0
  %v2994 = vadd.f32 0.0, %v2993
  %v2995 = vpop.f32.mrf.mxu0
  %v2996 = vpop.f32.mrf.mxu0
  %v2997 = vadd.f32 0.0, %v2996
  %v2998 = vpop.f32.mrf.mxu0
  %2999 = vmatprep.mubr.bf16.mxu0 0
  %3000 = vmatmul.mubr.bf16.gmra.mxu0 %v2849
  %v3001 = vpop.f32.mrf.mxu0
  %v3002 = vadd.f32 0.0, %v3001
  %v3003 = vpop.f32.mrf.mxu0
  %v3004 = vpop.f32.mrf.mxu0
  %v3005 = vadd.f32 0.0, %v3004
  %v3006 = vpop.f32.mrf.mxu0
  %3007 = vmatprep.mubr.bf16.mxu0 0
  %3008 = vmatmul.mubr.bf16.gmra.mxu0 %v2852
  %v3009 = vpop.f32.mrf.mxu0
  %v3010 = vadd.f32 0.0, %v3009
  %v3011 = vpop.f32.mrf.mxu0
  %v3012 = vpop.f32.mrf.mxu0
  %v3013 = vadd.f32 0.0, %v3012
  %v3014 = vpop.f32.mrf.mxu0
  %3015 = vmatprep.mubr.bf16.mxu0 0
  %3016 = vmatmul.mubr.bf16.gmra.mxu0 %v2855
  %v3017 = vpop.f32.mrf.mxu0
  %v3018 = vadd.f32 0.0, %v3017
  %v3019 = vpop.f32.mrf.mxu0
  %v3020 = vpop.f32.mrf.mxu0
  %v3021 = vadd.f32 0.0, %v3020
  %v3022 = vpop.f32.mrf.mxu0
  %3023 = vmatprep.mubr.bf16.mxu0 0
  %3024 = vmatmul.mubr.bf16.gmra.mxu0 %v2858
  %v3025 = vpop.f32.mrf.mxu0
  %v3026 = vadd.f32 0.0, %v3025
  %v3027 = vpop.f32.mrf.mxu0
  %v3028 = vpop.f32.mrf.mxu0
  %v3029 = vadd.f32 0.0, %v3028
  %v3030 = vpop.f32.mrf.mxu0
  %3031 = vmatprep.mubr.bf16.mxu0 0
  %3032 = vmatmul.mubr.bf16.gmra.mxu0 %v2861
  %v3033 = vpop.f32.mrf.mxu0
  %v3034 = vadd.f32 0.0, %v3033
  %v3035 = vpop.f32.mrf.mxu0
  %v3036 = vpop.f32.mrf.mxu0
  %v3037 = vadd.f32 0.0, %v3036
  %v3038 = vpop.f32.mrf.mxu0
  %3039 = vmatprep.mubr.bf16.mxu0 0
  %3040 = vmatmul.mubr.bf16.gmra.mxu0 %v2864
  %v3041 = vpop.f32.mrf.mxu0
  %v3042 = vadd.f32 0.0, %v3041
  %v3043 = vpop.f32.mrf.mxu0
  %v3044 = vpop.f32.mrf.mxu0
  %v3045 = vadd.f32 0.0, %v3044
  %v3046 = vpop.f32.mrf.mxu0
  %3047 = vmatprep.mubr.bf16.mxu0 0
  %3048 = vmatmul.mubr.bf16.gmra.mxu0 %v2867
  %v3049 = vpop.f32.mrf.mxu0
  %v3050 = vadd.f32 0.0, %v3049
  %v3051 = vpop.f32.mrf.mxu0
  %v3052 = vpop.f32.mrf.mxu0
  %v3053 = vadd.f32 0.0, %v3052
  %v3054 = vpop.f32.mrf.mxu0
  %3055 = vmatprep.mubr.bf16.mxu0 0
  %3056 = vmatmul.mubr.bf16.gmra.mxu0 %v2870
  %v3057 = vpop.f32.mrf.mxu0
  %v3058 = vadd.f32 0.0, %v3057
  %v3059 = vpop.f32.mrf.mxu0
  %v3060 = vpop.f32.mrf.mxu0
  %v3061 = vadd.f32 0.0, %v3060
  %v3062 = vpop.f32.mrf.mxu0
  %3063 = vmatprep.mubr.bf16.mxu0 0
  %3064 = vmatmul.mubr.bf16.gmra.mxu0 %v2873
  %v3065 = vpop.f32.mrf.mxu0
  %v3066 = vadd.f32 0.0, %v3065
  %v3067 = vpop.f32.mrf.mxu0
  %v3068 = vpop.f32.mrf.mxu0
  %v3069 = vadd.f32 0.0, %v3068
  %v3070 = vpop.f32.mrf.mxu0
  %3071 = vmatprep.mubr.bf16.mxu0 0
  %3072 = vmatmul.mubr.bf16.gmra.mxu0 %v2876
  %v3073 = vpop.f32.mrf.mxu0
  %v3074 = vadd.f32 0.0, %v3073
  %v3075 = vpop.f32.mrf.mxu0
  %v3076 = vpop.f32.mrf.mxu0
  %v3077 = vadd.f32 0.0, %v3076
  %v3078 = vpop.f32.mrf.mxu0
  %3079 = vmatprep.mubr.bf16.mxu0 0
  %3080 = vmatmul.mubr.bf16.gmra.mxu0 %v2879
  %v3081 = vpop.f32.mrf.mxu0
  %v3082 = vadd.f32 0.0, %v3081
  %v3083 = vpop.f32.mrf.mxu0
  %v3084 = vpop.f32.mrf.mxu0
  %v3085 = vadd.f32 0.0, %v3084
  %v3086 = vpop.f32.mrf.mxu0
  %3087 = vmatprep.mubr.bf16.mxu0 0
  %3088 = vmatmul.mubr.bf16.gmra.mxu0 %v2882
  %v3089 = vpop.f32.mrf.mxu0
  %v3090 = vadd.f32 0.0, %v3089
  %v3091 = vpop.f32.mrf.mxu0
  %v3092 = vpop.f32.mrf.mxu0
  %v3093 = vadd.f32 0.0, %v3092
  %v3094 = vpop.f32.mrf.mxu0
  %3095 = vmatprep.mubr.bf16.mxu0 0
  %3096 = vmatmul.mubr.bf16.gmra.mxu0 %v2885
  %v3097 = vpop.f32.mrf.mxu0
  %v3098 = vadd.f32 0.0, %v3097
  %v3099 = vpop.f32.mrf.mxu0
  %v3100 = vpop.f32.mrf.mxu0
  %v3101 = vadd.f32 0.0, %v3100
  %v3102 = vpop.f32.mrf.mxu0
  %3103 = vmatprep.mubr.bf16.mxu0 0
  %3104 = vmatmul.mubr.bf16.gmra.mxu0 %v2888
  %v3105 = vpop.f32.mrf.mxu0
  %v3106 = vadd.f32 0.0, %v3105
  %v3107 = vpop.f32.mrf.mxu0
  %v3108 = vpop.f32.mrf.mxu0
  %v3109 = vadd.f32 0.0, %v3108
  %v3110 = vpop.f32.mrf.mxu0
  %3111 = vmatprep.mubr.bf16.mxu0 0
  %3112 = vmatmul.mubr.bf16.gmra.mxu0 %v2891
  %v3113 = vpop.f32.mrf.mxu0
  %v3114 = vadd.f32 0.0, %v3113
  %v3115 = vpop.f32.mrf.mxu0
  %v3116 = vpop.f32.mrf.mxu0
  %v3117 = vadd.f32 0.0, %v3116
  %v3118 = vpop.f32.mrf.mxu0
  %3119 = vmatprep.mubr.bf16.mxu0 0
  %3120 = vmatmul.mubr.bf16.gmra.mxu0 %v2894
  %v3121 = vpop.f32.mrf.mxu0
  %v3122 = vadd.f32 0.0, %v3121
  %v3123 = vpop.f32.mrf.mxu0
  %v3124 = vpop.f32.mrf.mxu0
  %v3125 = vadd.f32 0.0, %v3124
  %v3126 = vpop.f32.mrf.mxu0
  %3127 = vmatprep.mubr.bf16.mxu0 0
  %3128 = vmatmul.mubr.bf16.gmra.mxu0 %v2897
  %v3129 = vpop.f32.mrf.mxu0
  %v3130 = vadd.f32 0.0, %v3129
  %v3131 = vpop.f32.mrf.mxu0
  %v3132 = vpop.f32.mrf.mxu0
  %v3133 = vadd.f32 0.0, %v3132
  %v3134 = vpop.f32.mrf.mxu0
  %3135 = vmatprep.mubr.bf16.mxu0 0
  %3136 = vmatmul.mubr.bf16.gmra.mxu0 %v2900
  %v3137 = vpop.f32.mrf.mxu0
  %v3138 = vadd.f32 0.0, %v3137
  %v3139 = vpop.f32.mrf.mxu0
  %v3140 = vpop.f32.mrf.mxu0
  %v3141 = vadd.f32 0.0, %v3140
  %v3142 = vpop.f32.mrf.mxu0
  %3143 = vmatprep.mubr.bf16.mxu0 0
  %3144 = vmatmul.mubr.bf16.gmra.mxu0 %v2903
  %v3145 = vpop.f32.mrf.mxu0
  %v3146 = vadd.f32 0.0, %v3145
  %v3147 = vpop.f32.mrf.mxu0
  %v3148 = vpop.f32.mrf.mxu0
  %v3149 = vadd.f32 0.0, %v3148
  %v3150 = vpop.f32.mrf.mxu0
  %3151 = vmatprep.mubr.bf16.mxu0 0
  %3152 = vmatmul.mubr.bf16.gmra.mxu0 %v2906
  %v3153 = vpop.f32.mrf.mxu0
  %v3154 = vadd.f32 0.0, %v3153
  %v3155 = vpop.f32.mrf.mxu0
  %v3156 = vpop.f32.mrf.mxu0
  %v3157 = vadd.f32 0.0, %v3156
  %v3158 = vpop.f32.mrf.mxu0
  %3159 = vmatprep.mubr.bf16.mxu0 0
  %3160 = vmatmul.mubr.bf16.gmra.mxu0 %v2909
  %v3161 = vpop.f32.mrf.mxu0
  %v3162 = vadd.f32 0.0, %v3161
  %v3163 = vpop.f32.mrf.mxu0
  %v3164 = vpop.f32.mrf.mxu0
  %v3165 = vadd.f32 0.0, %v3164
  %v3166 = vpop.f32.mrf.mxu0
  %3167 = vmatprep.mubr.bf16.mxu0 0
  %3168 = vmatmul.mubr.bf16.gmra.mxu0 %v2912
  %v3169 = vpop.f32.mrf.mxu0
  %v3170 = vadd.f32 0.0, %v3169
  %v3171 = vpop.f32.mrf.mxu0
  %v3172 = vpop.f32.mrf.mxu0
  %v3173 = vadd.f32 0.0, %v3172
  %v3174 = vpop.f32.mrf.mxu0
  %3175 = vmatprep.mubr.bf16.mxu0 0
  %3176 = vmatmul.mubr.bf16.gmra.mxu0 %v2915
  %v3177 = vpop.f32.mrf.mxu0
  %v3178 = vadd.f32 0.0, %v3177
  %v3179 = vpop.f32.mrf.mxu0
  %v3180 = vpop.f32.mrf.mxu0
  %v3181 = vadd.f32 0.0, %v3180
  %v3182 = vpop.f32.mrf.mxu0
  %3183 = vmatprep.mubr.bf16.mxu0 0
  %3184 = vmatmul.mubr.bf16.gmra.mxu0 %v2918
  %v3185 = vpop.f32.mrf.mxu0
  %v3186 = vadd.f32 0.0, %v3185
  %v3187 = vpop.f32.mrf.mxu0
  %v3188 = vpop.f32.mrf.mxu0
  %v3189 = vadd.f32 0.0, %v3188
  %v3190 = vpop.f32.mrf.mxu0
  %3191 = vmatprep.mubr.bf16.mxu0 0
  %3192 = vmatmul.mubr.bf16.gmra.mxu0 %v2921
  %v3193 = vpop.f32.mrf.mxu0
  %v3194 = vadd.f32 0.0, %v3193
  %v3195 = vpop.f32.mrf.mxu0
  %v3196 = vpop.f32.mrf.mxu0
  %v3197 = vadd.f32 0.0, %v3196
  %v3198 = vpop.f32.mrf.mxu0
  %3199 = vmatprep.mubr.bf16.mxu0 0
  %3200 = vmatmul.mubr.bf16.gmra.mxu0 %v2924
  %v3201 = vpop.f32.mrf.mxu0
  %v3202 = vadd.f32 0.0, %v3201
  %v3203 = vpop.f32.mrf.mxu0
  %v3204 = vpop.f32.mrf.mxu0
  %v3205 = vadd.f32 0.0, %v3204
  %v3206 = vpop.f32.mrf.mxu0
  %3207 = vmatprep.mubr.bf16.mxu0 0
  %3208 = vmatmul.mubr.bf16.gmra.mxu0 %v2927
  %v3209 = vpop.f32.mrf.mxu0
  %v3210 = vadd.f32 0.0, %v3209
  %v3211 = vpop.f32.mrf.mxu0
  %v3212 = vpop.f32.mrf.mxu0
  %v3213 = vadd.f32 0.0, %v3212
  %v3214 = vpop.f32.mrf.mxu0
  %3215 = vmatprep.mubr.bf16.mxu0 0
  %3216 = vmatmul.mubr.bf16.gmra.mxu0 %v2930
  %v3217 = vpop.f32.mrf.mxu0
  %v3218 = vadd.f32 0.0, %v3217
  %v3219 = vpop.f32.mrf.mxu0
  %v3220 = vpop.f32.mrf.mxu0
  %v3221 = vadd.f32 0.0, %v3220
  %v3222 = vpop.f32.mrf.mxu0
  %3223 = vdwg.mxu0
  %v3224 = vadd.f32 %v2545, %v2970
  %v3225 = vadd.f32 %v2546, %v2973
  %v3226 = vadd.f32 %v2547, %v2978
  %v3227 = vadd.f32 %v2548, %v2981
  %v3228 = vadd.f32 %v2549, %v2986
  %v3229 = vadd.f32 %v2550, %v2989
  %v3230 = vadd.f32 %v2551, %v2994
  %v3231 = vadd.f32 %v2552, %v2997
  %v3232 = vadd.f32 %v2553, %v3002
  %v3233 = vadd.f32 %v2554, %v3005
  %v3234 = vadd.f32 %v2555, %v3010
  %v3235 = vadd.f32 %v2556, %v3013
  %v3236 = vadd.f32 %v2557, %v3018
  %v3237 = vadd.f32 %v2558, %v3021
  %v3238 = vadd.f32 %v2559, %v3026
  %v3239 = vadd.f32 %v2560, %v3029
  %v3240 = vadd.f32 %v2561, %v3034
  %v3241 = vadd.f32 %v2562, %v3037
  %v3242 = vadd.f32 %v2563, %v3042
  %v3243 = vadd.f32 %v2564, %v3045
  %v3244 = vadd.f32 %v2565, %v3050
  %v3245 = vadd.f32 %v2566, %v3053
  %v3246 = vadd.f32 %v2567, %v3058
  %v3247 = vadd.f32 %v2568, %v3061
  %v3248 = vadd.f32 %v2569, %v3066
  %v3249 = vadd.f32 %v2570, %v3069
  %v3250 = vadd.f32 %v2571, %v3074
  %v3251 = vadd.f32 %v2572, %v3077
  %v3252 = vadd.f32 %v2573, %v3082
  %v3253 = vadd.f32 %v2574, %v3085
  %v3254 = vadd.f32 %v2575, %v3090
  %v3255 = vadd.f32 %v2576, %v3093
  %v3256 = vadd.f32 %v2577, %v3098
  %v3257 = vadd.f32 %v2578, %v3101
  %v3258 = vadd.f32 %v2579, %v3106
  %v3259 = vadd.f32 %v2580, %v3109
  %v3260 = vadd.f32 %v2581, %v3114
  %v3261 = vadd.f32 %v2582, %v3117
  %v3262 = vadd.f32 %v2583, %v3122
  %v3263 = vadd.f32 %v2584, %v3125
  %v3264 = vadd.f32 %v2585, %v3130
  %v3265 = vadd.f32 %v2586, %v3133
  %v3266 = vadd.f32 %v2587, %v3138
  %v3267 = vadd.f32 %v2588, %v3141
  %v3268 = vadd.f32 %v2589, %v3146
  %v3269 = vadd.f32 %v2590, %v3149
  %v3270 = vadd.f32 %v2591, %v3154
  %v3271 = vadd.f32 %v2592, %v3157
  %v3272 = vadd.f32 %v2593, %v3162
  %v3273 = vadd.f32 %v2594, %v3165
  %v3274 = vadd.f32 %v2595, %v3170
  %v3275 = vadd.f32 %v2596, %v3173
  %v3276 = vadd.f32 %v2597, %v3178
  %v3277 = vadd.f32 %v2598, %v3181
  %v3278 = vadd.f32 %v2599, %v3186
  %v3279 = vadd.f32 %v2600, %v3189
  %v3280 = vadd.f32 %v2601, %v3194
  %v3281 = vadd.f32 %v2602, %v3197
  %v3282 = vadd.f32 %v2603, %v3202
  %v3283 = vadd.f32 %v2604, %v3205
  %v3284 = vadd.f32 %v2605, %v3210
  %v3285 = vadd.f32 %v2606, %v3213
  %v3286 = vadd.f32 %v2607, %v3218
  %v3287 = vadd.f32 %v2608, %v3221
  %s3288 = scalar_lea.vmem %s0, 1280
  %v3289 = vld [vmem:[%s3288] sm:$0xf]
  %v3290 = vld [vmem:[%s3288 + $0x4] sm:$0xf]
  %v3291 = vld [vmem:[%s3288 + $0x8] sm:$0xf]
  %v3292 = vld [vmem:[%s3288 + $0xc] sm:$0xf]
  %v3293 = vld [vmem:[%s3288 + $0x10] sm:$0xf]
  %v3294 = vld [vmem:[%s3288 + $0x14] sm:$0xf]
  %v3295 = vld [vmem:[%s3288 + $0x18] sm:$0xf]
  %v3296 = vld [vmem:[%s3288 + $0x1c] sm:$0xf]
  %v3297 = vld [vmem:[%s3288 + $0x20] sm:$0xf]
  %v3298 = vld [vmem:[%s3288 + $0x24] sm:$0xf]
  %v3299 = vld [vmem:[%s3288 + $0x28] sm:$0xf]
  %v3300 = vld [vmem:[%s3288 + $0x2c] sm:$0xf]
  %v3301 = vld [vmem:[%s3288 + $0x30] sm:$0xf]
  %v3302 = vld [vmem:[%s3288 + $0x34] sm:$0xf]
  %v3303 = vld [vmem:[%s3288 + $0x38] sm:$0xf]
  %v3304 = vld [vmem:[%s3288 + $0x3c] sm:$0xf]
  %v3305 = vld [vmem:[%s3288 + $0x40] sm:$0xf]
  %v3306 = vld [vmem:[%s3288 + $0x44] sm:$0xf]
  %v3307 = vld [vmem:[%s3288 + $0x48] sm:$0xf]
  %v3308 = vld [vmem:[%s3288 + $0x4c] sm:$0xf]
  %v3309 = vld [vmem:[%s3288 + $0x50] sm:$0xf]
  %v3310 = vld [vmem:[%s3288 + $0x54] sm:$0xf]
  %v3311 = vld [vmem:[%s3288 + $0x58] sm:$0xf]
  %v3312 = vld [vmem:[%s3288 + $0x5c] sm:$0xf]
  %v3313 = vld [vmem:[%s3288 + $0x60] sm:$0xf]
  %v3314 = vld [vmem:[%s3288 + $0x64] sm:$0xf]
  %v3315 = vld [vmem:[%s3288 + $0x68] sm:$0xf]
  %v3316 = vld [vmem:[%s3288 + $0x6c] sm:$0xf]
  %v3317 = vld [vmem:[%s3288 + $0x70] sm:$0xf]
  %v3318 = vld [vmem:[%s3288 + $0x74] sm:$0xf]
  %v3319 = vld [vmem:[%s3288 + $0x78] sm:$0xf]
  %v3320 = vld [vmem:[%s3288 + $0x7c] sm:$0xf]
  %v3321 = vld [vmem:[%s3288 + $0x80] sm:$0xf]
  %v3322 = vld [vmem:[%s3288 + $0x84] sm:$0xf]
  %v3323 = vld [vmem:[%s3288 + $0x88] sm:$0xf]
  %v3324 = vld [vmem:[%s3288 + $0x8c] sm:$0xf]
  %v3325 = vld [vmem:[%s3288 + $0x90] sm:$0xf]
  %v3326 = vld [vmem:[%s3288 + $0x94] sm:$0xf]
  %v3327 = vld [vmem:[%s3288 + $0x98] sm:$0xf]
  %v3328 = vld [vmem:[%s3288 + $0x9c] sm:$0xf]
  %v3329 = vld [vmem:[%s3288 + $0xa0] sm:$0xf]
  %v3330 = vld [vmem:[%s3288 + $0xa4] sm:$0xf]
  %v3331 = vld [vmem:[%s3288 + $0xa8] sm:$0xf]
  %v3332 = vld [vmem:[%s3288 + $0xac] sm:$0xf]
  %v3333 = vld [vmem:[%s3288 + $0xb0] sm:$0xf]
  %v3334 = vld [vmem:[%s3288 + $0xb4] sm:$0xf]
  %v3335 = vld [vmem:[%s3288 + $0xb8] sm:$0xf]
  %v3336 = vld [vmem:[%s3288 + $0xbc] sm:$0xf]
  %v3337 = vld [vmem:[%s3288 + $0xc0] sm:$0xf]
  %v3338 = vld [vmem:[%s3288 + $0xc4] sm:$0xf]
  %v3339 = vld [vmem:[%s3288 + $0xc8] sm:$0xf]
  %v3340 = vld [vmem:[%s3288 + $0xcc] sm:$0xf]
  %v3341 = vld [vmem:[%s3288 + $0xd0] sm:$0xf]
  %v3342 = vld [vmem:[%s3288 + $0xd4] sm:$0xf]
  %v3343 = vld [vmem:[%s3288 + $0xd8] sm:$0xf]
  %v3344 = vld [vmem:[%s3288 + $0xdc] sm:$0xf]
  %v3345 = vld [vmem:[%s3288 + $0xe0] sm:$0xf]
  %v3346 = vld [vmem:[%s3288 + $0xe4] sm:$0xf]
  %v3347 = vld [vmem:[%s3288 + $0xe8] sm:$0xf]
  %v3348 = vld [vmem:[%s3288 + $0xec] sm:$0xf]
  %v3349 = vld [vmem:[%s3288 + $0xf0] sm:$0xf]
  %v3350 = vld [vmem:[%s3288 + $0xf4] sm:$0xf]
  %v3351 = vld [vmem:[%s3288 + $0xf8] sm:$0xf]
  %v3352 = vld [vmem:[%s3288 + $0xfc] sm:$0xf]
  %s3353 = scalar_lea.vmem %s1, 10
  %v3354 = vld [vmem:[%s3353] sm:$0x3]
  %v3419 = vunpack.c.l.b16 %v3289
  %v3420 = vunpack.c.l.b16 %v3290
  %v3421 = vunpack.c.l.b16 %v3291
  %v3422 = vunpack.c.l.b16 %v3292
  %v3423 = vunpack.c.l.b16 %v3293
  %v3424 = vunpack.c.l.b16 %v3294
  %v3425 = vunpack.c.l.b16 %v3295
  %v3426 = vunpack.c.l.b16 %v3296
  %v3427 = vunpack.c.l.b16 %v3297
  %v3428 = vunpack.c.l.b16 %v3298
  %v3429 = vunpack.c.l.b16 %v3299
  %v3430 = vunpack.c.l.b16 %v3300
  %v3431 = vunpack.c.l.b16 %v3301
  %v3432 = vunpack.c.l.b16 %v3302
  %v3433 = vunpack.c.l.b16 %v3303
  %v3434 = vunpack.c.l.b16 %v3304
  %v3435 = vunpack.c.l.b16 %v3305
  %v3436 = vunpack.c.l.b16 %v3306
  %v3437 = vunpack.c.l.b16 %v3307
  %v3438 = vunpack.c.l.b16 %v3308
  %v3439 = vunpack.c.l.b16 %v3309
  %v3440 = vunpack.c.l.b16 %v3310
  %v3441 = vunpack.c.l.b16 %v3311
  %v3442 = vunpack.c.l.b16 %v3312
  %v3443 = vunpack.c.l.b16 %v3313
  %v3444 = vunpack.c.l.b16 %v3314
  %v3445 = vunpack.c.l.b16 %v3315
  %v3446 = vunpack.c.l.b16 %v3316
  %v3447 = vunpack.c.l.b16 %v3317
  %v3448 = vunpack.c.l.b16 %v3318
  %v3449 = vunpack.c.l.b16 %v3319
  %v3450 = vunpack.c.l.b16 %v3320
  %v3451 = vunpack.c.l.b16 %v3321
  %v3452 = vunpack.c.l.b16 %v3322
  %v3453 = vunpack.c.l.b16 %v3323
  %v3454 = vunpack.c.l.b16 %v3324
  %v3455 = vunpack.c.l.b16 %v3325
  %v3456 = vunpack.c.l.b16 %v3326
  %v3457 = vunpack.c.l.b16 %v3327
  %v3458 = vunpack.c.l.b16 %v3328
  %v3459 = vunpack.c.l.b16 %v3329
  %v3460 = vunpack.c.l.b16 %v3330
  %v3461 = vunpack.c.l.b16 %v3331
  %v3462 = vunpack.c.l.b16 %v3332
  %v3463 = vunpack.c.l.b16 %v3333
  %v3464 = vunpack.c.l.b16 %v3334
  %v3465 = vunpack.c.l.b16 %v3335
  %v3466 = vunpack.c.l.b16 %v3336
  %v3467 = vunpack.c.l.b16 %v3337
  %v3468 = vunpack.c.l.b16 %v3338
  %v3469 = vunpack.c.l.b16 %v3339
  %v3470 = vunpack.c.l.b16 %v3340
  %v3471 = vunpack.c.l.b16 %v3341
  %v3472 = vunpack.c.l.b16 %v3342
  %v3473 = vunpack.c.l.b16 %v3343
  %v3474 = vunpack.c.l.b16 %v3344
  %v3475 = vunpack.c.l.b16 %v3345
  %v3476 = vunpack.c.l.b16 %v3346
  %v3477 = vunpack.c.l.b16 %v3347
  %v3478 = vunpack.c.l.b16 %v3348
  %v3479 = vunpack.c.l.b16 %v3349
  %v3480 = vunpack.c.l.b16 %v3350
  %v3481 = vunpack.c.l.b16 %v3351
  %v3482 = vunpack.c.l.b16 %v3352
  %v3483 = vpack.c.b16 %v3420, %v3419
  %v3484 = vpack.c.b16 %v3422, %v3421
  %v3485 = vpack.c.b16 %v3424, %v3423
  %v3486 = vpack.c.b16 %v3426, %v3425
  %v3487 = vpack.c.b16 %v3428, %v3427
  %v3488 = vpack.c.b16 %v3430, %v3429
  %v3489 = vpack.c.b16 %v3432, %v3431
  %v3490 = vpack.c.b16 %v3434, %v3433
  %v3491 = vpack.c.b16 %v3436, %v3435
  %v3492 = vpack.c.b16 %v3438, %v3437
  %v3493 = vpack.c.b16 %v3440, %v3439
  %v3494 = vpack.c.b16 %v3442, %v3441
  %v3495 = vpack.c.b16 %v3444, %v3443
  %v3496 = vpack.c.b16 %v3446, %v3445
  %v3497 = vpack.c.b16 %v3448, %v3447
  %v3498 = vpack.c.b16 %v3450, %v3449
  %v3499 = vpack.c.b16 %v3452, %v3451
  %v3500 = vpack.c.b16 %v3454, %v3453
  %v3501 = vpack.c.b16 %v3456, %v3455
  %v3502 = vpack.c.b16 %v3458, %v3457
  %v3503 = vpack.c.b16 %v3460, %v3459
  %v3504 = vpack.c.b16 %v3462, %v3461
  %v3505 = vpack.c.b16 %v3464, %v3463
  %v3506 = vpack.c.b16 %v3466, %v3465
  %v3507 = vpack.c.b16 %v3468, %v3467
  %v3508 = vpack.c.b16 %v3470, %v3469
  %v3509 = vpack.c.b16 %v3472, %v3471
  %v3510 = vpack.c.b16 %v3474, %v3473
  %v3511 = vpack.c.b16 %v3476, %v3475
  %v3512 = vpack.c.b16 %v3478, %v3477
  %v3513 = vpack.c.b16 %v3480, %v3479
  %v3514 = vpack.c.b16 %v3482, %v3481
  %v3516 = vsel %vm310, %v3483, 0
  %v3519 = vsel %vm310, %v3484, 0
  %v3522 = vsel %vm310, %v3485, 0
  %v3525 = vsel %vm310, %v3486, 0
  %v3528 = vsel %vm310, %v3487, 0
  %v3531 = vsel %vm310, %v3488, 0
  %v3534 = vsel %vm310, %v3489, 0
  %v3537 = vsel %vm310, %v3490, 0
  %v3540 = vsel %vm310, %v3491, 0
  %v3543 = vsel %vm310, %v3492, 0
  %v3546 = vsel %vm310, %v3493, 0
  %v3549 = vsel %vm310, %v3494, 0
  %v3552 = vsel %vm310, %v3495, 0
  %v3555 = vsel %vm310, %v3496, 0
  %v3558 = vsel %vm310, %v3497, 0
  %v3561 = vsel %vm310, %v3498, 0
  %v3564 = vsel %vm310, %v3499, 0
  %v3567 = vsel %vm310, %v3500, 0
  %v3570 = vsel %vm310, %v3501, 0
  %v3573 = vsel %vm310, %v3502, 0
  %v3576 = vsel %vm310, %v3503, 0
  %v3579 = vsel %vm310, %v3504, 0
  %v3582 = vsel %vm310, %v3505, 0
  %v3585 = vsel %vm310, %v3506, 0
  %v3588 = vsel %vm310, %v3507, 0
  %v3591 = vsel %vm310, %v3508, 0
  %v3594 = vsel %vm310, %v3509, 0
  %v3597 = vsel %vm310, %v3510, 0
  %v3600 = vsel %vm310, %v3511, 0
  %v3603 = vsel %vm310, %v3512, 0
  %v3606 = vsel %vm310, %v3513, 0
  %v3609 = vsel %vm310, %v3514, 0
  %v3612 = vand.u32 %v3354, %v410
  %3614 = vmatprep.subr.bf16.mxu0 0
  %3615 = vmatpush1.bf16.msra.mxu0 0
  %3616 = vmatprep.subr.bf16.mxu0 0
  %3617 = vmatpush1.bf16.msra.mxu0 0
  %3618 = vmatprep.subr.bf16.mxu0 0
  %3619 = vmatpush1.bf16.msra.mxu0 0
  %3620 = vmatprep.subr.bf16.mxu0 0
  %3621 = vmatpush1.bf16.msra.mxu0 0
  %3622 = vmatprep.subr.bf16.mxu0 0
  %3623 = vmatpush1.bf16.msra.mxu0 0
  %3624 = vmatprep.subr.bf16.mxu0 0
  %3625 = vmatpush1.bf16.msra.mxu0 0
  %3626 = vmatprep.subr.bf16.mxu0 0
  %3627 = vmatpush1.bf16.msra.mxu0 0
  %3628 = vmatprep.subr.bf16.mxu0 0
  %3629 = vmatpush1.bf16.msra.mxu0 %v3612
  %3630 = vmatprep.subr.bf16.mxu0 0
  %3631 = vmatpush2.bf16.msra.mxu0 0
  %3632 = vmatprep.subr.bf16.mxu0 0
  %3633 = vmatpush2.bf16.msra.mxu0 0
  %3634 = vmatprep.subr.bf16.mxu0 0
  %3635 = vmatpush2.bf16.msra.mxu0 0
  %3636 = vmatprep.subr.bf16.mxu0 0
  %3637 = vmatpush2.bf16.msra.mxu0 0
  %3638 = vmatprep.subr.bf16.mxu0 0
  %3639 = vmatpush2.bf16.msra.mxu0 0
  %3640 = vmatprep.subr.bf16.mxu0 0
  %3641 = vmatpush2.bf16.msra.mxu0 0
  %3642 = vmatprep.subr.bf16.mxu0 0
  %3643 = vmatpush2.bf16.msra.mxu0 0
  %3644 = vmatprep.subr.bf16.mxu0 0
  %3645 = vmatpush2.bf16.msra.mxu0 0
  %3646 = vmatprep.mubr.bf16.mxu0 0
  %3647 = vmatmul.mubr.bf16.gmra.mxu0 %v3516
  %v3648 = vpop.f32.mrf.mxu0
  %v3649 = vadd.f32 0.0, %v3648
  %v3650 = vpop.f32.mrf.mxu0
  %v3651 = vpop.f32.mrf.mxu0
  %v3652 = vadd.f32 0.0, %v3651
  %v3653 = vpop.f32.mrf.mxu0
  %3654 = vmatprep.mubr.bf16.mxu0 0
  %3655 = vmatmul.mubr.bf16.gmra.mxu0 %v3519
  %v3656 = vpop.f32.mrf.mxu0
  %v3657 = vadd.f32 0.0, %v3656
  %v3658 = vpop.f32.mrf.mxu0
  %v3659 = vpop.f32.mrf.mxu0
  %v3660 = vadd.f32 0.0, %v3659
  %v3661 = vpop.f32.mrf.mxu0
  %3662 = vmatprep.mubr.bf16.mxu0 0
  %3663 = vmatmul.mubr.bf16.gmra.mxu0 %v3522
  %v3664 = vpop.f32.mrf.mxu0
  %v3665 = vadd.f32 0.0, %v3664
  %v3666 = vpop.f32.mrf.mxu0
  %v3667 = vpop.f32.mrf.mxu0
  %v3668 = vadd.f32 0.0, %v3667
  %v3669 = vpop.f32.mrf.mxu0
  %3670 = vmatprep.mubr.bf16.mxu0 0
  %3671 = vmatmul.mubr.bf16.gmra.mxu0 %v3525
  %v3672 = vpop.f32.mrf.mxu0
  %v3673 = vadd.f32 0.0, %v3672
  %v3674 = vpop.f32.mrf.mxu0
  %v3675 = vpop.f32.mrf.mxu0
  %v3676 = vadd.f32 0.0, %v3675
  %v3677 = vpop.f32.mrf.mxu0
  %3678 = vmatprep.mubr.bf16.mxu0 0
  %3679 = vmatmul.mubr.bf16.gmra.mxu0 %v3528
  %v3680 = vpop.f32.mrf.mxu0
  %v3681 = vadd.f32 0.0, %v3680
  %v3682 = vpop.f32.mrf.mxu0
  %v3683 = vpop.f32.mrf.mxu0
  %v3684 = vadd.f32 0.0, %v3683
  %v3685 = vpop.f32.mrf.mxu0
  %3686 = vmatprep.mubr.bf16.mxu0 0
  %3687 = vmatmul.mubr.bf16.gmra.mxu0 %v3531
  %v3688 = vpop.f32.mrf.mxu0
  %v3689 = vadd.f32 0.0, %v3688
  %v3690 = vpop.f32.mrf.mxu0
  %v3691 = vpop.f32.mrf.mxu0
  %v3692 = vadd.f32 0.0, %v3691
  %v3693 = vpop.f32.mrf.mxu0
  %3694 = vmatprep.mubr.bf16.mxu0 0
  %3695 = vmatmul.mubr.bf16.gmra.mxu0 %v3534
  %v3696 = vpop.f32.mrf.mxu0
  %v3697 = vadd.f32 0.0, %v3696
  %v3698 = vpop.f32.mrf.mxu0
  %v3699 = vpop.f32.mrf.mxu0
  %v3700 = vadd.f32 0.0, %v3699
  %v3701 = vpop.f32.mrf.mxu0
  %3702 = vmatprep.mubr.bf16.mxu0 0
  %3703 = vmatmul.mubr.bf16.gmra.mxu0 %v3537
  %v3704 = vpop.f32.mrf.mxu0
  %v3705 = vadd.f32 0.0, %v3704
  %v3706 = vpop.f32.mrf.mxu0
  %v3707 = vpop.f32.mrf.mxu0
  %v3708 = vadd.f32 0.0, %v3707
  %v3709 = vpop.f32.mrf.mxu0
  %3710 = vmatprep.mubr.bf16.mxu0 0
  %3711 = vmatmul.mubr.bf16.gmra.mxu0 %v3540
  %v3712 = vpop.f32.mrf.mxu0
  %v3713 = vadd.f32 0.0, %v3712
  %v3714 = vpop.f32.mrf.mxu0
  %v3715 = vpop.f32.mrf.mxu0
  %v3716 = vadd.f32 0.0, %v3715
  %v3717 = vpop.f32.mrf.mxu0
  %3718 = vmatprep.mubr.bf16.mxu0 0
  %3719 = vmatmul.mubr.bf16.gmra.mxu0 %v3543
  %v3720 = vpop.f32.mrf.mxu0
  %v3721 = vadd.f32 0.0, %v3720
  %v3722 = vpop.f32.mrf.mxu0
  %v3723 = vpop.f32.mrf.mxu0
  %v3724 = vadd.f32 0.0, %v3723
  %v3725 = vpop.f32.mrf.mxu0
  %3726 = vmatprep.mubr.bf16.mxu0 0
  %3727 = vmatmul.mubr.bf16.gmra.mxu0 %v3546
  %v3728 = vpop.f32.mrf.mxu0
  %v3729 = vadd.f32 0.0, %v3728
  %v3730 = vpop.f32.mrf.mxu0
  %v3731 = vpop.f32.mrf.mxu0
  %v3732 = vadd.f32 0.0, %v3731
  %v3733 = vpop.f32.mrf.mxu0
  %3734 = vmatprep.mubr.bf16.mxu0 0
  %3735 = vmatmul.mubr.bf16.gmra.mxu0 %v3549
  %v3736 = vpop.f32.mrf.mxu0
  %v3737 = vadd.f32 0.0, %v3736
  %v3738 = vpop.f32.mrf.mxu0
  %v3739 = vpop.f32.mrf.mxu0
  %v3740 = vadd.f32 0.0, %v3739
  %v3741 = vpop.f32.mrf.mxu0
  %3742 = vmatprep.mubr.bf16.mxu0 0
  %3743 = vmatmul.mubr.bf16.gmra.mxu0 %v3552
  %v3744 = vpop.f32.mrf.mxu0
  %v3745 = vadd.f32 0.0, %v3744
  %v3746 = vpop.f32.mrf.mxu0
  %v3747 = vpop.f32.mrf.mxu0
  %v3748 = vadd.f32 0.0, %v3747
  %v3749 = vpop.f32.mrf.mxu0
  %3750 = vmatprep.mubr.bf16.mxu0 0
  %3751 = vmatmul.mubr.bf16.gmra.mxu0 %v3555
  %v3752 = vpop.f32.mrf.mxu0
  %v3753 = vadd.f32 0.0, %v3752
  %v3754 = vpop.f32.mrf.mxu0
  %v3755 = vpop.f32.mrf.mxu0
  %v3756 = vadd.f32 0.0, %v3755
  %v3757 = vpop.f32.mrf.mxu0
  %3758 = vmatprep.mubr.bf16.mxu0 0
  %3759 = vmatmul.mubr.bf16.gmra.mxu0 %v3558
  %v3760 = vpop.f32.mrf.mxu0
  %v3761 = vadd.f32 0.0, %v3760
  %v3762 = vpop.f32.mrf.mxu0
  %v3763 = vpop.f32.mrf.mxu0
  %v3764 = vadd.f32 0.0, %v3763
  %v3765 = vpop.f32.mrf.mxu0
  %3766 = vmatprep.mubr.bf16.mxu0 0
  %3767 = vmatmul.mubr.bf16.gmra.mxu0 %v3561
  %v3768 = vpop.f32.mrf.mxu0
  %v3769 = vadd.f32 0.0, %v3768
  %v3770 = vpop.f32.mrf.mxu0
  %v3771 = vpop.f32.mrf.mxu0
  %v3772 = vadd.f32 0.0, %v3771
  %v3773 = vpop.f32.mrf.mxu0
  %3774 = vmatprep.mubr.bf16.mxu0 0
  %3775 = vmatmul.mubr.bf16.gmra.mxu0 %v3564
  %v3776 = vpop.f32.mrf.mxu0
  %v3777 = vadd.f32 0.0, %v3776
  %v3778 = vpop.f32.mrf.mxu0
  %v3779 = vpop.f32.mrf.mxu0
  %v3780 = vadd.f32 0.0, %v3779
  %v3781 = vpop.f32.mrf.mxu0
  %3782 = vmatprep.mubr.bf16.mxu0 0
  %3783 = vmatmul.mubr.bf16.gmra.mxu0 %v3567
  %v3784 = vpop.f32.mrf.mxu0
  %v3785 = vadd.f32 0.0, %v3784
  %v3786 = vpop.f32.mrf.mxu0
  %v3787 = vpop.f32.mrf.mxu0
  %v3788 = vadd.f32 0.0, %v3787
  %v3789 = vpop.f32.mrf.mxu0
  %3790 = vmatprep.mubr.bf16.mxu0 0
  %3791 = vmatmul.mubr.bf16.gmra.mxu0 %v3570
  %v3792 = vpop.f32.mrf.mxu0
  %v3793 = vadd.f32 0.0, %v3792
  %v3794 = vpop.f32.mrf.mxu0
  %v3795 = vpop.f32.mrf.mxu0
  %v3796 = vadd.f32 0.0, %v3795
  %v3797 = vpop.f32.mrf.mxu0
  %3798 = vmatprep.mubr.bf16.mxu0 0
  %3799 = vmatmul.mubr.bf16.gmra.mxu0 %v3573
  %v3800 = vpop.f32.mrf.mxu0
  %v3801 = vadd.f32 0.0, %v3800
  %v3802 = vpop.f32.mrf.mxu0
  %v3803 = vpop.f32.mrf.mxu0
  %v3804 = vadd.f32 0.0, %v3803
  %v3805 = vpop.f32.mrf.mxu0
  %3806 = vmatprep.mubr.bf16.mxu0 0
  %3807 = vmatmul.mubr.bf16.gmra.mxu0 %v3576
  %v3808 = vpop.f32.mrf.mxu0
  %v3809 = vadd.f32 0.0, %v3808
  %v3810 = vpop.f32.mrf.mxu0
  %v3811 = vpop.f32.mrf.mxu0
  %v3812 = vadd.f32 0.0, %v3811
  %v3813 = vpop.f32.mrf.mxu0
  %3814 = vmatprep.mubr.bf16.mxu0 0
  %3815 = vmatmul.mubr.bf16.gmra.mxu0 %v3579
  %v3816 = vpop.f32.mrf.mxu0
  %v3817 = vadd.f32 0.0, %v3816
  %v3818 = vpop.f32.mrf.mxu0
  %v3819 = vpop.f32.mrf.mxu0
  %v3820 = vadd.f32 0.0, %v3819
  %v3821 = vpop.f32.mrf.mxu0
  %3822 = vmatprep.mubr.bf16.mxu0 0
  %3823 = vmatmul.mubr.bf16.gmra.mxu0 %v3582
  %v3824 = vpop.f32.mrf.mxu0
  %v3825 = vadd.f32 0.0, %v3824
  %v3826 = vpop.f32.mrf.mxu0
  %v3827 = vpop.f32.mrf.mxu0
  %v3828 = vadd.f32 0.0, %v3827
  %v3829 = vpop.f32.mrf.mxu0
  %3830 = vmatprep.mubr.bf16.mxu0 0
  %3831 = vmatmul.mubr.bf16.gmra.mxu0 %v3585
  %v3832 = vpop.f32.mrf.mxu0
  %v3833 = vadd.f32 0.0, %v3832
  %v3834 = vpop.f32.mrf.mxu0
  %v3835 = vpop.f32.mrf.mxu0
  %v3836 = vadd.f32 0.0, %v3835
  %v3837 = vpop.f32.mrf.mxu0
  %3838 = vmatprep.mubr.bf16.mxu0 0
  %3839 = vmatmul.mubr.bf16.gmra.mxu0 %v3588
  %v3840 = vpop.f32.mrf.mxu0
  %v3841 = vadd.f32 0.0, %v3840
  %v3842 = vpop.f32.mrf.mxu0
  %v3843 = vpop.f32.mrf.mxu0
  %v3844 = vadd.f32 0.0, %v3843
  %v3845 = vpop.f32.mrf.mxu0
  %3846 = vmatprep.mubr.bf16.mxu0 0
  %3847 = vmatmul.mubr.bf16.gmra.mxu0 %v3591
  %v3848 = vpop.f32.mrf.mxu0
  %v3849 = vadd.f32 0.0, %v3848
  %v3850 = vpop.f32.mrf.mxu0
  %v3851 = vpop.f32.mrf.mxu0
  %v3852 = vadd.f32 0.0, %v3851
  %v3853 = vpop.f32.mrf.mxu0
  %3854 = vmatprep.mubr.bf16.mxu0 0
  %3855 = vmatmul.mubr.bf16.gmra.mxu0 %v3594
  %v3856 = vpop.f32.mrf.mxu0
  %v3857 = vadd.f32 0.0, %v3856
  %v3858 = vpop.f32.mrf.mxu0
  %v3859 = vpop.f32.mrf.mxu0
  %v3860 = vadd.f32 0.0, %v3859
  %v3861 = vpop.f32.mrf.mxu0
  %3862 = vmatprep.mubr.bf16.mxu0 0
  %3863 = vmatmul.mubr.bf16.gmra.mxu0 %v3597
  %v3864 = vpop.f32.mrf.mxu0
  %v3865 = vadd.f32 0.0, %v3864
  %v3866 = vpop.f32.mrf.mxu0
  %v3867 = vpop.f32.mrf.mxu0
  %v3868 = vadd.f32 0.0, %v3867
  %v3869 = vpop.f32.mrf.mxu0
  %3870 = vmatprep.mubr.bf16.mxu0 0
  %3871 = vmatmul.mubr.bf16.gmra.mxu0 %v3600
  %v3872 = vpop.f32.mrf.mxu0
  %v3873 = vadd.f32 0.0, %v3872
  %v3874 = vpop.f32.mrf.mxu0
  %v3875 = vpop.f32.mrf.mxu0
  %v3876 = vadd.f32 0.0, %v3875
  %v3877 = vpop.f32.mrf.mxu0
  %3878 = vmatprep.mubr.bf16.mxu0 0
  %3879 = vmatmul.mubr.bf16.gmra.mxu0 %v3603
  %v3880 = vpop.f32.mrf.mxu0
  %v3881 = vadd.f32 0.0, %v3880
  %v3882 = vpop.f32.mrf.mxu0
  %v3883 = vpop.f32.mrf.mxu0
  %v3884 = vadd.f32 0.0, %v3883
  %v3885 = vpop.f32.mrf.mxu0
  %3886 = vmatprep.mubr.bf16.mxu0 0
  %3887 = vmatmul.mubr.bf16.gmra.mxu0 %v3606
  %v3888 = vpop.f32.mrf.mxu0
  %v3889 = vadd.f32 0.0, %v3888
  %v3890 = vpop.f32.mrf.mxu0
  %v3891 = vpop.f32.mrf.mxu0
  %v3892 = vadd.f32 0.0, %v3891
  %v3893 = vpop.f32.mrf.mxu0
  %3894 = vmatprep.mubr.bf16.mxu0 0
  %3895 = vmatmul.mubr.bf16.gmra.mxu0 %v3609
  %v3896 = vpop.f32.mrf.mxu0
  %v3897 = vadd.f32 0.0, %v3896
  %v3898 = vpop.f32.mrf.mxu0
  %v3899 = vpop.f32.mrf.mxu0
  %v3900 = vadd.f32 0.0, %v3899
  %v3901 = vpop.f32.mrf.mxu0
  %3902 = vdwg.mxu0
  %v3903 = vadd.f32 %v3224, %v3649
  %v3904 = vadd.f32 %v3225, %v3652
  %v3905 = vadd.f32 %v3226, %v3657
  %v3906 = vadd.f32 %v3227, %v3660
  %v3907 = vadd.f32 %v3228, %v3665
  %v3908 = vadd.f32 %v3229, %v3668
  %v3909 = vadd.f32 %v3230, %v3673
  %v3910 = vadd.f32 %v3231, %v3676
  %v3911 = vadd.f32 %v3232, %v3681
  %v3912 = vadd.f32 %v3233, %v3684
  %v3913 = vadd.f32 %v3234, %v3689
  %v3914 = vadd.f32 %v3235, %v3692
  %v3915 = vadd.f32 %v3236, %v3697
  %v3916 = vadd.f32 %v3237, %v3700
  %v3917 = vadd.f32 %v3238, %v3705
  %v3918 = vadd.f32 %v3239, %v3708
  %v3919 = vadd.f32 %v3240, %v3713
  %v3920 = vadd.f32 %v3241, %v3716
  %v3921 = vadd.f32 %v3242, %v3721
  %v3922 = vadd.f32 %v3243, %v3724
  %v3923 = vadd.f32 %v3244, %v3729
  %v3924 = vadd.f32 %v3245, %v3732
  %v3925 = vadd.f32 %v3246, %v3737
  %v3926 = vadd.f32 %v3247, %v3740
  %v3927 = vadd.f32 %v3248, %v3745
  %v3928 = vadd.f32 %v3249, %v3748
  %v3929 = vadd.f32 %v3250, %v3753
  %v3930 = vadd.f32 %v3251, %v3756
  %v3931 = vadd.f32 %v3252, %v3761
  %v3932 = vadd.f32 %v3253, %v3764
  %v3933 = vadd.f32 %v3254, %v3769
  %v3934 = vadd.f32 %v3255, %v3772
  %v3935 = vadd.f32 %v3256, %v3777
  %v3936 = vadd.f32 %v3257, %v3780
  %v3937 = vadd.f32 %v3258, %v3785
  %v3938 = vadd.f32 %v3259, %v3788
  %v3939 = vadd.f32 %v3260, %v3793
  %v3940 = vadd.f32 %v3261, %v3796
  %v3941 = vadd.f32 %v3262, %v3801
  %v3942 = vadd.f32 %v3263, %v3804
  %v3943 = vadd.f32 %v3264, %v3809
  %v3944 = vadd.f32 %v3265, %v3812
  %v3945 = vadd.f32 %v3266, %v3817
  %v3946 = vadd.f32 %v3267, %v3820
  %v3947 = vadd.f32 %v3268, %v3825
  %v3948 = vadd.f32 %v3269, %v3828
  %v3949 = vadd.f32 %v3270, %v3833
  %v3950 = vadd.f32 %v3271, %v3836
  %v3951 = vadd.f32 %v3272, %v3841
  %v3952 = vadd.f32 %v3273, %v3844
  %v3953 = vadd.f32 %v3274, %v3849
  %v3954 = vadd.f32 %v3275, %v3852
  %v3955 = vadd.f32 %v3276, %v3857
  %v3956 = vadd.f32 %v3277, %v3860
  %v3957 = vadd.f32 %v3278, %v3865
  %v3958 = vadd.f32 %v3279, %v3868
  %v3959 = vadd.f32 %v3280, %v3873
  %v3960 = vadd.f32 %v3281, %v3876
  %v3961 = vadd.f32 %v3282, %v3881
  %v3962 = vadd.f32 %v3283, %v3884
  %v3963 = vadd.f32 %v3284, %v3889
  %v3964 = vadd.f32 %v3285, %v3892
  %v3965 = vadd.f32 %v3286, %v3897
  %v3966 = vadd.f32 %v3287, %v3900
  %s3967 = scalar_lea.vmem %s0, 1536
  %v3968 = vld [vmem:[%s3967] sm:$0xf]
  %v3969 = vld [vmem:[%s3967 + $0x4] sm:$0xf]
  %v3970 = vld [vmem:[%s3967 + $0x8] sm:$0xf]
  %v3971 = vld [vmem:[%s3967 + $0xc] sm:$0xf]
  %v3972 = vld [vmem:[%s3967 + $0x10] sm:$0xf]
  %v3973 = vld [vmem:[%s3967 + $0x14] sm:$0xf]
  %v3974 = vld [vmem:[%s3967 + $0x18] sm:$0xf]
  %v3975 = vld [vmem:[%s3967 + $0x1c] sm:$0xf]
  %v3976 = vld [vmem:[%s3967 + $0x20] sm:$0xf]
  %v3977 = vld [vmem:[%s3967 + $0x24] sm:$0xf]
  %v3978 = vld [vmem:[%s3967 + $0x28] sm:$0xf]
  %v3979 = vld [vmem:[%s3967 + $0x2c] sm:$0xf]
  %v3980 = vld [vmem:[%s3967 + $0x30] sm:$0xf]
  %v3981 = vld [vmem:[%s3967 + $0x34] sm:$0xf]
  %v3982 = vld [vmem:[%s3967 + $0x38] sm:$0xf]
  %v3983 = vld [vmem:[%s3967 + $0x3c] sm:$0xf]
  %v3984 = vld [vmem:[%s3967 + $0x40] sm:$0xf]
  %v3985 = vld [vmem:[%s3967 + $0x44] sm:$0xf]
  %v3986 = vld [vmem:[%s3967 + $0x48] sm:$0xf]
  %v3987 = vld [vmem:[%s3967 + $0x4c] sm:$0xf]
  %v3988 = vld [vmem:[%s3967 + $0x50] sm:$0xf]
  %v3989 = vld [vmem:[%s3967 + $0x54] sm:$0xf]
  %v3990 = vld [vmem:[%s3967 + $0x58] sm:$0xf]
  %v3991 = vld [vmem:[%s3967 + $0x5c] sm:$0xf]
  %v3992 = vld [vmem:[%s3967 + $0x60] sm:$0xf]
  %v3993 = vld [vmem:[%s3967 + $0x64] sm:$0xf]
  %v3994 = vld [vmem:[%s3967 + $0x68] sm:$0xf]
  %v3995 = vld [vmem:[%s3967 + $0x6c] sm:$0xf]
  %v3996 = vld [vmem:[%s3967 + $0x70] sm:$0xf]
  %v3997 = vld [vmem:[%s3967 + $0x74] sm:$0xf]
  %v3998 = vld [vmem:[%s3967 + $0x78] sm:$0xf]
  %v3999 = vld [vmem:[%s3967 + $0x7c] sm:$0xf]
  %v4000 = vld [vmem:[%s3967 + $0x80] sm:$0xf]
  %v4001 = vld [vmem:[%s3967 + $0x84] sm:$0xf]
  %v4002 = vld [vmem:[%s3967 + $0x88] sm:$0xf]
  %v4003 = vld [vmem:[%s3967 + $0x8c] sm:$0xf]
  %v4004 = vld [vmem:[%s3967 + $0x90] sm:$0xf]
  %v4005 = vld [vmem:[%s3967 + $0x94] sm:$0xf]
  %v4006 = vld [vmem:[%s3967 + $0x98] sm:$0xf]
  %v4007 = vld [vmem:[%s3967 + $0x9c] sm:$0xf]
  %v4008 = vld [vmem:[%s3967 + $0xa0] sm:$0xf]
  %v4009 = vld [vmem:[%s3967 + $0xa4] sm:$0xf]
  %v4010 = vld [vmem:[%s3967 + $0xa8] sm:$0xf]
  %v4011 = vld [vmem:[%s3967 + $0xac] sm:$0xf]
  %v4012 = vld [vmem:[%s3967 + $0xb0] sm:$0xf]
  %v4013 = vld [vmem:[%s3967 + $0xb4] sm:$0xf]
  %v4014 = vld [vmem:[%s3967 + $0xb8] sm:$0xf]
  %v4015 = vld [vmem:[%s3967 + $0xbc] sm:$0xf]
  %v4016 = vld [vmem:[%s3967 + $0xc0] sm:$0xf]
  %v4017 = vld [vmem:[%s3967 + $0xc4] sm:$0xf]
  %v4018 = vld [vmem:[%s3967 + $0xc8] sm:$0xf]
  %v4019 = vld [vmem:[%s3967 + $0xcc] sm:$0xf]
  %v4020 = vld [vmem:[%s3967 + $0xd0] sm:$0xf]
  %v4021 = vld [vmem:[%s3967 + $0xd4] sm:$0xf]
  %v4022 = vld [vmem:[%s3967 + $0xd8] sm:$0xf]
  %v4023 = vld [vmem:[%s3967 + $0xdc] sm:$0xf]
  %v4024 = vld [vmem:[%s3967 + $0xe0] sm:$0xf]
  %v4025 = vld [vmem:[%s3967 + $0xe4] sm:$0xf]
  %v4026 = vld [vmem:[%s3967 + $0xe8] sm:$0xf]
  %v4027 = vld [vmem:[%s3967 + $0xec] sm:$0xf]
  %v4028 = vld [vmem:[%s3967 + $0xf0] sm:$0xf]
  %v4029 = vld [vmem:[%s3967 + $0xf4] sm:$0xf]
  %v4030 = vld [vmem:[%s3967 + $0xf8] sm:$0xf]
  %v4031 = vld [vmem:[%s3967 + $0xfc] sm:$0xf]
  %s4032 = scalar_lea.vmem %s1, 12
  %v4033 = vld [vmem:[%s4032] sm:$0x3]
  %v4098 = vunpack.c.l.b16 %v3968
  %v4099 = vunpack.c.l.b16 %v3969
  %v4100 = vunpack.c.l.b16 %v3970
  %v4101 = vunpack.c.l.b16 %v3971
  %v4102 = vunpack.c.l.b16 %v3972
  %v4103 = vunpack.c.l.b16 %v3973
  %v4104 = vunpack.c.l.b16 %v3974
  %v4105 = vunpack.c.l.b16 %v3975
  %v4106 = vunpack.c.l.b16 %v3976
  %v4107 = vunpack.c.l.b16 %v3977
  %v4108 = vunpack.c.l.b16 %v3978
  %v4109 = vunpack.c.l.b16 %v3979
  %v4110 = vunpack.c.l.b16 %v3980
  %v4111 = vunpack.c.l.b16 %v3981
  %v4112 = vunpack.c.l.b16 %v3982
  %v4113 = vunpack.c.l.b16 %v3983
  %v4114 = vunpack.c.l.b16 %v3984
  %v4115 = vunpack.c.l.b16 %v3985
  %v4116 = vunpack.c.l.b16 %v3986
  %v4117 = vunpack.c.l.b16 %v3987
  %v4118 = vunpack.c.l.b16 %v3988
  %v4119 = vunpack.c.l.b16 %v3989
  %v4120 = vunpack.c.l.b16 %v3990
  %v4121 = vunpack.c.l.b16 %v3991
  %v4122 = vunpack.c.l.b16 %v3992
  %v4123 = vunpack.c.l.b16 %v3993
  %v4124 = vunpack.c.l.b16 %v3994
  %v4125 = vunpack.c.l.b16 %v3995
  %v4126 = vunpack.c.l.b16 %v3996
  %v4127 = vunpack.c.l.b16 %v3997
  %v4128 = vunpack.c.l.b16 %v3998
  %v4129 = vunpack.c.l.b16 %v3999
  %v4130 = vunpack.c.l.b16 %v4000
  %v4131 = vunpack.c.l.b16 %v4001
  %v4132 = vunpack.c.l.b16 %v4002
  %v4133 = vunpack.c.l.b16 %v4003
  %v4134 = vunpack.c.l.b16 %v4004
  %v4135 = vunpack.c.l.b16 %v4005
  %v4136 = vunpack.c.l.b16 %v4006
  %v4137 = vunpack.c.l.b16 %v4007
  %v4138 = vunpack.c.l.b16 %v4008
  %v4139 = vunpack.c.l.b16 %v4009
  %v4140 = vunpack.c.l.b16 %v4010
  %v4141 = vunpack.c.l.b16 %v4011
  %v4142 = vunpack.c.l.b16 %v4012
  %v4143 = vunpack.c.l.b16 %v4013
  %v4144 = vunpack.c.l.b16 %v4014
  %v4145 = vunpack.c.l.b16 %v4015
  %v4146 = vunpack.c.l.b16 %v4016
  %v4147 = vunpack.c.l.b16 %v4017
  %v4148 = vunpack.c.l.b16 %v4018
  %v4149 = vunpack.c.l.b16 %v4019
  %v4150 = vunpack.c.l.b16 %v4020
  %v4151 = vunpack.c.l.b16 %v4021
  %v4152 = vunpack.c.l.b16 %v4022
  %v4153 = vunpack.c.l.b16 %v4023
  %v4154 = vunpack.c.l.b16 %v4024
  %v4155 = vunpack.c.l.b16 %v4025
  %v4156 = vunpack.c.l.b16 %v4026
  %v4157 = vunpack.c.l.b16 %v4027
  %v4158 = vunpack.c.l.b16 %v4028
  %v4159 = vunpack.c.l.b16 %v4029
  %v4160 = vunpack.c.l.b16 %v4030
  %v4161 = vunpack.c.l.b16 %v4031
  %v4162 = vpack.c.b16 %v4099, %v4098
  %v4163 = vpack.c.b16 %v4101, %v4100
  %v4164 = vpack.c.b16 %v4103, %v4102
  %v4165 = vpack.c.b16 %v4105, %v4104
  %v4166 = vpack.c.b16 %v4107, %v4106
  %v4167 = vpack.c.b16 %v4109, %v4108
  %v4168 = vpack.c.b16 %v4111, %v4110
  %v4169 = vpack.c.b16 %v4113, %v4112
  %v4170 = vpack.c.b16 %v4115, %v4114
  %v4171 = vpack.c.b16 %v4117, %v4116
  %v4172 = vpack.c.b16 %v4119, %v4118
  %v4173 = vpack.c.b16 %v4121, %v4120
  %v4174 = vpack.c.b16 %v4123, %v4122
  %v4175 = vpack.c.b16 %v4125, %v4124
  %v4176 = vpack.c.b16 %v4127, %v4126
  %v4177 = vpack.c.b16 %v4129, %v4128
  %v4178 = vpack.c.b16 %v4131, %v4130
  %v4179 = vpack.c.b16 %v4133, %v4132
  %v4180 = vpack.c.b16 %v4135, %v4134
  %v4181 = vpack.c.b16 %v4137, %v4136
  %v4182 = vpack.c.b16 %v4139, %v4138
  %v4183 = vpack.c.b16 %v4141, %v4140
  %v4184 = vpack.c.b16 %v4143, %v4142
  %v4185 = vpack.c.b16 %v4145, %v4144
  %v4186 = vpack.c.b16 %v4147, %v4146
  %v4187 = vpack.c.b16 %v4149, %v4148
  %v4188 = vpack.c.b16 %v4151, %v4150
  %v4189 = vpack.c.b16 %v4153, %v4152
  %v4190 = vpack.c.b16 %v4155, %v4154
  %v4191 = vpack.c.b16 %v4157, %v4156
  %v4192 = vpack.c.b16 %v4159, %v4158
  %v4193 = vpack.c.b16 %v4161, %v4160
  %v4195 = vsel %vm310, %v4162, 0
  %v4198 = vsel %vm310, %v4163, 0
  %v4201 = vsel %vm310, %v4164, 0
  %v4204 = vsel %vm310, %v4165, 0
  %v4207 = vsel %vm310, %v4166, 0
  %v4210 = vsel %vm310, %v4167, 0
  %v4213 = vsel %vm310, %v4168, 0
  %v4216 = vsel %vm310, %v4169, 0
  %v4219 = vsel %vm310, %v4170, 0
  %v4222 = vsel %vm310, %v4171, 0
  %v4225 = vsel %vm310, %v4172, 0
  %v4228 = vsel %vm310, %v4173, 0
  %v4231 = vsel %vm310, %v4174, 0
  %v4234 = vsel %vm310, %v4175, 0
  %v4237 = vsel %vm310, %v4176, 0
  %v4240 = vsel %vm310, %v4177, 0
  %v4243 = vsel %vm310, %v4178, 0
  %v4246 = vsel %vm310, %v4179, 0
  %v4249 = vsel %vm310, %v4180, 0
  %v4252 = vsel %vm310, %v4181, 0
  %v4255 = vsel %vm310, %v4182, 0
  %v4258 = vsel %vm310, %v4183, 0
  %v4261 = vsel %vm310, %v4184, 0
  %v4264 = vsel %vm310, %v4185, 0
  %v4267 = vsel %vm310, %v4186, 0
  %v4270 = vsel %vm310, %v4187, 0
  %v4273 = vsel %vm310, %v4188, 0
  %v4276 = vsel %vm310, %v4189, 0
  %v4279 = vsel %vm310, %v4190, 0
  %v4282 = vsel %vm310, %v4191, 0
  %v4285 = vsel %vm310, %v4192, 0
  %v4288 = vsel %vm310, %v4193, 0
  %v4291 = vand.u32 %v4033, %v410
  %4293 = vmatprep.subr.bf16.mxu0 0
  %4294 = vmatpush1.bf16.msra.mxu0 0
  %4295 = vmatprep.subr.bf16.mxu0 0
  %4296 = vmatpush1.bf16.msra.mxu0 0
  %4297 = vmatprep.subr.bf16.mxu0 0
  %4298 = vmatpush1.bf16.msra.mxu0 0
  %4299 = vmatprep.subr.bf16.mxu0 0
  %4300 = vmatpush1.bf16.msra.mxu0 0
  %4301 = vmatprep.subr.bf16.mxu0 0
  %4302 = vmatpush1.bf16.msra.mxu0 0
  %4303 = vmatprep.subr.bf16.mxu0 0
  %4304 = vmatpush1.bf16.msra.mxu0 0
  %4305 = vmatprep.subr.bf16.mxu0 0
  %4306 = vmatpush1.bf16.msra.mxu0 0
  %4307 = vmatprep.subr.bf16.mxu0 0
  %4308 = vmatpush1.bf16.msra.mxu0 %v4291
  %4309 = vmatprep.subr.bf16.mxu0 0
  %4310 = vmatpush2.bf16.msra.mxu0 0
  %4311 = vmatprep.subr.bf16.mxu0 0
  %4312 = vmatpush2.bf16.msra.mxu0 0
  %4313 = vmatprep.subr.bf16.mxu0 0
  %4314 = vmatpush2.bf16.msra.mxu0 0
  %4315 = vmatprep.subr.bf16.mxu0 0
  %4316 = vmatpush2.bf16.msra.mxu0 0
  %4317 = vmatprep.subr.bf16.mxu0 0
  %4318 = vmatpush2.bf16.msra.mxu0 0
  %4319 = vmatprep.subr.bf16.mxu0 0
  %4320 = vmatpush2.bf16.msra.mxu0 0
  %4321 = vmatprep.subr.bf16.mxu0 0
  %4322 = vmatpush2.bf16.msra.mxu0 0
  %4323 = vmatprep.subr.bf16.mxu0 0
  %4324 = vmatpush2.bf16.msra.mxu0 0
  %4325 = vmatprep.mubr.bf16.mxu0 0
  %4326 = vmatmul.mubr.bf16.gmra.mxu0 %v4195
  %v4327 = vpop.f32.mrf.mxu0
  %v4328 = vadd.f32 0.0, %v4327
  %v4329 = vpop.f32.mrf.mxu0
  %v4330 = vpop.f32.mrf.mxu0
  %v4331 = vadd.f32 0.0, %v4330
  %v4332 = vpop.f32.mrf.mxu0
  %4333 = vmatprep.mubr.bf16.mxu0 0
  %4334 = vmatmul.mubr.bf16.gmra.mxu0 %v4198
  %v4335 = vpop.f32.mrf.mxu0
  %v4336 = vadd.f32 0.0, %v4335
  %v4337 = vpop.f32.mrf.mxu0
  %v4338 = vpop.f32.mrf.mxu0
  %v4339 = vadd.f32 0.0, %v4338
  %v4340 = vpop.f32.mrf.mxu0
  %4341 = vmatprep.mubr.bf16.mxu0 0
  %4342 = vmatmul.mubr.bf16.gmra.mxu0 %v4201
  %v4343 = vpop.f32.mrf.mxu0
  %v4344 = vadd.f32 0.0, %v4343
  %v4345 = vpop.f32.mrf.mxu0
  %v4346 = vpop.f32.mrf.mxu0
  %v4347 = vadd.f32 0.0, %v4346
  %v4348 = vpop.f32.mrf.mxu0
  %4349 = vmatprep.mubr.bf16.mxu0 0
  %4350 = vmatmul.mubr.bf16.gmra.mxu0 %v4204
  %v4351 = vpop.f32.mrf.mxu0
  %v4352 = vadd.f32 0.0, %v4351
  %v4353 = vpop.f32.mrf.mxu0
  %v4354 = vpop.f32.mrf.mxu0
  %v4355 = vadd.f32 0.0, %v4354
  %v4356 = vpop.f32.mrf.mxu0
  %4357 = vmatprep.mubr.bf16.mxu0 0
  %4358 = vmatmul.mubr.bf16.gmra.mxu0 %v4207
  %v4359 = vpop.f32.mrf.mxu0
  %v4360 = vadd.f32 0.0, %v4359
  %v4361 = vpop.f32.mrf.mxu0
  %v4362 = vpop.f32.mrf.mxu0
  %v4363 = vadd.f32 0.0, %v4362
  %v4364 = vpop.f32.mrf.mxu0
  %4365 = vmatprep.mubr.bf16.mxu0 0
  %4366 = vmatmul.mubr.bf16.gmra.mxu0 %v4210
  %v4367 = vpop.f32.mrf.mxu0
  %v4368 = vadd.f32 0.0, %v4367
  %v4369 = vpop.f32.mrf.mxu0
  %v4370 = vpop.f32.mrf.mxu0
  %v4371 = vadd.f32 0.0, %v4370
  %v4372 = vpop.f32.mrf.mxu0
  %4373 = vmatprep.mubr.bf16.mxu0 0
  %4374 = vmatmul.mubr.bf16.gmra.mxu0 %v4213
  %v4375 = vpop.f32.mrf.mxu0
  %v4376 = vadd.f32 0.0, %v4375
  %v4377 = vpop.f32.mrf.mxu0
  %v4378 = vpop.f32.mrf.mxu0
  %v4379 = vadd.f32 0.0, %v4378
  %v4380 = vpop.f32.mrf.mxu0
  %4381 = vmatprep.mubr.bf16.mxu0 0
  %4382 = vmatmul.mubr.bf16.gmra.mxu0 %v4216
  %v4383 = vpop.f32.mrf.mxu0
  %v4384 = vadd.f32 0.0, %v4383
  %v4385 = vpop.f32.mrf.mxu0
  %v4386 = vpop.f32.mrf.mxu0
  %v4387 = vadd.f32 0.0, %v4386
  %v4388 = vpop.f32.mrf.mxu0
  %4389 = vmatprep.mubr.bf16.mxu0 0
  %4390 = vmatmul.mubr.bf16.gmra.mxu0 %v4219
  %v4391 = vpop.f32.mrf.mxu0
  %v4392 = vadd.f32 0.0, %v4391
  %v4393 = vpop.f32.mrf.mxu0
  %v4394 = vpop.f32.mrf.mxu0
  %v4395 = vadd.f32 0.0, %v4394
  %v4396 = vpop.f32.mrf.mxu0
  %4397 = vmatprep.mubr.bf16.mxu0 0
  %4398 = vmatmul.mubr.bf16.gmra.mxu0 %v4222
  %v4399 = vpop.f32.mrf.mxu0
  %v4400 = vadd.f32 0.0, %v4399
  %v4401 = vpop.f32.mrf.mxu0
  %v4402 = vpop.f32.mrf.mxu0
  %v4403 = vadd.f32 0.0, %v4402
  %v4404 = vpop.f32.mrf.mxu0
  %4405 = vmatprep.mubr.bf16.mxu0 0
  %4406 = vmatmul.mubr.bf16.gmra.mxu0 %v4225
  %v4407 = vpop.f32.mrf.mxu0
  %v4408 = vadd.f32 0.0, %v4407
  %v4409 = vpop.f32.mrf.mxu0
  %v4410 = vpop.f32.mrf.mxu0
  %v4411 = vadd.f32 0.0, %v4410
  %v4412 = vpop.f32.mrf.mxu0
  %4413 = vmatprep.mubr.bf16.mxu0 0
  %4414 = vmatmul.mubr.bf16.gmra.mxu0 %v4228
  %v4415 = vpop.f32.mrf.mxu0
  %v4416 = vadd.f32 0.0, %v4415
  %v4417 = vpop.f32.mrf.mxu0
  %v4418 = vpop.f32.mrf.mxu0
  %v4419 = vadd.f32 0.0, %v4418
  %v4420 = vpop.f32.mrf.mxu0
  %4421 = vmatprep.mubr.bf16.mxu0 0
  %4422 = vmatmul.mubr.bf16.gmra.mxu0 %v4231
  %v4423 = vpop.f32.mrf.mxu0
  %v4424 = vadd.f32 0.0, %v4423
  %v4425 = vpop.f32.mrf.mxu0
  %v4426 = vpop.f32.mrf.mxu0
  %v4427 = vadd.f32 0.0, %v4426
  %v4428 = vpop.f32.mrf.mxu0
  %4429 = vmatprep.mubr.bf16.mxu0 0
  %4430 = vmatmul.mubr.bf16.gmra.mxu0 %v4234
  %v4431 = vpop.f32.mrf.mxu0
  %v4432 = vadd.f32 0.0, %v4431
  %v4433 = vpop.f32.mrf.mxu0
  %v4434 = vpop.f32.mrf.mxu0
  %v4435 = vadd.f32 0.0, %v4434
  %v4436 = vpop.f32.mrf.mxu0
  %4437 = vmatprep.mubr.bf16.mxu0 0
  %4438 = vmatmul.mubr.bf16.gmra.mxu0 %v4237
  %v4439 = vpop.f32.mrf.mxu0
  %v4440 = vadd.f32 0.0, %v4439
  %v4441 = vpop.f32.mrf.mxu0
  %v4442 = vpop.f32.mrf.mxu0
  %v4443 = vadd.f32 0.0, %v4442
  %v4444 = vpop.f32.mrf.mxu0
  %4445 = vmatprep.mubr.bf16.mxu0 0
  %4446 = vmatmul.mubr.bf16.gmra.mxu0 %v4240
  %v4447 = vpop.f32.mrf.mxu0
  %v4448 = vadd.f32 0.0, %v4447
  %v4449 = vpop.f32.mrf.mxu0
  %v4450 = vpop.f32.mrf.mxu0
  %v4451 = vadd.f32 0.0, %v4450
  %v4452 = vpop.f32.mrf.mxu0
  %4453 = vmatprep.mubr.bf16.mxu0 0
  %4454 = vmatmul.mubr.bf16.gmra.mxu0 %v4243
  %v4455 = vpop.f32.mrf.mxu0
  %v4456 = vadd.f32 0.0, %v4455
  %v4457 = vpop.f32.mrf.mxu0
  %v4458 = vpop.f32.mrf.mxu0
  %v4459 = vadd.f32 0.0, %v4458
  %v4460 = vpop.f32.mrf.mxu0
  %4461 = vmatprep.mubr.bf16.mxu0 0
  %4462 = vmatmul.mubr.bf16.gmra.mxu0 %v4246
  %v4463 = vpop.f32.mrf.mxu0
  %v4464 = vadd.f32 0.0, %v4463
  %v4465 = vpop.f32.mrf.mxu0
  %v4466 = vpop.f32.mrf.mxu0
  %v4467 = vadd.f32 0.0, %v4466
  %v4468 = vpop.f32.mrf.mxu0
  %4469 = vmatprep.mubr.bf16.mxu0 0
  %4470 = vmatmul.mubr.bf16.gmra.mxu0 %v4249
  %v4471 = vpop.f32.mrf.mxu0
  %v4472 = vadd.f32 0.0, %v4471
  %v4473 = vpop.f32.mrf.mxu0
  %v4474 = vpop.f32.mrf.mxu0
  %v4475 = vadd.f32 0.0, %v4474
  %v4476 = vpop.f32.mrf.mxu0
  %4477 = vmatprep.mubr.bf16.mxu0 0
  %4478 = vmatmul.mubr.bf16.gmra.mxu0 %v4252
  %v4479 = vpop.f32.mrf.mxu0
  %v4480 = vadd.f32 0.0, %v4479
  %v4481 = vpop.f32.mrf.mxu0
  %v4482 = vpop.f32.mrf.mxu0
  %v4483 = vadd.f32 0.0, %v4482
  %v4484 = vpop.f32.mrf.mxu0
  %4485 = vmatprep.mubr.bf16.mxu0 0
  %4486 = vmatmul.mubr.bf16.gmra.mxu0 %v4255
  %v4487 = vpop.f32.mrf.mxu0
  %v4488 = vadd.f32 0.0, %v4487
  %v4489 = vpop.f32.mrf.mxu0
  %v4490 = vpop.f32.mrf.mxu0
  %v4491 = vadd.f32 0.0, %v4490
  %v4492 = vpop.f32.mrf.mxu0
  %4493 = vmatprep.mubr.bf16.mxu0 0
  %4494 = vmatmul.mubr.bf16.gmra.mxu0 %v4258
  %v4495 = vpop.f32.mrf.mxu0
  %v4496 = vadd.f32 0.0, %v4495
  %v4497 = vpop.f32.mrf.mxu0
  %v4498 = vpop.f32.mrf.mxu0
  %v4499 = vadd.f32 0.0, %v4498
  %v4500 = vpop.f32.mrf.mxu0
  %4501 = vmatprep.mubr.bf16.mxu0 0
  %4502 = vmatmul.mubr.bf16.gmra.mxu0 %v4261
  %v4503 = vpop.f32.mrf.mxu0
  %v4504 = vadd.f32 0.0, %v4503
  %v4505 = vpop.f32.mrf.mxu0
  %v4506 = vpop.f32.mrf.mxu0
  %v4507 = vadd.f32 0.0, %v4506
  %v4508 = vpop.f32.mrf.mxu0
  %4509 = vmatprep.mubr.bf16.mxu0 0
  %4510 = vmatmul.mubr.bf16.gmra.mxu0 %v4264
  %v4511 = vpop.f32.mrf.mxu0
  %v4512 = vadd.f32 0.0, %v4511
  %v4513 = vpop.f32.mrf.mxu0
  %v4514 = vpop.f32.mrf.mxu0
  %v4515 = vadd.f32 0.0, %v4514
  %v4516 = vpop.f32.mrf.mxu0
  %4517 = vmatprep.mubr.bf16.mxu0 0
  %4518 = vmatmul.mubr.bf16.gmra.mxu0 %v4267
  %v4519 = vpop.f32.mrf.mxu0
  %v4520 = vadd.f32 0.0, %v4519
  %v4521 = vpop.f32.mrf.mxu0
  %v4522 = vpop.f32.mrf.mxu0
  %v4523 = vadd.f32 0.0, %v4522
  %v4524 = vpop.f32.mrf.mxu0
  %4525 = vmatprep.mubr.bf16.mxu0 0
  %4526 = vmatmul.mubr.bf16.gmra.mxu0 %v4270
  %v4527 = vpop.f32.mrf.mxu0
  %v4528 = vadd.f32 0.0, %v4527
  %v4529 = vpop.f32.mrf.mxu0
  %v4530 = vpop.f32.mrf.mxu0
  %v4531 = vadd.f32 0.0, %v4530
  %v4532 = vpop.f32.mrf.mxu0
  %4533 = vmatprep.mubr.bf16.mxu0 0
  %4534 = vmatmul.mubr.bf16.gmra.mxu0 %v4273
  %v4535 = vpop.f32.mrf.mxu0
  %v4536 = vadd.f32 0.0, %v4535
  %v4537 = vpop.f32.mrf.mxu0
  %v4538 = vpop.f32.mrf.mxu0
  %v4539 = vadd.f32 0.0, %v4538
  %v4540 = vpop.f32.mrf.mxu0
  %4541 = vmatprep.mubr.bf16.mxu0 0
  %4542 = vmatmul.mubr.bf16.gmra.mxu0 %v4276
  %v4543 = vpop.f32.mrf.mxu0
  %v4544 = vadd.f32 0.0, %v4543
  %v4545 = vpop.f32.mrf.mxu0
  %v4546 = vpop.f32.mrf.mxu0
  %v4547 = vadd.f32 0.0, %v4546
  %v4548 = vpop.f32.mrf.mxu0
  %4549 = vmatprep.mubr.bf16.mxu0 0
  %4550 = vmatmul.mubr.bf16.gmra.mxu0 %v4279
  %v4551 = vpop.f32.mrf.mxu0
  %v4552 = vadd.f32 0.0, %v4551
  %v4553 = vpop.f32.mrf.mxu0
  %v4554 = vpop.f32.mrf.mxu0
  %v4555 = vadd.f32 0.0, %v4554
  %v4556 = vpop.f32.mrf.mxu0
  %4557 = vmatprep.mubr.bf16.mxu0 0
  %4558 = vmatmul.mubr.bf16.gmra.mxu0 %v4282
  %v4559 = vpop.f32.mrf.mxu0
  %v4560 = vadd.f32 0.0, %v4559
  %v4561 = vpop.f32.mrf.mxu0
  %v4562 = vpop.f32.mrf.mxu0
  %v4563 = vadd.f32 0.0, %v4562
  %v4564 = vpop.f32.mrf.mxu0
  %4565 = vmatprep.mubr.bf16.mxu0 0
  %4566 = vmatmul.mubr.bf16.gmra.mxu0 %v4285
  %v4567 = vpop.f32.mrf.mxu0
  %v4568 = vadd.f32 0.0, %v4567
  %v4569 = vpop.f32.mrf.mxu0
  %v4570 = vpop.f32.mrf.mxu0
  %v4571 = vadd.f32 0.0, %v4570
  %v4572 = vpop.f32.mrf.mxu0
  %4573 = vmatprep.mubr.bf16.mxu0 0
  %4574 = vmatmul.mubr.bf16.gmra.mxu0 %v4288
  %v4575 = vpop.f32.mrf.mxu0
  %v4576 = vadd.f32 0.0, %v4575
  %v4577 = vpop.f32.mrf.mxu0
  %v4578 = vpop.f32.mrf.mxu0
  %v4579 = vadd.f32 0.0, %v4578
  %v4580 = vpop.f32.mrf.mxu0
  %4581 = vdwg.mxu0
  %v4582 = vadd.f32 %v3903, %v4328
  %v4583 = vadd.f32 %v3904, %v4331
  %v4584 = vadd.f32 %v3905, %v4336
  %v4585 = vadd.f32 %v3906, %v4339
  %v4586 = vadd.f32 %v3907, %v4344
  %v4587 = vadd.f32 %v3908, %v4347
  %v4588 = vadd.f32 %v3909, %v4352
  %v4589 = vadd.f32 %v3910, %v4355
  %v4590 = vadd.f32 %v3911, %v4360
  %v4591 = vadd.f32 %v3912, %v4363
  %v4592 = vadd.f32 %v3913, %v4368
  %v4593 = vadd.f32 %v3914, %v4371
  %v4594 = vadd.f32 %v3915, %v4376
  %v4595 = vadd.f32 %v3916, %v4379
  %v4596 = vadd.f32 %v3917, %v4384
  %v4597 = vadd.f32 %v3918, %v4387
  %v4598 = vadd.f32 %v3919, %v4392
  %v4599 = vadd.f32 %v3920, %v4395
  %v4600 = vadd.f32 %v3921, %v4400
  %v4601 = vadd.f32 %v3922, %v4403
  %v4602 = vadd.f32 %v3923, %v4408
  %v4603 = vadd.f32 %v3924, %v4411
  %v4604 = vadd.f32 %v3925, %v4416
  %v4605 = vadd.f32 %v3926, %v4419
  %v4606 = vadd.f32 %v3927, %v4424
  %v4607 = vadd.f32 %v3928, %v4427
  %v4608 = vadd.f32 %v3929, %v4432
  %v4609 = vadd.f32 %v3930, %v4435
  %v4610 = vadd.f32 %v3931, %v4440
  %v4611 = vadd.f32 %v3932, %v4443
  %v4612 = vadd.f32 %v3933, %v4448
  %v4613 = vadd.f32 %v3934, %v4451
  %v4614 = vadd.f32 %v3935, %v4456
  %v4615 = vadd.f32 %v3936, %v4459
  %v4616 = vadd.f32 %v3937, %v4464
  %v4617 = vadd.f32 %v3938, %v4467
  %v4618 = vadd.f32 %v3939, %v4472
  %v4619 = vadd.f32 %v3940, %v4475
  %v4620 = vadd.f32 %v3941, %v4480
  %v4621 = vadd.f32 %v3942, %v4483
  %v4622 = vadd.f32 %v3943, %v4488
  %v4623 = vadd.f32 %v3944, %v4491
  %v4624 = vadd.f32 %v3945, %v4496
  %v4625 = vadd.f32 %v3946, %v4499
  %v4626 = vadd.f32 %v3947, %v4504
  %v4627 = vadd.f32 %v3948, %v4507
  %v4628 = vadd.f32 %v3949, %v4512
  %v4629 = vadd.f32 %v3950, %v4515
  %v4630 = vadd.f32 %v3951, %v4520
  %v4631 = vadd.f32 %v3952, %v4523
  %v4632 = vadd.f32 %v3953, %v4528
  %v4633 = vadd.f32 %v3954, %v4531
  %v4634 = vadd.f32 %v3955, %v4536
  %v4635 = vadd.f32 %v3956, %v4539
  %v4636 = vadd.f32 %v3957, %v4544
  %v4637 = vadd.f32 %v3958, %v4547
  %v4638 = vadd.f32 %v3959, %v4552
  %v4639 = vadd.f32 %v3960, %v4555
  %v4640 = vadd.f32 %v3961, %v4560
  %v4641 = vadd.f32 %v3962, %v4563
  %v4642 = vadd.f32 %v3963, %v4568
  %v4643 = vadd.f32 %v3964, %v4571
  %v4644 = vadd.f32 %v3965, %v4576
  %v4645 = vadd.f32 %v3966, %v4579
  %s4646 = scalar_lea.vmem %s0, 1792
  %v4647 = vld [vmem:[%s4646] sm:$0xf]
  %v4648 = vld [vmem:[%s4646 + $0x4] sm:$0xf]
  %v4649 = vld [vmem:[%s4646 + $0x8] sm:$0xf]
  %v4650 = vld [vmem:[%s4646 + $0xc] sm:$0xf]
  %v4651 = vld [vmem:[%s4646 + $0x10] sm:$0xf]
  %v4652 = vld [vmem:[%s4646 + $0x14] sm:$0xf]
  %v4653 = vld [vmem:[%s4646 + $0x18] sm:$0xf]
  %v4654 = vld [vmem:[%s4646 + $0x1c] sm:$0xf]
  %v4655 = vld [vmem:[%s4646 + $0x20] sm:$0xf]
  %v4656 = vld [vmem:[%s4646 + $0x24] sm:$0xf]
  %v4657 = vld [vmem:[%s4646 + $0x28] sm:$0xf]
  %v4658 = vld [vmem:[%s4646 + $0x2c] sm:$0xf]
  %v4659 = vld [vmem:[%s4646 + $0x30] sm:$0xf]
  %v4660 = vld [vmem:[%s4646 + $0x34] sm:$0xf]
  %v4661 = vld [vmem:[%s4646 + $0x38] sm:$0xf]
  %v4662 = vld [vmem:[%s4646 + $0x3c] sm:$0xf]
  %v4663 = vld [vmem:[%s4646 + $0x40] sm:$0xf]
  %v4664 = vld [vmem:[%s4646 + $0x44] sm:$0xf]
  %v4665 = vld [vmem:[%s4646 + $0x48] sm:$0xf]
  %v4666 = vld [vmem:[%s4646 + $0x4c] sm:$0xf]
  %v4667 = vld [vmem:[%s4646 + $0x50] sm:$0xf]
  %v4668 = vld [vmem:[%s4646 + $0x54] sm:$0xf]
  %v4669 = vld [vmem:[%s4646 + $0x58] sm:$0xf]
  %v4670 = vld [vmem:[%s4646 + $0x5c] sm:$0xf]
  %v4671 = vld [vmem:[%s4646 + $0x60] sm:$0xf]
  %v4672 = vld [vmem:[%s4646 + $0x64] sm:$0xf]
  %v4673 = vld [vmem:[%s4646 + $0x68] sm:$0xf]
  %v4674 = vld [vmem:[%s4646 + $0x6c] sm:$0xf]
  %v4675 = vld [vmem:[%s4646 + $0x70] sm:$0xf]
  %v4676 = vld [vmem:[%s4646 + $0x74] sm:$0xf]
  %v4677 = vld [vmem:[%s4646 + $0x78] sm:$0xf]
  %v4678 = vld [vmem:[%s4646 + $0x7c] sm:$0xf]
  %v4679 = vld [vmem:[%s4646 + $0x80] sm:$0xf]
  %v4680 = vld [vmem:[%s4646 + $0x84] sm:$0xf]
  %v4681 = vld [vmem:[%s4646 + $0x88] sm:$0xf]
  %v4682 = vld [vmem:[%s4646 + $0x8c] sm:$0xf]
  %v4683 = vld [vmem:[%s4646 + $0x90] sm:$0xf]
  %v4684 = vld [vmem:[%s4646 + $0x94] sm:$0xf]
  %v4685 = vld [vmem:[%s4646 + $0x98] sm:$0xf]
  %v4686 = vld [vmem:[%s4646 + $0x9c] sm:$0xf]
  %v4687 = vld [vmem:[%s4646 + $0xa0] sm:$0xf]
  %v4688 = vld [vmem:[%s4646 + $0xa4] sm:$0xf]
  %v4689 = vld [vmem:[%s4646 + $0xa8] sm:$0xf]
  %v4690 = vld [vmem:[%s4646 + $0xac] sm:$0xf]
  %v4691 = vld [vmem:[%s4646 + $0xb0] sm:$0xf]
  %v4692 = vld [vmem:[%s4646 + $0xb4] sm:$0xf]
  %v4693 = vld [vmem:[%s4646 + $0xb8] sm:$0xf]
  %v4694 = vld [vmem:[%s4646 + $0xbc] sm:$0xf]
  %v4695 = vld [vmem:[%s4646 + $0xc0] sm:$0xf]
  %v4696 = vld [vmem:[%s4646 + $0xc4] sm:$0xf]
  %v4697 = vld [vmem:[%s4646 + $0xc8] sm:$0xf]
  %v4698 = vld [vmem:[%s4646 + $0xcc] sm:$0xf]
  %v4699 = vld [vmem:[%s4646 + $0xd0] sm:$0xf]
  %v4700 = vld [vmem:[%s4646 + $0xd4] sm:$0xf]
  %v4701 = vld [vmem:[%s4646 + $0xd8] sm:$0xf]
  %v4702 = vld [vmem:[%s4646 + $0xdc] sm:$0xf]
  %v4703 = vld [vmem:[%s4646 + $0xe0] sm:$0xf]
  %v4704 = vld [vmem:[%s4646 + $0xe4] sm:$0xf]
  %v4705 = vld [vmem:[%s4646 + $0xe8] sm:$0xf]
  %v4706 = vld [vmem:[%s4646 + $0xec] sm:$0xf]
  %v4707 = vld [vmem:[%s4646 + $0xf0] sm:$0xf]
  %v4708 = vld [vmem:[%s4646 + $0xf4] sm:$0xf]
  %v4709 = vld [vmem:[%s4646 + $0xf8] sm:$0xf]
  %v4710 = vld [vmem:[%s4646 + $0xfc] sm:$0xf]
  %s4711 = scalar_lea.vmem %s1, 14
  %v4712 = vld [vmem:[%s4711] sm:$0x3]
  %v4777 = vunpack.c.l.b16 %v4647
  %v4778 = vunpack.c.l.b16 %v4648
  %v4779 = vunpack.c.l.b16 %v4649
  %v4780 = vunpack.c.l.b16 %v4650
  %v4781 = vunpack.c.l.b16 %v4651
  %v4782 = vunpack.c.l.b16 %v4652
  %v4783 = vunpack.c.l.b16 %v4653
  %v4784 = vunpack.c.l.b16 %v4654
  %v4785 = vunpack.c.l.b16 %v4655
  %v4786 = vunpack.c.l.b16 %v4656
  %v4787 = vunpack.c.l.b16 %v4657
  %v4788 = vunpack.c.l.b16 %v4658
  %v4789 = vunpack.c.l.b16 %v4659
  %v4790 = vunpack.c.l.b16 %v4660
  %v4791 = vunpack.c.l.b16 %v4661
  %v4792 = vunpack.c.l.b16 %v4662
  %v4793 = vunpack.c.l.b16 %v4663
  %v4794 = vunpack.c.l.b16 %v4664
  %v4795 = vunpack.c.l.b16 %v4665
  %v4796 = vunpack.c.l.b16 %v4666
  %v4797 = vunpack.c.l.b16 %v4667
  %v4798 = vunpack.c.l.b16 %v4668
  %v4799 = vunpack.c.l.b16 %v4669
  %v4800 = vunpack.c.l.b16 %v4670
  %v4801 = vunpack.c.l.b16 %v4671
  %v4802 = vunpack.c.l.b16 %v4672
  %v4803 = vunpack.c.l.b16 %v4673
  %v4804 = vunpack.c.l.b16 %v4674
  %v4805 = vunpack.c.l.b16 %v4675
  %v4806 = vunpack.c.l.b16 %v4676
  %v4807 = vunpack.c.l.b16 %v4677
  %v4808 = vunpack.c.l.b16 %v4678
  %v4809 = vunpack.c.l.b16 %v4679
  %v4810 = vunpack.c.l.b16 %v4680
  %v4811 = vunpack.c.l.b16 %v4681
  %v4812 = vunpack.c.l.b16 %v4682
  %v4813 = vunpack.c.l.b16 %v4683
  %v4814 = vunpack.c.l.b16 %v4684
  %v4815 = vunpack.c.l.b16 %v4685
  %v4816 = vunpack.c.l.b16 %v4686
  %v4817 = vunpack.c.l.b16 %v4687
  %v4818 = vunpack.c.l.b16 %v4688
  %v4819 = vunpack.c.l.b16 %v4689
  %v4820 = vunpack.c.l.b16 %v4690
  %v4821 = vunpack.c.l.b16 %v4691
  %v4822 = vunpack.c.l.b16 %v4692
  %v4823 = vunpack.c.l.b16 %v4693
  %v4824 = vunpack.c.l.b16 %v4694
  %v4825 = vunpack.c.l.b16 %v4695
  %v4826 = vunpack.c.l.b16 %v4696
  %v4827 = vunpack.c.l.b16 %v4697
  %v4828 = vunpack.c.l.b16 %v4698
  %v4829 = vunpack.c.l.b16 %v4699
  %v4830 = vunpack.c.l.b16 %v4700
  %v4831 = vunpack.c.l.b16 %v4701
  %v4832 = vunpack.c.l.b16 %v4702
  %v4833 = vunpack.c.l.b16 %v4703
  %v4834 = vunpack.c.l.b16 %v4704
  %v4835 = vunpack.c.l.b16 %v4705
  %v4836 = vunpack.c.l.b16 %v4706
  %v4837 = vunpack.c.l.b16 %v4707
  %v4838 = vunpack.c.l.b16 %v4708
  %v4839 = vunpack.c.l.b16 %v4709
  %v4840 = vunpack.c.l.b16 %v4710
  %v4841 = vpack.c.b16 %v4778, %v4777
  %v4842 = vpack.c.b16 %v4780, %v4779
  %v4843 = vpack.c.b16 %v4782, %v4781
  %v4844 = vpack.c.b16 %v4784, %v4783
  %v4845 = vpack.c.b16 %v4786, %v4785
  %v4846 = vpack.c.b16 %v4788, %v4787
  %v4847 = vpack.c.b16 %v4790, %v4789
  %v4848 = vpack.c.b16 %v4792, %v4791
  %v4849 = vpack.c.b16 %v4794, %v4793
  %v4850 = vpack.c.b16 %v4796, %v4795
  %v4851 = vpack.c.b16 %v4798, %v4797
  %v4852 = vpack.c.b16 %v4800, %v4799
  %v4853 = vpack.c.b16 %v4802, %v4801
  %v4854 = vpack.c.b16 %v4804, %v4803
  %v4855 = vpack.c.b16 %v4806, %v4805
  %v4856 = vpack.c.b16 %v4808, %v4807
  %v4857 = vpack.c.b16 %v4810, %v4809
  %v4858 = vpack.c.b16 %v4812, %v4811
  %v4859 = vpack.c.b16 %v4814, %v4813
  %v4860 = vpack.c.b16 %v4816, %v4815
  %v4861 = vpack.c.b16 %v4818, %v4817
  %v4862 = vpack.c.b16 %v4820, %v4819
  %v4863 = vpack.c.b16 %v4822, %v4821
  %v4864 = vpack.c.b16 %v4824, %v4823
  %v4865 = vpack.c.b16 %v4826, %v4825
  %v4866 = vpack.c.b16 %v4828, %v4827
  %v4867 = vpack.c.b16 %v4830, %v4829
  %v4868 = vpack.c.b16 %v4832, %v4831
  %v4869 = vpack.c.b16 %v4834, %v4833
  %v4870 = vpack.c.b16 %v4836, %v4835
  %v4871 = vpack.c.b16 %v4838, %v4837
  %v4872 = vpack.c.b16 %v4840, %v4839
  %v4874 = vsel %vm310, %v4841, 0
  %v4877 = vsel %vm310, %v4842, 0
  %v4880 = vsel %vm310, %v4843, 0
  %v4883 = vsel %vm310, %v4844, 0
  %v4886 = vsel %vm310, %v4845, 0
  %v4889 = vsel %vm310, %v4846, 0
  %v4892 = vsel %vm310, %v4847, 0
  %v4895 = vsel %vm310, %v4848, 0
  %v4898 = vsel %vm310, %v4849, 0
  %v4901 = vsel %vm310, %v4850, 0
  %v4904 = vsel %vm310, %v4851, 0
  %v4907 = vsel %vm310, %v4852, 0
  %v4910 = vsel %vm310, %v4853, 0
  %v4913 = vsel %vm310, %v4854, 0
  %v4916 = vsel %vm310, %v4855, 0
  %v4919 = vsel %vm310, %v4856, 0
  %v4922 = vsel %vm310, %v4857, 0
  %v4925 = vsel %vm310, %v4858, 0
  %v4928 = vsel %vm310, %v4859, 0
  %v4931 = vsel %vm310, %v4860, 0
  %v4934 = vsel %vm310, %v4861, 0
  %v4937 = vsel %vm310, %v4862, 0
  %v4940 = vsel %vm310, %v4863, 0
  %v4943 = vsel %vm310, %v4864, 0
  %v4946 = vsel %vm310, %v4865, 0
  %v4949 = vsel %vm310, %v4866, 0
  %v4952 = vsel %vm310, %v4867, 0
  %v4955 = vsel %vm310, %v4868, 0
  %v4958 = vsel %vm310, %v4869, 0
  %v4961 = vsel %vm310, %v4870, 0
  %v4964 = vsel %vm310, %v4871, 0
  %v4967 = vsel %vm310, %v4872, 0
  %v4970 = vand.u32 %v4712, %v410
  %4972 = vmatprep.subr.bf16.mxu0 0
  %4973 = vmatpush1.bf16.msra.mxu0 0
  %4974 = vmatprep.subr.bf16.mxu0 0
  %4975 = vmatpush1.bf16.msra.mxu0 0
  %4976 = vmatprep.subr.bf16.mxu0 0
  %4977 = vmatpush1.bf16.msra.mxu0 0
  %4978 = vmatprep.subr.bf16.mxu0 0
  %4979 = vmatpush1.bf16.msra.mxu0 0
  %4980 = vmatprep.subr.bf16.mxu0 0
  %4981 = vmatpush1.bf16.msra.mxu0 0
  %4982 = vmatprep.subr.bf16.mxu0 0
  %4983 = vmatpush1.bf16.msra.mxu0 0
  %4984 = vmatprep.subr.bf16.mxu0 0
  %4985 = vmatpush1.bf16.msra.mxu0 0
  %4986 = vmatprep.subr.bf16.mxu0 0
  %4987 = vmatpush1.bf16.msra.mxu0 %v4970
  %4988 = vmatprep.subr.bf16.mxu0 0
  %4989 = vmatpush2.bf16.msra.mxu0 0
  %4990 = vmatprep.subr.bf16.mxu0 0
  %4991 = vmatpush2.bf16.msra.mxu0 0
  %4992 = vmatprep.subr.bf16.mxu0 0
  %4993 = vmatpush2.bf16.msra.mxu0 0
  %4994 = vmatprep.subr.bf16.mxu0 0
  %4995 = vmatpush2.bf16.msra.mxu0 0
  %4996 = vmatprep.subr.bf16.mxu0 0
  %4997 = vmatpush2.bf16.msra.mxu0 0
  %4998 = vmatprep.subr.bf16.mxu0 0
  %4999 = vmatpush2.bf16.msra.mxu0 0
  %5000 = vmatprep.subr.bf16.mxu0 0
  %5001 = vmatpush2.bf16.msra.mxu0 0
  %5002 = vmatprep.subr.bf16.mxu0 0
  %5003 = vmatpush2.bf16.msra.mxu0 0
  %5004 = vmatprep.mubr.bf16.mxu0 0
  %5005 = vmatmul.mubr.bf16.gmra.mxu0 %v4874
  %v5006 = vpop.f32.mrf.mxu0
  %v5007 = vadd.f32 0.0, %v5006
  %v5008 = vpop.f32.mrf.mxu0
  %v5009 = vpop.f32.mrf.mxu0
  %v5010 = vadd.f32 0.0, %v5009
  %v5011 = vpop.f32.mrf.mxu0
  %5012 = vmatprep.mubr.bf16.mxu0 0
  %5013 = vmatmul.mubr.bf16.gmra.mxu0 %v4877
  %v5014 = vpop.f32.mrf.mxu0
  %v5015 = vadd.f32 0.0, %v5014
  %v5016 = vpop.f32.mrf.mxu0
  %v5017 = vpop.f32.mrf.mxu0
  %v5018 = vadd.f32 0.0, %v5017
  %v5019 = vpop.f32.mrf.mxu0
  %5020 = vmatprep.mubr.bf16.mxu0 0
  %5021 = vmatmul.mubr.bf16.gmra.mxu0 %v4880
  %v5022 = vpop.f32.mrf.mxu0
  %v5023 = vadd.f32 0.0, %v5022
  %v5024 = vpop.f32.mrf.mxu0
  %v5025 = vpop.f32.mrf.mxu0
  %v5026 = vadd.f32 0.0, %v5025
  %v5027 = vpop.f32.mrf.mxu0
  %5028 = vmatprep.mubr.bf16.mxu0 0
  %5029 = vmatmul.mubr.bf16.gmra.mxu0 %v4883
  %v5030 = vpop.f32.mrf.mxu0
  %v5031 = vadd.f32 0.0, %v5030
  %v5032 = vpop.f32.mrf.mxu0
  %v5033 = vpop.f32.mrf.mxu0
  %v5034 = vadd.f32 0.0, %v5033
  %v5035 = vpop.f32.mrf.mxu0
  %5036 = vmatprep.mubr.bf16.mxu0 0
  %5037 = vmatmul.mubr.bf16.gmra.mxu0 %v4886
  %v5038 = vpop.f32.mrf.mxu0
  %v5039 = vadd.f32 0.0, %v5038
  %v5040 = vpop.f32.mrf.mxu0
  %v5041 = vpop.f32.mrf.mxu0
  %v5042 = vadd.f32 0.0, %v5041
  %v5043 = vpop.f32.mrf.mxu0
  %5044 = vmatprep.mubr.bf16.mxu0 0
  %5045 = vmatmul.mubr.bf16.gmra.mxu0 %v4889
  %v5046 = vpop.f32.mrf.mxu0
  %v5047 = vadd.f32 0.0, %v5046
  %v5048 = vpop.f32.mrf.mxu0
  %v5049 = vpop.f32.mrf.mxu0
  %v5050 = vadd.f32 0.0, %v5049
  %v5051 = vpop.f32.mrf.mxu0
  %5052 = vmatprep.mubr.bf16.mxu0 0
  %5053 = vmatmul.mubr.bf16.gmra.mxu0 %v4892
  %v5054 = vpop.f32.mrf.mxu0
  %v5055 = vadd.f32 0.0, %v5054
  %v5056 = vpop.f32.mrf.mxu0
  %v5057 = vpop.f32.mrf.mxu0
  %v5058 = vadd.f32 0.0, %v5057
  %v5059 = vpop.f32.mrf.mxu0
  %5060 = vmatprep.mubr.bf16.mxu0 0
  %5061 = vmatmul.mubr.bf16.gmra.mxu0 %v4895
  %v5062 = vpop.f32.mrf.mxu0
  %v5063 = vadd.f32 0.0, %v5062
  %v5064 = vpop.f32.mrf.mxu0
  %v5065 = vpop.f32.mrf.mxu0
  %v5066 = vadd.f32 0.0, %v5065
  %v5067 = vpop.f32.mrf.mxu0
  %5068 = vmatprep.mubr.bf16.mxu0 0
  %5069 = vmatmul.mubr.bf16.gmra.mxu0 %v4898
  %v5070 = vpop.f32.mrf.mxu0
  %v5071 = vadd.f32 0.0, %v5070
  %v5072 = vpop.f32.mrf.mxu0
  %v5073 = vpop.f32.mrf.mxu0
  %v5074 = vadd.f32 0.0, %v5073
  %v5075 = vpop.f32.mrf.mxu0
  %5076 = vmatprep.mubr.bf16.mxu0 0
  %5077 = vmatmul.mubr.bf16.gmra.mxu0 %v4901
  %v5078 = vpop.f32.mrf.mxu0
  %v5079 = vadd.f32 0.0, %v5078
  %v5080 = vpop.f32.mrf.mxu0
  %v5081 = vpop.f32.mrf.mxu0
  %v5082 = vadd.f32 0.0, %v5081
  %v5083 = vpop.f32.mrf.mxu0
  %5084 = vmatprep.mubr.bf16.mxu0 0
  %5085 = vmatmul.mubr.bf16.gmra.mxu0 %v4904
  %v5086 = vpop.f32.mrf.mxu0
  %v5087 = vadd.f32 0.0, %v5086
  %v5088 = vpop.f32.mrf.mxu0
  %v5089 = vpop.f32.mrf.mxu0
  %v5090 = vadd.f32 0.0, %v5089
  %v5091 = vpop.f32.mrf.mxu0
  %5092 = vmatprep.mubr.bf16.mxu0 0
  %5093 = vmatmul.mubr.bf16.gmra.mxu0 %v4907
  %v5094 = vpop.f32.mrf.mxu0
  %v5095 = vadd.f32 0.0, %v5094
  %v5096 = vpop.f32.mrf.mxu0
  %v5097 = vpop.f32.mrf.mxu0
  %v5098 = vadd.f32 0.0, %v5097
  %v5099 = vpop.f32.mrf.mxu0
  %5100 = vmatprep.mubr.bf16.mxu0 0
  %5101 = vmatmul.mubr.bf16.gmra.mxu0 %v4910
  %v5102 = vpop.f32.mrf.mxu0
  %v5103 = vadd.f32 0.0, %v5102
  %v5104 = vpop.f32.mrf.mxu0
  %v5105 = vpop.f32.mrf.mxu0
  %v5106 = vadd.f32 0.0, %v5105
  %v5107 = vpop.f32.mrf.mxu0
  %5108 = vmatprep.mubr.bf16.mxu0 0
  %5109 = vmatmul.mubr.bf16.gmra.mxu0 %v4913
  %v5110 = vpop.f32.mrf.mxu0
  %v5111 = vadd.f32 0.0, %v5110
  %v5112 = vpop.f32.mrf.mxu0
  %v5113 = vpop.f32.mrf.mxu0
  %v5114 = vadd.f32 0.0, %v5113
  %v5115 = vpop.f32.mrf.mxu0
  %5116 = vmatprep.mubr.bf16.mxu0 0
  %5117 = vmatmul.mubr.bf16.gmra.mxu0 %v4916
  %v5118 = vpop.f32.mrf.mxu0
  %v5119 = vadd.f32 0.0, %v5118
  %v5120 = vpop.f32.mrf.mxu0
  %v5121 = vpop.f32.mrf.mxu0
  %v5122 = vadd.f32 0.0, %v5121
  %v5123 = vpop.f32.mrf.mxu0
  %5124 = vmatprep.mubr.bf16.mxu0 0
  %5125 = vmatmul.mubr.bf16.gmra.mxu0 %v4919
  %v5126 = vpop.f32.mrf.mxu0
  %v5127 = vadd.f32 0.0, %v5126
  %v5128 = vpop.f32.mrf.mxu0
  %v5129 = vpop.f32.mrf.mxu0
  %v5130 = vadd.f32 0.0, %v5129
  %v5131 = vpop.f32.mrf.mxu0
  %5132 = vmatprep.mubr.bf16.mxu0 0
  %5133 = vmatmul.mubr.bf16.gmra.mxu0 %v4922
  %v5134 = vpop.f32.mrf.mxu0
  %v5135 = vadd.f32 0.0, %v5134
  %v5136 = vpop.f32.mrf.mxu0
  %v5137 = vpop.f32.mrf.mxu0
  %v5138 = vadd.f32 0.0, %v5137
  %v5139 = vpop.f32.mrf.mxu0
  %5140 = vmatprep.mubr.bf16.mxu0 0
  %5141 = vmatmul.mubr.bf16.gmra.mxu0 %v4925
  %v5142 = vpop.f32.mrf.mxu0
  %v5143 = vadd.f32 0.0, %v5142
  %v5144 = vpop.f32.mrf.mxu0
  %v5145 = vpop.f32.mrf.mxu0
  %v5146 = vadd.f32 0.0, %v5145
  %v5147 = vpop.f32.mrf.mxu0
  %5148 = vmatprep.mubr.bf16.mxu0 0
  %5149 = vmatmul.mubr.bf16.gmra.mxu0 %v4928
  %v5150 = vpop.f32.mrf.mxu0
  %v5151 = vadd.f32 0.0, %v5150
  %v5152 = vpop.f32.mrf.mxu0
  %v5153 = vpop.f32.mrf.mxu0
  %v5154 = vadd.f32 0.0, %v5153
  %v5155 = vpop.f32.mrf.mxu0
  %5156 = vmatprep.mubr.bf16.mxu0 0
  %5157 = vmatmul.mubr.bf16.gmra.mxu0 %v4931
  %v5158 = vpop.f32.mrf.mxu0
  %v5159 = vadd.f32 0.0, %v5158
  %v5160 = vpop.f32.mrf.mxu0
  %v5161 = vpop.f32.mrf.mxu0
  %v5162 = vadd.f32 0.0, %v5161
  %v5163 = vpop.f32.mrf.mxu0
  %5164 = vmatprep.mubr.bf16.mxu0 0
  %5165 = vmatmul.mubr.bf16.gmra.mxu0 %v4934
  %v5166 = vpop.f32.mrf.mxu0
  %v5167 = vadd.f32 0.0, %v5166
  %v5168 = vpop.f32.mrf.mxu0
  %v5169 = vpop.f32.mrf.mxu0
  %v5170 = vadd.f32 0.0, %v5169
  %v5171 = vpop.f32.mrf.mxu0
  %5172 = vmatprep.mubr.bf16.mxu0 0
  %5173 = vmatmul.mubr.bf16.gmra.mxu0 %v4937
  %v5174 = vpop.f32.mrf.mxu0
  %v5175 = vadd.f32 0.0, %v5174
  %v5176 = vpop.f32.mrf.mxu0
  %v5177 = vpop.f32.mrf.mxu0
  %v5178 = vadd.f32 0.0, %v5177
  %v5179 = vpop.f32.mrf.mxu0
  %5180 = vmatprep.mubr.bf16.mxu0 0
  %5181 = vmatmul.mubr.bf16.gmra.mxu0 %v4940
  %v5182 = vpop.f32.mrf.mxu0
  %v5183 = vadd.f32 0.0, %v5182
  %v5184 = vpop.f32.mrf.mxu0
  %v5185 = vpop.f32.mrf.mxu0
  %v5186 = vadd.f32 0.0, %v5185
  %v5187 = vpop.f32.mrf.mxu0
  %5188 = vmatprep.mubr.bf16.mxu0 0
  %5189 = vmatmul.mubr.bf16.gmra.mxu0 %v4943
  %v5190 = vpop.f32.mrf.mxu0
  %v5191 = vadd.f32 0.0, %v5190
  %v5192 = vpop.f32.mrf.mxu0
  %v5193 = vpop.f32.mrf.mxu0
  %v5194 = vadd.f32 0.0, %v5193
  %v5195 = vpop.f32.mrf.mxu0
  %5196 = vmatprep.mubr.bf16.mxu0 0
  %5197 = vmatmul.mubr.bf16.gmra.mxu0 %v4946
  %v5198 = vpop.f32.mrf.mxu0
  %v5199 = vadd.f32 0.0, %v5198
  %v5200 = vpop.f32.mrf.mxu0
  %v5201 = vpop.f32.mrf.mxu0
  %v5202 = vadd.f32 0.0, %v5201
  %v5203 = vpop.f32.mrf.mxu0
  %5204 = vmatprep.mubr.bf16.mxu0 0
  %5205 = vmatmul.mubr.bf16.gmra.mxu0 %v4949
  %v5206 = vpop.f32.mrf.mxu0
  %v5207 = vadd.f32 0.0, %v5206
  %v5208 = vpop.f32.mrf.mxu0
  %v5209 = vpop.f32.mrf.mxu0
  %v5210 = vadd.f32 0.0, %v5209
  %v5211 = vpop.f32.mrf.mxu0
  %5212 = vmatprep.mubr.bf16.mxu0 0
  %5213 = vmatmul.mubr.bf16.gmra.mxu0 %v4952
  %v5214 = vpop.f32.mrf.mxu0
  %v5215 = vadd.f32 0.0, %v5214
  %v5216 = vpop.f32.mrf.mxu0
  %v5217 = vpop.f32.mrf.mxu0
  %v5218 = vadd.f32 0.0, %v5217
  %v5219 = vpop.f32.mrf.mxu0
  %5220 = vmatprep.mubr.bf16.mxu0 0
  %5221 = vmatmul.mubr.bf16.gmra.mxu0 %v4955
  %v5222 = vpop.f32.mrf.mxu0
  %v5223 = vadd.f32 0.0, %v5222
  %v5224 = vpop.f32.mrf.mxu0
  %v5225 = vpop.f32.mrf.mxu0
  %v5226 = vadd.f32 0.0, %v5225
  %v5227 = vpop.f32.mrf.mxu0
  %5228 = vmatprep.mubr.bf16.mxu0 0
  %5229 = vmatmul.mubr.bf16.gmra.mxu0 %v4958
  %v5230 = vpop.f32.mrf.mxu0
  %v5231 = vadd.f32 0.0, %v5230
  %v5232 = vpop.f32.mrf.mxu0
  %v5233 = vpop.f32.mrf.mxu0
  %v5234 = vadd.f32 0.0, %v5233
  %v5235 = vpop.f32.mrf.mxu0
  %5236 = vmatprep.mubr.bf16.mxu0 0
  %5237 = vmatmul.mubr.bf16.gmra.mxu0 %v4961
  %v5238 = vpop.f32.mrf.mxu0
  %v5239 = vadd.f32 0.0, %v5238
  %v5240 = vpop.f32.mrf.mxu0
  %v5241 = vpop.f32.mrf.mxu0
  %v5242 = vadd.f32 0.0, %v5241
  %v5243 = vpop.f32.mrf.mxu0
  %5244 = vmatprep.mubr.bf16.mxu0 0
  %5245 = vmatmul.mubr.bf16.gmra.mxu0 %v4964
  %v5246 = vpop.f32.mrf.mxu0
  %v5247 = vadd.f32 0.0, %v5246
  %v5248 = vpop.f32.mrf.mxu0
  %v5249 = vpop.f32.mrf.mxu0
  %v5250 = vadd.f32 0.0, %v5249
  %v5251 = vpop.f32.mrf.mxu0
  %5252 = vmatprep.mubr.bf16.mxu0 0
  %5253 = vmatmul.mubr.bf16.gmra.mxu0 %v4967
  %v5254 = vpop.f32.mrf.mxu0
  %v5255 = vadd.f32 0.0, %v5254
  %v5256 = vpop.f32.mrf.mxu0
  %v5257 = vpop.f32.mrf.mxu0
  %v5258 = vadd.f32 0.0, %v5257
  %v5259 = vpop.f32.mrf.mxu0
  %5260 = vdwg.mxu0
  %v5261 = vadd.f32 %v4582, %v5007
  %v5262 = vadd.f32 %v4583, %v5010
  %v5263 = vadd.f32 %v4584, %v5015
  %v5264 = vadd.f32 %v4585, %v5018
  %v5265 = vadd.f32 %v4586, %v5023
  %v5266 = vadd.f32 %v4587, %v5026
  %v5267 = vadd.f32 %v4588, %v5031
  %v5268 = vadd.f32 %v4589, %v5034
  %v5269 = vadd.f32 %v4590, %v5039
  %v5270 = vadd.f32 %v4591, %v5042
  %v5271 = vadd.f32 %v4592, %v5047
  %v5272 = vadd.f32 %v4593, %v5050
  %v5273 = vadd.f32 %v4594, %v5055
  %v5274 = vadd.f32 %v4595, %v5058
  %v5275 = vadd.f32 %v4596, %v5063
  %v5276 = vadd.f32 %v4597, %v5066
  %v5277 = vadd.f32 %v4598, %v5071
  %v5278 = vadd.f32 %v4599, %v5074
  %v5279 = vadd.f32 %v4600, %v5079
  %v5280 = vadd.f32 %v4601, %v5082
  %v5281 = vadd.f32 %v4602, %v5087
  %v5282 = vadd.f32 %v4603, %v5090
  %v5283 = vadd.f32 %v4604, %v5095
  %v5284 = vadd.f32 %v4605, %v5098
  %v5285 = vadd.f32 %v4606, %v5103
  %v5286 = vadd.f32 %v4607, %v5106
  %v5287 = vadd.f32 %v4608, %v5111
  %v5288 = vadd.f32 %v4609, %v5114
  %v5289 = vadd.f32 %v4610, %v5119
  %v5290 = vadd.f32 %v4611, %v5122
  %v5291 = vadd.f32 %v4612, %v5127
  %v5292 = vadd.f32 %v4613, %v5130
  %v5293 = vadd.f32 %v4614, %v5135
  %v5294 = vadd.f32 %v4615, %v5138
  %v5295 = vadd.f32 %v4616, %v5143
  %v5296 = vadd.f32 %v4617, %v5146
  %v5297 = vadd.f32 %v4618, %v5151
  %v5298 = vadd.f32 %v4619, %v5154
  %v5299 = vadd.f32 %v4620, %v5159
  %v5300 = vadd.f32 %v4621, %v5162
  %v5301 = vadd.f32 %v4622, %v5167
  %v5302 = vadd.f32 %v4623, %v5170
  %v5303 = vadd.f32 %v4624, %v5175
  %v5304 = vadd.f32 %v4625, %v5178
  %v5305 = vadd.f32 %v4626, %v5183
  %v5306 = vadd.f32 %v4627, %v5186
  %v5307 = vadd.f32 %v4628, %v5191
  %v5308 = vadd.f32 %v4629, %v5194
  %v5309 = vadd.f32 %v4630, %v5199
  %v5310 = vadd.f32 %v4631, %v5202
  %v5311 = vadd.f32 %v4632, %v5207
  %v5312 = vadd.f32 %v4633, %v5210
  %v5313 = vadd.f32 %v4634, %v5215
  %v5314 = vadd.f32 %v4635, %v5218
  %v5315 = vadd.f32 %v4636, %v5223
  %v5316 = vadd.f32 %v4637, %v5226
  %v5317 = vadd.f32 %v4638, %v5231
  %v5318 = vadd.f32 %v4639, %v5234
  %v5319 = vadd.f32 %v4640, %v5239
  %v5320 = vadd.f32 %v4641, %v5242
  %v5321 = vadd.f32 %v4642, %v5247
  %v5322 = vadd.f32 %v4643, %v5250
  %v5323 = vadd.f32 %v4644, %v5255
  %v5324 = vadd.f32 %v4645, %v5258
  %s5325 = scalar_lea.vmem %s0, 2048
  %v5326 = vld [vmem:[%s5325] sm:$0xf]
  %v5327 = vld [vmem:[%s5325 + $0x4] sm:$0xf]
  %v5328 = vld [vmem:[%s5325 + $0x8] sm:$0xf]
  %v5329 = vld [vmem:[%s5325 + $0xc] sm:$0xf]
  %v5330 = vld [vmem:[%s5325 + $0x10] sm:$0xf]
  %v5331 = vld [vmem:[%s5325 + $0x14] sm:$0xf]
  %v5332 = vld [vmem:[%s5325 + $0x18] sm:$0xf]
  %v5333 = vld [vmem:[%s5325 + $0x1c] sm:$0xf]
  %v5334 = vld [vmem:[%s5325 + $0x20] sm:$0xf]
  %v5335 = vld [vmem:[%s5325 + $0x24] sm:$0xf]
  %v5336 = vld [vmem:[%s5325 + $0x28] sm:$0xf]
  %v5337 = vld [vmem:[%s5325 + $0x2c] sm:$0xf]
  %v5338 = vld [vmem:[%s5325 + $0x30] sm:$0xf]
  %v5339 = vld [vmem:[%s5325 + $0x34] sm:$0xf]
  %v5340 = vld [vmem:[%s5325 + $0x38] sm:$0xf]
  %v5341 = vld [vmem:[%s5325 + $0x3c] sm:$0xf]
  %v5342 = vld [vmem:[%s5325 + $0x40] sm:$0xf]
  %v5343 = vld [vmem:[%s5325 + $0x44] sm:$0xf]
  %v5344 = vld [vmem:[%s5325 + $0x48] sm:$0xf]
  %v5345 = vld [vmem:[%s5325 + $0x4c] sm:$0xf]
  %v5346 = vld [vmem:[%s5325 + $0x50] sm:$0xf]
  %v5347 = vld [vmem:[%s5325 + $0x54] sm:$0xf]
  %v5348 = vld [vmem:[%s5325 + $0x58] sm:$0xf]
  %v5349 = vld [vmem:[%s5325 + $0x5c] sm:$0xf]
  %v5350 = vld [vmem:[%s5325 + $0x60] sm:$0xf]
  %v5351 = vld [vmem:[%s5325 + $0x64] sm:$0xf]
  %v5352 = vld [vmem:[%s5325 + $0x68] sm:$0xf]
  %v5353 = vld [vmem:[%s5325 + $0x6c] sm:$0xf]
  %v5354 = vld [vmem:[%s5325 + $0x70] sm:$0xf]
  %v5355 = vld [vmem:[%s5325 + $0x74] sm:$0xf]
  %v5356 = vld [vmem:[%s5325 + $0x78] sm:$0xf]
  %v5357 = vld [vmem:[%s5325 + $0x7c] sm:$0xf]
  %v5358 = vld [vmem:[%s5325 + $0x80] sm:$0xf]
  %v5359 = vld [vmem:[%s5325 + $0x84] sm:$0xf]
  %v5360 = vld [vmem:[%s5325 + $0x88] sm:$0xf]
  %v5361 = vld [vmem:[%s5325 + $0x8c] sm:$0xf]
  %v5362 = vld [vmem:[%s5325 + $0x90] sm:$0xf]
  %v5363 = vld [vmem:[%s5325 + $0x94] sm:$0xf]
  %v5364 = vld [vmem:[%s5325 + $0x98] sm:$0xf]
  %v5365 = vld [vmem:[%s5325 + $0x9c] sm:$0xf]
  %v5366 = vld [vmem:[%s5325 + $0xa0] sm:$0xf]
  %v5367 = vld [vmem:[%s5325 + $0xa4] sm:$0xf]
  %v5368 = vld [vmem:[%s5325 + $0xa8] sm:$0xf]
  %v5369 = vld [vmem:[%s5325 + $0xac] sm:$0xf]
  %v5370 = vld [vmem:[%s5325 + $0xb0] sm:$0xf]
  %v5371 = vld [vmem:[%s5325 + $0xb4] sm:$0xf]
  %v5372 = vld [vmem:[%s5325 + $0xb8] sm:$0xf]
  %v5373 = vld [vmem:[%s5325 + $0xbc] sm:$0xf]
  %v5374 = vld [vmem:[%s5325 + $0xc0] sm:$0xf]
  %v5375 = vld [vmem:[%s5325 + $0xc4] sm:$0xf]
  %v5376 = vld [vmem:[%s5325 + $0xc8] sm:$0xf]
  %v5377 = vld [vmem:[%s5325 + $0xcc] sm:$0xf]
  %v5378 = vld [vmem:[%s5325 + $0xd0] sm:$0xf]
  %v5379 = vld [vmem:[%s5325 + $0xd4] sm:$0xf]
  %v5380 = vld [vmem:[%s5325 + $0xd8] sm:$0xf]
  %v5381 = vld [vmem:[%s5325 + $0xdc] sm:$0xf]
  %v5382 = vld [vmem:[%s5325 + $0xe0] sm:$0xf]
  %v5383 = vld [vmem:[%s5325 + $0xe4] sm:$0xf]
  %v5384 = vld [vmem:[%s5325 + $0xe8] sm:$0xf]
  %v5385 = vld [vmem:[%s5325 + $0xec] sm:$0xf]
  %v5386 = vld [vmem:[%s5325 + $0xf0] sm:$0xf]
  %v5387 = vld [vmem:[%s5325 + $0xf4] sm:$0xf]
  %v5388 = vld [vmem:[%s5325 + $0xf8] sm:$0xf]
  %v5389 = vld [vmem:[%s5325 + $0xfc] sm:$0xf]
  %s5390 = scalar_lea.vmem %s1, 16
  %v5391 = vld [vmem:[%s5390] sm:$0x3]
  %v5456 = vunpack.c.l.b16 %v5326
  %v5457 = vunpack.c.l.b16 %v5327
  %v5458 = vunpack.c.l.b16 %v5328
  %v5459 = vunpack.c.l.b16 %v5329
  %v5460 = vunpack.c.l.b16 %v5330
  %v5461 = vunpack.c.l.b16 %v5331
  %v5462 = vunpack.c.l.b16 %v5332
  %v5463 = vunpack.c.l.b16 %v5333
  %v5464 = vunpack.c.l.b16 %v5334
  %v5465 = vunpack.c.l.b16 %v5335
  %v5466 = vunpack.c.l.b16 %v5336
  %v5467 = vunpack.c.l.b16 %v5337
  %v5468 = vunpack.c.l.b16 %v5338
  %v5469 = vunpack.c.l.b16 %v5339
  %v5470 = vunpack.c.l.b16 %v5340
  %v5471 = vunpack.c.l.b16 %v5341
  %v5472 = vunpack.c.l.b16 %v5342
  %v5473 = vunpack.c.l.b16 %v5343
  %v5474 = vunpack.c.l.b16 %v5344
  %v5475 = vunpack.c.l.b16 %v5345
  %v5476 = vunpack.c.l.b16 %v5346
  %v5477 = vunpack.c.l.b16 %v5347
  %v5478 = vunpack.c.l.b16 %v5348
  %v5479 = vunpack.c.l.b16 %v5349
  %v5480 = vunpack.c.l.b16 %v5350
  %v5481 = vunpack.c.l.b16 %v5351
  %v5482 = vunpack.c.l.b16 %v5352
  %v5483 = vunpack.c.l.b16 %v5353
  %v5484 = vunpack.c.l.b16 %v5354
  %v5485 = vunpack.c.l.b16 %v5355
  %v5486 = vunpack.c.l.b16 %v5356
  %v5487 = vunpack.c.l.b16 %v5357
  %v5488 = vunpack.c.l.b16 %v5358
  %v5489 = vunpack.c.l.b16 %v5359
  %v5490 = vunpack.c.l.b16 %v5360
  %v5491 = vunpack.c.l.b16 %v5361
  %v5492 = vunpack.c.l.b16 %v5362
  %v5493 = vunpack.c.l.b16 %v5363
  %v5494 = vunpack.c.l.b16 %v5364
  %v5495 = vunpack.c.l.b16 %v5365
  %v5496 = vunpack.c.l.b16 %v5366
  %v5497 = vunpack.c.l.b16 %v5367
  %v5498 = vunpack.c.l.b16 %v5368
  %v5499 = vunpack.c.l.b16 %v5369
  %v5500 = vunpack.c.l.b16 %v5370
  %v5501 = vunpack.c.l.b16 %v5371
  %v5502 = vunpack.c.l.b16 %v5372
  %v5503 = vunpack.c.l.b16 %v5373
  %v5504 = vunpack.c.l.b16 %v5374
  %v5505 = vunpack.c.l.b16 %v5375
  %v5506 = vunpack.c.l.b16 %v5376
  %v5507 = vunpack.c.l.b16 %v5377
  %v5508 = vunpack.c.l.b16 %v5378
  %v5509 = vunpack.c.l.b16 %v5379
  %v5510 = vunpack.c.l.b16 %v5380
  %v5511 = vunpack.c.l.b16 %v5381
  %v5512 = vunpack.c.l.b16 %v5382
  %v5513 = vunpack.c.l.b16 %v5383
  %v5514 = vunpack.c.l.b16 %v5384
  %v5515 = vunpack.c.l.b16 %v5385
  %v5516 = vunpack.c.l.b16 %v5386
  %v5517 = vunpack.c.l.b16 %v5387
  %v5518 = vunpack.c.l.b16 %v5388
  %v5519 = vunpack.c.l.b16 %v5389
  %v5520 = vpack.c.b16 %v5457, %v5456
  %v5521 = vpack.c.b16 %v5459, %v5458
  %v5522 = vpack.c.b16 %v5461, %v5460
  %v5523 = vpack.c.b16 %v5463, %v5462
  %v5524 = vpack.c.b16 %v5465, %v5464
  %v5525 = vpack.c.b16 %v5467, %v5466
  %v5526 = vpack.c.b16 %v5469, %v5468
  %v5527 = vpack.c.b16 %v5471, %v5470
  %v5528 = vpack.c.b16 %v5473, %v5472
  %v5529 = vpack.c.b16 %v5475, %v5474
  %v5530 = vpack.c.b16 %v5477, %v5476
  %v5531 = vpack.c.b16 %v5479, %v5478
  %v5532 = vpack.c.b16 %v5481, %v5480
  %v5533 = vpack.c.b16 %v5483, %v5482
  %v5534 = vpack.c.b16 %v5485, %v5484
  %v5535 = vpack.c.b16 %v5487, %v5486
  %v5536 = vpack.c.b16 %v5489, %v5488
  %v5537 = vpack.c.b16 %v5491, %v5490
  %v5538 = vpack.c.b16 %v5493, %v5492
  %v5539 = vpack.c.b16 %v5495, %v5494
  %v5540 = vpack.c.b16 %v5497, %v5496
  %v5541 = vpack.c.b16 %v5499, %v5498
  %v5542 = vpack.c.b16 %v5501, %v5500
  %v5543 = vpack.c.b16 %v5503, %v5502
  %v5544 = vpack.c.b16 %v5505, %v5504
  %v5545 = vpack.c.b16 %v5507, %v5506
  %v5546 = vpack.c.b16 %v5509, %v5508
  %v5547 = vpack.c.b16 %v5511, %v5510
  %v5548 = vpack.c.b16 %v5513, %v5512
  %v5549 = vpack.c.b16 %v5515, %v5514
  %v5550 = vpack.c.b16 %v5517, %v5516
  %v5551 = vpack.c.b16 %v5519, %v5518
  %v5553 = vsel %vm310, %v5520, 0
  %v5556 = vsel %vm310, %v5521, 0
  %v5559 = vsel %vm310, %v5522, 0
  %v5562 = vsel %vm310, %v5523, 0
  %v5565 = vsel %vm310, %v5524, 0
  %v5568 = vsel %vm310, %v5525, 0
  %v5571 = vsel %vm310, %v5526, 0
  %v5574 = vsel %vm310, %v5527, 0
  %v5577 = vsel %vm310, %v5528, 0
  %v5580 = vsel %vm310, %v5529, 0
  %v5583 = vsel %vm310, %v5530, 0
  %v5586 = vsel %vm310, %v5531, 0
  %v5589 = vsel %vm310, %v5532, 0
  %v5592 = vsel %vm310, %v5533, 0
  %v5595 = vsel %vm310, %v5534, 0
  %v5598 = vsel %vm310, %v5535, 0
  %v5601 = vsel %vm310, %v5536, 0
  %v5604 = vsel %vm310, %v5537, 0
  %v5607 = vsel %vm310, %v5538, 0
  %v5610 = vsel %vm310, %v5539, 0
  %v5613 = vsel %vm310, %v5540, 0
  %v5616 = vsel %vm310, %v5541, 0
  %v5619 = vsel %vm310, %v5542, 0
  %v5622 = vsel %vm310, %v5543, 0
  %v5625 = vsel %vm310, %v5544, 0
  %v5628 = vsel %vm310, %v5545, 0
  %v5631 = vsel %vm310, %v5546, 0
  %v5634 = vsel %vm310, %v5547, 0
  %v5637 = vsel %vm310, %v5548, 0
  %v5640 = vsel %vm310, %v5549, 0
  %v5643 = vsel %vm310, %v5550, 0
  %v5646 = vsel %vm310, %v5551, 0
  %v5649 = vand.u32 %v5391, %v410
  %5651 = vmatprep.subr.bf16.mxu0 0
  %5652 = vmatpush1.bf16.msra.mxu0 0
  %5653 = vmatprep.subr.bf16.mxu0 0
  %5654 = vmatpush1.bf16.msra.mxu0 0
  %5655 = vmatprep.subr.bf16.mxu0 0
  %5656 = vmatpush1.bf16.msra.mxu0 0
  %5657 = vmatprep.subr.bf16.mxu0 0
  %5658 = vmatpush1.bf16.msra.mxu0 0
  %5659 = vmatprep.subr.bf16.mxu0 0
  %5660 = vmatpush1.bf16.msra.mxu0 0
  %5661 = vmatprep.subr.bf16.mxu0 0
  %5662 = vmatpush1.bf16.msra.mxu0 0
  %5663 = vmatprep.subr.bf16.mxu0 0
  %5664 = vmatpush1.bf16.msra.mxu0 0
  %5665 = vmatprep.subr.bf16.mxu0 0
  %5666 = vmatpush1.bf16.msra.mxu0 %v5649
  %5667 = vmatprep.subr.bf16.mxu0 0
  %5668 = vmatpush2.bf16.msra.mxu0 0
  %5669 = vmatprep.subr.bf16.mxu0 0
  %5670 = vmatpush2.bf16.msra.mxu0 0
  %5671 = vmatprep.subr.bf16.mxu0 0
  %5672 = vmatpush2.bf16.msra.mxu0 0
  %5673 = vmatprep.subr.bf16.mxu0 0
  %5674 = vmatpush2.bf16.msra.mxu0 0
  %5675 = vmatprep.subr.bf16.mxu0 0
  %5676 = vmatpush2.bf16.msra.mxu0 0
  %5677 = vmatprep.subr.bf16.mxu0 0
  %5678 = vmatpush2.bf16.msra.mxu0 0
  %5679 = vmatprep.subr.bf16.mxu0 0
  %5680 = vmatpush2.bf16.msra.mxu0 0
  %5681 = vmatprep.subr.bf16.mxu0 0
  %5682 = vmatpush2.bf16.msra.mxu0 0
  %5683 = vmatprep.mubr.bf16.mxu0 0
  %5684 = vmatmul.mubr.bf16.gmra.mxu0 %v5553
  %v5685 = vpop.f32.mrf.mxu0
  %v5686 = vadd.f32 0.0, %v5685
  %v5687 = vpop.f32.mrf.mxu0
  %v5688 = vpop.f32.mrf.mxu0
  %v5689 = vadd.f32 0.0, %v5688
  %v5690 = vpop.f32.mrf.mxu0
  %5691 = vmatprep.mubr.bf16.mxu0 0
  %5692 = vmatmul.mubr.bf16.gmra.mxu0 %v5556
  %v5693 = vpop.f32.mrf.mxu0
  %v5694 = vadd.f32 0.0, %v5693
  %v5695 = vpop.f32.mrf.mxu0
  %v5696 = vpop.f32.mrf.mxu0
  %v5697 = vadd.f32 0.0, %v5696
  %v5698 = vpop.f32.mrf.mxu0
  %5699 = vmatprep.mubr.bf16.mxu0 0
  %5700 = vmatmul.mubr.bf16.gmra.mxu0 %v5559
  %v5701 = vpop.f32.mrf.mxu0
  %v5702 = vadd.f32 0.0, %v5701
  %v5703 = vpop.f32.mrf.mxu0
  %v5704 = vpop.f32.mrf.mxu0
  %v5705 = vadd.f32 0.0, %v5704
  %v5706 = vpop.f32.mrf.mxu0
  %5707 = vmatprep.mubr.bf16.mxu0 0
  %5708 = vmatmul.mubr.bf16.gmra.mxu0 %v5562
  %v5709 = vpop.f32.mrf.mxu0
  %v5710 = vadd.f32 0.0, %v5709
  %v5711 = vpop.f32.mrf.mxu0
  %v5712 = vpop.f32.mrf.mxu0
  %v5713 = vadd.f32 0.0, %v5712
  %v5714 = vpop.f32.mrf.mxu0
  %5715 = vmatprep.mubr.bf16.mxu0 0
  %5716 = vmatmul.mubr.bf16.gmra.mxu0 %v5565
  %v5717 = vpop.f32.mrf.mxu0
  %v5718 = vadd.f32 0.0, %v5717
  %v5719 = vpop.f32.mrf.mxu0
  %v5720 = vpop.f32.mrf.mxu0
  %v5721 = vadd.f32 0.0, %v5720
  %v5722 = vpop.f32.mrf.mxu0
  %5723 = vmatprep.mubr.bf16.mxu0 0
  %5724 = vmatmul.mubr.bf16.gmra.mxu0 %v5568
  %v5725 = vpop.f32.mrf.mxu0
  %v5726 = vadd.f32 0.0, %v5725
  %v5727 = vpop.f32.mrf.mxu0
  %v5728 = vpop.f32.mrf.mxu0
  %v5729 = vadd.f32 0.0, %v5728
  %v5730 = vpop.f32.mrf.mxu0
  %5731 = vmatprep.mubr.bf16.mxu0 0
  %5732 = vmatmul.mubr.bf16.gmra.mxu0 %v5571
  %v5733 = vpop.f32.mrf.mxu0
  %v5734 = vadd.f32 0.0, %v5733
  %v5735 = vpop.f32.mrf.mxu0
  %v5736 = vpop.f32.mrf.mxu0
  %v5737 = vadd.f32 0.0, %v5736
  %v5738 = vpop.f32.mrf.mxu0
  %5739 = vmatprep.mubr.bf16.mxu0 0
  %5740 = vmatmul.mubr.bf16.gmra.mxu0 %v5574
  %v5741 = vpop.f32.mrf.mxu0
  %v5742 = vadd.f32 0.0, %v5741
  %v5743 = vpop.f32.mrf.mxu0
  %v5744 = vpop.f32.mrf.mxu0
  %v5745 = vadd.f32 0.0, %v5744
  %v5746 = vpop.f32.mrf.mxu0
  %5747 = vmatprep.mubr.bf16.mxu0 0
  %5748 = vmatmul.mubr.bf16.gmra.mxu0 %v5577
  %v5749 = vpop.f32.mrf.mxu0
  %v5750 = vadd.f32 0.0, %v5749
  %v5751 = vpop.f32.mrf.mxu0
  %v5752 = vpop.f32.mrf.mxu0
  %v5753 = vadd.f32 0.0, %v5752
  %v5754 = vpop.f32.mrf.mxu0
  %5755 = vmatprep.mubr.bf16.mxu0 0
  %5756 = vmatmul.mubr.bf16.gmra.mxu0 %v5580
  %v5757 = vpop.f32.mrf.mxu0
  %v5758 = vadd.f32 0.0, %v5757
  %v5759 = vpop.f32.mrf.mxu0
  %v5760 = vpop.f32.mrf.mxu0
  %v5761 = vadd.f32 0.0, %v5760
  %v5762 = vpop.f32.mrf.mxu0
  %5763 = vmatprep.mubr.bf16.mxu0 0
  %5764 = vmatmul.mubr.bf16.gmra.mxu0 %v5583
  %v5765 = vpop.f32.mrf.mxu0
  %v5766 = vadd.f32 0.0, %v5765
  %v5767 = vpop.f32.mrf.mxu0
  %v5768 = vpop.f32.mrf.mxu0
  %v5769 = vadd.f32 0.0, %v5768
  %v5770 = vpop.f32.mrf.mxu0
  %5771 = vmatprep.mubr.bf16.mxu0 0
  %5772 = vmatmul.mubr.bf16.gmra.mxu0 %v5586
  %v5773 = vpop.f32.mrf.mxu0
  %v5774 = vadd.f32 0.0, %v5773
  %v5775 = vpop.f32.mrf.mxu0
  %v5776 = vpop.f32.mrf.mxu0
  %v5777 = vadd.f32 0.0, %v5776
  %v5778 = vpop.f32.mrf.mxu0
  %5779 = vmatprep.mubr.bf16.mxu0 0
  %5780 = vmatmul.mubr.bf16.gmra.mxu0 %v5589
  %v5781 = vpop.f32.mrf.mxu0
  %v5782 = vadd.f32 0.0, %v5781
  %v5783 = vpop.f32.mrf.mxu0
  %v5784 = vpop.f32.mrf.mxu0
  %v5785 = vadd.f32 0.0, %v5784
  %v5786 = vpop.f32.mrf.mxu0
  %5787 = vmatprep.mubr.bf16.mxu0 0
  %5788 = vmatmul.mubr.bf16.gmra.mxu0 %v5592
  %v5789 = vpop.f32.mrf.mxu0
  %v5790 = vadd.f32 0.0, %v5789
  %v5791 = vpop.f32.mrf.mxu0
  %v5792 = vpop.f32.mrf.mxu0
  %v5793 = vadd.f32 0.0, %v5792
  %v5794 = vpop.f32.mrf.mxu0
  %5795 = vmatprep.mubr.bf16.mxu0 0
  %5796 = vmatmul.mubr.bf16.gmra.mxu0 %v5595
  %v5797 = vpop.f32.mrf.mxu0
  %v5798 = vadd.f32 0.0, %v5797
  %v5799 = vpop.f32.mrf.mxu0
  %v5800 = vpop.f32.mrf.mxu0
  %v5801 = vadd.f32 0.0, %v5800
  %v5802 = vpop.f32.mrf.mxu0
  %5803 = vmatprep.mubr.bf16.mxu0 0
  %5804 = vmatmul.mubr.bf16.gmra.mxu0 %v5598
  %v5805 = vpop.f32.mrf.mxu0
  %v5806 = vadd.f32 0.0, %v5805
  %v5807 = vpop.f32.mrf.mxu0
  %v5808 = vpop.f32.mrf.mxu0
  %v5809 = vadd.f32 0.0, %v5808
  %v5810 = vpop.f32.mrf.mxu0
  %5811 = vmatprep.mubr.bf16.mxu0 0
  %5812 = vmatmul.mubr.bf16.gmra.mxu0 %v5601
  %v5813 = vpop.f32.mrf.mxu0
  %v5814 = vadd.f32 0.0, %v5813
  %v5815 = vpop.f32.mrf.mxu0
  %v5816 = vpop.f32.mrf.mxu0
  %v5817 = vadd.f32 0.0, %v5816
  %v5818 = vpop.f32.mrf.mxu0
  %5819 = vmatprep.mubr.bf16.mxu0 0
  %5820 = vmatmul.mubr.bf16.gmra.mxu0 %v5604
  %v5821 = vpop.f32.mrf.mxu0
  %v5822 = vadd.f32 0.0, %v5821
  %v5823 = vpop.f32.mrf.mxu0
  %v5824 = vpop.f32.mrf.mxu0
  %v5825 = vadd.f32 0.0, %v5824
  %v5826 = vpop.f32.mrf.mxu0
  %5827 = vmatprep.mubr.bf16.mxu0 0
  %5828 = vmatmul.mubr.bf16.gmra.mxu0 %v5607
  %v5829 = vpop.f32.mrf.mxu0
  %v5830 = vadd.f32 0.0, %v5829
  %v5831 = vpop.f32.mrf.mxu0
  %v5832 = vpop.f32.mrf.mxu0
  %v5833 = vadd.f32 0.0, %v5832
  %v5834 = vpop.f32.mrf.mxu0
  %5835 = vmatprep.mubr.bf16.mxu0 0
  %5836 = vmatmul.mubr.bf16.gmra.mxu0 %v5610
  %v5837 = vpop.f32.mrf.mxu0
  %v5838 = vadd.f32 0.0, %v5837
  %v5839 = vpop.f32.mrf.mxu0
  %v5840 = vpop.f32.mrf.mxu0
  %v5841 = vadd.f32 0.0, %v5840
  %v5842 = vpop.f32.mrf.mxu0
  %5843 = vmatprep.mubr.bf16.mxu0 0
  %5844 = vmatmul.mubr.bf16.gmra.mxu0 %v5613
  %v5845 = vpop.f32.mrf.mxu0
  %v5846 = vadd.f32 0.0, %v5845
  %v5847 = vpop.f32.mrf.mxu0
  %v5848 = vpop.f32.mrf.mxu0
  %v5849 = vadd.f32 0.0, %v5848
  %v5850 = vpop.f32.mrf.mxu0
  %5851 = vmatprep.mubr.bf16.mxu0 0
  %5852 = vmatmul.mubr.bf16.gmra.mxu0 %v5616
  %v5853 = vpop.f32.mrf.mxu0
  %v5854 = vadd.f32 0.0, %v5853
  %v5855 = vpop.f32.mrf.mxu0
  %v5856 = vpop.f32.mrf.mxu0
  %v5857 = vadd.f32 0.0, %v5856
  %v5858 = vpop.f32.mrf.mxu0
  %5859 = vmatprep.mubr.bf16.mxu0 0
  %5860 = vmatmul.mubr.bf16.gmra.mxu0 %v5619
  %v5861 = vpop.f32.mrf.mxu0
  %v5862 = vadd.f32 0.0, %v5861
  %v5863 = vpop.f32.mrf.mxu0
  %v5864 = vpop.f32.mrf.mxu0
  %v5865 = vadd.f32 0.0, %v5864
  %v5866 = vpop.f32.mrf.mxu0
  %5867 = vmatprep.mubr.bf16.mxu0 0
  %5868 = vmatmul.mubr.bf16.gmra.mxu0 %v5622
  %v5869 = vpop.f32.mrf.mxu0
  %v5870 = vadd.f32 0.0, %v5869
  %v5871 = vpop.f32.mrf.mxu0
  %v5872 = vpop.f32.mrf.mxu0
  %v5873 = vadd.f32 0.0, %v5872
  %v5874 = vpop.f32.mrf.mxu0
  %5875 = vmatprep.mubr.bf16.mxu0 0
  %5876 = vmatmul.mubr.bf16.gmra.mxu0 %v5625
  %v5877 = vpop.f32.mrf.mxu0
  %v5878 = vadd.f32 0.0, %v5877
  %v5879 = vpop.f32.mrf.mxu0
  %v5880 = vpop.f32.mrf.mxu0
  %v5881 = vadd.f32 0.0, %v5880
  %v5882 = vpop.f32.mrf.mxu0
  %5883 = vmatprep.mubr.bf16.mxu0 0
  %5884 = vmatmul.mubr.bf16.gmra.mxu0 %v5628
  %v5885 = vpop.f32.mrf.mxu0
  %v5886 = vadd.f32 0.0, %v5885
  %v5887 = vpop.f32.mrf.mxu0
  %v5888 = vpop.f32.mrf.mxu0
  %v5889 = vadd.f32 0.0, %v5888
  %v5890 = vpop.f32.mrf.mxu0
  %5891 = vmatprep.mubr.bf16.mxu0 0
  %5892 = vmatmul.mubr.bf16.gmra.mxu0 %v5631
  %v5893 = vpop.f32.mrf.mxu0
  %v5894 = vadd.f32 0.0, %v5893
  %v5895 = vpop.f32.mrf.mxu0
  %v5896 = vpop.f32.mrf.mxu0
  %v5897 = vadd.f32 0.0, %v5896
  %v5898 = vpop.f32.mrf.mxu0
  %5899 = vmatprep.mubr.bf16.mxu0 0
  %5900 = vmatmul.mubr.bf16.gmra.mxu0 %v5634
  %v5901 = vpop.f32.mrf.mxu0
  %v5902 = vadd.f32 0.0, %v5901
  %v5903 = vpop.f32.mrf.mxu0
  %v5904 = vpop.f32.mrf.mxu0
  %v5905 = vadd.f32 0.0, %v5904
  %v5906 = vpop.f32.mrf.mxu0
  %5907 = vmatprep.mubr.bf16.mxu0 0
  %5908 = vmatmul.mubr.bf16.gmra.mxu0 %v5637
  %v5909 = vpop.f32.mrf.mxu0
  %v5910 = vadd.f32 0.0, %v5909
  %v5911 = vpop.f32.mrf.mxu0
  %v5912 = vpop.f32.mrf.mxu0
  %v5913 = vadd.f32 0.0, %v5912
  %v5914 = vpop.f32.mrf.mxu0
  %5915 = vmatprep.mubr.bf16.mxu0 0
  %5916 = vmatmul.mubr.bf16.gmra.mxu0 %v5640
  %v5917 = vpop.f32.mrf.mxu0
  %v5918 = vadd.f32 0.0, %v5917
  %v5919 = vpop.f32.mrf.mxu0
  %v5920 = vpop.f32.mrf.mxu0
  %v5921 = vadd.f32 0.0, %v5920
  %v5922 = vpop.f32.mrf.mxu0
  %5923 = vmatprep.mubr.bf16.mxu0 0
  %5924 = vmatmul.mubr.bf16.gmra.mxu0 %v5643
  %v5925 = vpop.f32.mrf.mxu0
  %v5926 = vadd.f32 0.0, %v5925
  %v5927 = vpop.f32.mrf.mxu0
  %v5928 = vpop.f32.mrf.mxu0
  %v5929 = vadd.f32 0.0, %v5928
  %v5930 = vpop.f32.mrf.mxu0
  %5931 = vmatprep.mubr.bf16.mxu0 0
  %5932 = vmatmul.mubr.bf16.gmra.mxu0 %v5646
  %v5933 = vpop.f32.mrf.mxu0
  %v5934 = vadd.f32 0.0, %v5933
  %v5935 = vpop.f32.mrf.mxu0
  %v5936 = vpop.f32.mrf.mxu0
  %v5937 = vadd.f32 0.0, %v5936
  %v5938 = vpop.f32.mrf.mxu0
  %5939 = vdwg.mxu0
  %v5940 = vadd.f32 %v5261, %v5686
  %v5941 = vadd.f32 %v5262, %v5689
  %v5942 = vadd.f32 %v5263, %v5694
  %v5943 = vadd.f32 %v5264, %v5697
  %v5944 = vadd.f32 %v5265, %v5702
  %v5945 = vadd.f32 %v5266, %v5705
  %v5946 = vadd.f32 %v5267, %v5710
  %v5947 = vadd.f32 %v5268, %v5713
  %v5948 = vadd.f32 %v5269, %v5718
  %v5949 = vadd.f32 %v5270, %v5721
  %v5950 = vadd.f32 %v5271, %v5726
  %v5951 = vadd.f32 %v5272, %v5729
  %v5952 = vadd.f32 %v5273, %v5734
  %v5953 = vadd.f32 %v5274, %v5737
  %v5954 = vadd.f32 %v5275, %v5742
  %v5955 = vadd.f32 %v5276, %v5745
  %v5956 = vadd.f32 %v5277, %v5750
  %v5957 = vadd.f32 %v5278, %v5753
  %v5958 = vadd.f32 %v5279, %v5758
  %v5959 = vadd.f32 %v5280, %v5761
  %v5960 = vadd.f32 %v5281, %v5766
  %v5961 = vadd.f32 %v5282, %v5769
  %v5962 = vadd.f32 %v5283, %v5774
  %v5963 = vadd.f32 %v5284, %v5777
  %v5964 = vadd.f32 %v5285, %v5782
  %v5965 = vadd.f32 %v5286, %v5785
  %v5966 = vadd.f32 %v5287, %v5790
  %v5967 = vadd.f32 %v5288, %v5793
  %v5968 = vadd.f32 %v5289, %v5798
  %v5969 = vadd.f32 %v5290, %v5801
  %v5970 = vadd.f32 %v5291, %v5806
  %v5971 = vadd.f32 %v5292, %v5809
  %v5972 = vadd.f32 %v5293, %v5814
  %v5973 = vadd.f32 %v5294, %v5817
  %v5974 = vadd.f32 %v5295, %v5822
  %v5975 = vadd.f32 %v5296, %v5825
  %v5976 = vadd.f32 %v5297, %v5830
  %v5977 = vadd.f32 %v5298, %v5833
  %v5978 = vadd.f32 %v5299, %v5838
  %v5979 = vadd.f32 %v5300, %v5841
  %v5980 = vadd.f32 %v5301, %v5846
  %v5981 = vadd.f32 %v5302, %v5849
  %v5982 = vadd.f32 %v5303, %v5854
  %v5983 = vadd.f32 %v5304, %v5857
  %v5984 = vadd.f32 %v5305, %v5862
  %v5985 = vadd.f32 %v5306, %v5865
  %v5986 = vadd.f32 %v5307, %v5870
  %v5987 = vadd.f32 %v5308, %v5873
  %v5988 = vadd.f32 %v5309, %v5878
  %v5989 = vadd.f32 %v5310, %v5881
  %v5990 = vadd.f32 %v5311, %v5886
  %v5991 = vadd.f32 %v5312, %v5889
  %v5992 = vadd.f32 %v5313, %v5894
  %v5993 = vadd.f32 %v5314, %v5897
  %v5994 = vadd.f32 %v5315, %v5902
  %v5995 = vadd.f32 %v5316, %v5905
  %v5996 = vadd.f32 %v5317, %v5910
  %v5997 = vadd.f32 %v5318, %v5913
  %v5998 = vadd.f32 %v5319, %v5918
  %v5999 = vadd.f32 %v5320, %v5921
  %v6000 = vadd.f32 %v5321, %v5926
  %v6001 = vadd.f32 %v5322, %v5929
  %v6002 = vadd.f32 %v5323, %v5934
  %v6003 = vadd.f32 %v5324, %v5937
  %v6004 = vld [vmem:[%s2] sm:$0x1]
  %v6006 = vlaneseq
  %v6007 = vshrl.u32 %v6006, 7
  %v6008 = vsub.s32 0, %v6007
  %v6009 = vrot.slane %v6004, %v6008
  %v6011 = vmul.f32 %v5940, %v6009
  %v6012 = vmul.f32 %v5941, %v6009
  %v6013 = vmul.f32 %v5942, %v6009
  %v6014 = vmul.f32 %v5943, %v6009
  %v6015 = vmul.f32 %v5944, %v6009
  %v6016 = vmul.f32 %v5945, %v6009
  %v6017 = vmul.f32 %v5946, %v6009
  %v6018 = vmul.f32 %v5947, %v6009
  %v6019 = vmul.f32 %v5948, %v6009
  %v6020 = vmul.f32 %v5949, %v6009
  %v6021 = vmul.f32 %v5950, %v6009
  %v6022 = vmul.f32 %v5951, %v6009
  %v6023 = vmul.f32 %v5952, %v6009
  %v6024 = vmul.f32 %v5953, %v6009
  %v6025 = vmul.f32 %v5954, %v6009
  %v6026 = vmul.f32 %v5955, %v6009
  %v6027 = vmul.f32 %v5956, %v6009
  %v6028 = vmul.f32 %v5957, %v6009
  %v6029 = vmul.f32 %v5958, %v6009
  %v6030 = vmul.f32 %v5959, %v6009
  %v6031 = vmul.f32 %v5960, %v6009
  %v6032 = vmul.f32 %v5961, %v6009
  %v6033 = vmul.f32 %v5962, %v6009
  %v6034 = vmul.f32 %v5963, %v6009
  %v6035 = vmul.f32 %v5964, %v6009
  %v6036 = vmul.f32 %v5965, %v6009
  %v6037 = vmul.f32 %v5966, %v6009
  %v6038 = vmul.f32 %v5967, %v6009
  %v6039 = vmul.f32 %v5968, %v6009
  %v6040 = vmul.f32 %v5969, %v6009
  %v6041 = vmul.f32 %v5970, %v6009
  %v6042 = vmul.f32 %v5971, %v6009
  %v6043 = vmul.f32 %v5972, %v6009
  %v6044 = vmul.f32 %v5973, %v6009
  %v6045 = vmul.f32 %v5974, %v6009
  %v6046 = vmul.f32 %v5975, %v6009
  %v6047 = vmul.f32 %v5976, %v6009
  %v6048 = vmul.f32 %v5977, %v6009
  %v6049 = vmul.f32 %v5978, %v6009
  %v6050 = vmul.f32 %v5979, %v6009
  %v6051 = vmul.f32 %v5980, %v6009
  %v6052 = vmul.f32 %v5981, %v6009
  %v6053 = vmul.f32 %v5982, %v6009
  %v6054 = vmul.f32 %v5983, %v6009
  %v6055 = vmul.f32 %v5984, %v6009
  %v6056 = vmul.f32 %v5985, %v6009
  %v6057 = vmul.f32 %v5986, %v6009
  %v6058 = vmul.f32 %v5987, %v6009
  %v6059 = vmul.f32 %v5988, %v6009
  %v6060 = vmul.f32 %v5989, %v6009
  %v6061 = vmul.f32 %v5990, %v6009
  %v6062 = vmul.f32 %v5991, %v6009
  %v6063 = vmul.f32 %v5992, %v6009
  %v6064 = vmul.f32 %v5993, %v6009
  %v6065 = vmul.f32 %v5994, %v6009
  %v6066 = vmul.f32 %v5995, %v6009
  %v6067 = vmul.f32 %v5996, %v6009
  %v6068 = vmul.f32 %v5997, %v6009
  %v6069 = vmul.f32 %v5998, %v6009
  %v6070 = vmul.f32 %v5999, %v6009
  %v6071 = vmul.f32 %v6000, %v6009
  %v6072 = vmul.f32 %v6001, %v6009
  %v6073 = vmul.f32 %v6002, %v6009
  %v6074 = vmul.f32 %v6003, %v6009
  %v6075 = vld [vmem:[%s3] sm:$0x1]
  %v6077 = vlaneseq
  %v6078 = vshrl.u32 %v6077, 7
  %v6079 = vsub.s32 0, %v6078
  %v6080 = vrot.slane %v6075, %v6079
  %v6082 = vadd.f32 %v6011, %v6080
  %v6083 = vadd.f32 %v6012, %v6080
  %v6084 = vadd.f32 %v6013, %v6080
  %v6085 = vadd.f32 %v6014, %v6080
  %v6086 = vadd.f32 %v6015, %v6080
  %v6087 = vadd.f32 %v6016, %v6080
  %v6088 = vadd.f32 %v6017, %v6080
  %v6089 = vadd.f32 %v6018, %v6080
  %v6090 = vadd.f32 %v6019, %v6080
  %v6091 = vadd.f32 %v6020, %v6080
  %v6092 = vadd.f32 %v6021, %v6080
  %v6093 = vadd.f32 %v6022, %v6080
  %v6094 = vadd.f32 %v6023, %v6080
  %v6095 = vadd.f32 %v6024, %v6080
  %v6096 = vadd.f32 %v6025, %v6080
  %v6097 = vadd.f32 %v6026, %v6080
  %v6098 = vadd.f32 %v6027, %v6080
  %v6099 = vadd.f32 %v6028, %v6080
  %v6100 = vadd.f32 %v6029, %v6080
  %v6101 = vadd.f32 %v6030, %v6080
  %v6102 = vadd.f32 %v6031, %v6080
  %v6103 = vadd.f32 %v6032, %v6080
  %v6104 = vadd.f32 %v6033, %v6080
  %v6105 = vadd.f32 %v6034, %v6080
  %v6106 = vadd.f32 %v6035, %v6080
  %v6107 = vadd.f32 %v6036, %v6080
  %v6108 = vadd.f32 %v6037, %v6080
  %v6109 = vadd.f32 %v6038, %v6080
  %v6110 = vadd.f32 %v6039, %v6080
  %v6111 = vadd.f32 %v6040, %v6080
  %v6112 = vadd.f32 %v6041, %v6080
  %v6113 = vadd.f32 %v6042, %v6080
  %v6114 = vadd.f32 %v6043, %v6080
  %v6115 = vadd.f32 %v6044, %v6080
  %v6116 = vadd.f32 %v6045, %v6080
  %v6117 = vadd.f32 %v6046, %v6080
  %v6118 = vadd.f32 %v6047, %v6080
  %v6119 = vadd.f32 %v6048, %v6080
  %v6120 = vadd.f32 %v6049, %v6080
  %v6121 = vadd.f32 %v6050, %v6080
  %v6122 = vadd.f32 %v6051, %v6080
  %v6123 = vadd.f32 %v6052, %v6080
  %v6124 = vadd.f32 %v6053, %v6080
  %v6125 = vadd.f32 %v6054, %v6080
  %v6126 = vadd.f32 %v6055, %v6080
  %v6127 = vadd.f32 %v6056, %v6080
  %v6128 = vadd.f32 %v6057, %v6080
  %v6129 = vadd.f32 %v6058, %v6080
  %v6130 = vadd.f32 %v6059, %v6080
  %v6131 = vadd.f32 %v6060, %v6080
  %v6132 = vadd.f32 %v6061, %v6080
  %v6133 = vadd.f32 %v6062, %v6080
  %v6134 = vadd.f32 %v6063, %v6080
  %v6135 = vadd.f32 %v6064, %v6080
  %v6136 = vadd.f32 %v6065, %v6080
  %v6137 = vadd.f32 %v6066, %v6080
  %v6138 = vadd.f32 %v6067, %v6080
  %v6139 = vadd.f32 %v6068, %v6080
  %v6140 = vadd.f32 %v6069, %v6080
  %v6141 = vadd.f32 %v6070, %v6080
  %v6142 = vadd.f32 %v6071, %v6080
  %v6143 = vadd.f32 %v6072, %v6080
  %v6144 = vadd.f32 %v6073, %v6080
  %v6145 = vadd.f32 %v6074, %v6080
  %v6146 = vxor.u32 %v6082, 2147483648
  %v6147 = vxor.u32 %v6083, 2147483648
  %v6148 = vxor.u32 %v6084, 2147483648
  %v6149 = vxor.u32 %v6085, 2147483648
  %v6150 = vxor.u32 %v6086, 2147483648
  %v6151 = vxor.u32 %v6087, 2147483648
  %v6152 = vxor.u32 %v6088, 2147483648
  %v6153 = vxor.u32 %v6089, 2147483648
  %v6154 = vxor.u32 %v6090, 2147483648
  %v6155 = vxor.u32 %v6091, 2147483648
  %v6156 = vxor.u32 %v6092, 2147483648
  %v6157 = vxor.u32 %v6093, 2147483648
  %v6158 = vxor.u32 %v6094, 2147483648
  %v6159 = vxor.u32 %v6095, 2147483648
  %v6160 = vxor.u32 %v6096, 2147483648
  %v6161 = vxor.u32 %v6097, 2147483648
  %v6162 = vxor.u32 %v6098, 2147483648
  %v6163 = vxor.u32 %v6099, 2147483648
  %v6164 = vxor.u32 %v6100, 2147483648
  %v6165 = vxor.u32 %v6101, 2147483648
  %v6166 = vxor.u32 %v6102, 2147483648
  %v6167 = vxor.u32 %v6103, 2147483648
  %v6168 = vxor.u32 %v6104, 2147483648
  %v6169 = vxor.u32 %v6105, 2147483648
  %v6170 = vxor.u32 %v6106, 2147483648
  %v6171 = vxor.u32 %v6107, 2147483648
  %v6172 = vxor.u32 %v6108, 2147483648
  %v6173 = vxor.u32 %v6109, 2147483648
  %v6174 = vxor.u32 %v6110, 2147483648
  %v6175 = vxor.u32 %v6111, 2147483648
  %v6176 = vxor.u32 %v6112, 2147483648
  %v6177 = vxor.u32 %v6113, 2147483648
  %v6178 = vxor.u32 %v6114, 2147483648
  %v6179 = vxor.u32 %v6115, 2147483648
  %v6180 = vxor.u32 %v6116, 2147483648
  %v6181 = vxor.u32 %v6117, 2147483648
  %v6182 = vxor.u32 %v6118, 2147483648
  %v6183 = vxor.u32 %v6119, 2147483648
  %v6184 = vxor.u32 %v6120, 2147483648
  %v6185 = vxor.u32 %v6121, 2147483648
  %v6186 = vxor.u32 %v6122, 2147483648
  %v6187 = vxor.u32 %v6123, 2147483648
  %v6188 = vxor.u32 %v6124, 2147483648
  %v6189 = vxor.u32 %v6125, 2147483648
  %v6190 = vxor.u32 %v6126, 2147483648
  %v6191 = vxor.u32 %v6127, 2147483648
  %v6192 = vxor.u32 %v6128, 2147483648
  %v6193 = vxor.u32 %v6129, 2147483648
  %v6194 = vxor.u32 %v6130, 2147483648
  %v6195 = vxor.u32 %v6131, 2147483648
  %v6196 = vxor.u32 %v6132, 2147483648
  %v6197 = vxor.u32 %v6133, 2147483648
  %v6198 = vxor.u32 %v6134, 2147483648
  %v6199 = vxor.u32 %v6135, 2147483648
  %v6200 = vxor.u32 %v6136, 2147483648
  %v6201 = vxor.u32 %v6137, 2147483648
  %v6202 = vxor.u32 %v6138, 2147483648
  %v6203 = vxor.u32 %v6139, 2147483648
  %v6204 = vxor.u32 %v6140, 2147483648
  %v6205 = vxor.u32 %v6141, 2147483648
  %v6206 = vxor.u32 %v6142, 2147483648
  %v6207 = vxor.u32 %v6143, 2147483648
  %v6208 = vxor.u32 %v6144, 2147483648
  %v6209 = vxor.u32 %v6145, 2147483648
  %v6210 = vmul.f32 %v6146, 1.442695
  %v6211 = vpow.pop %v6210
  %v6212 = vmul.f32 %v6147, 1.442695
  %v6213 = vpow.pop %v6212
  %v6214 = vmul.f32 %v6148, 1.442695
  %v6215 = vpow.pop %v6214
  %v6216 = vmul.f32 %v6149, 1.442695
  %v6217 = vpow.pop %v6216
  %v6218 = vmul.f32 %v6150, 1.442695
  %v6219 = vpow.pop %v6218
  %v6220 = vmul.f32 %v6151, 1.442695
  %v6221 = vpow.pop %v6220
  %v6222 = vmul.f32 %v6152, 1.442695
  %v6223 = vpow.pop %v6222
  %v6224 = vmul.f32 %v6153, 1.442695
  %v6225 = vpow.pop %v6224
  %v6226 = vmul.f32 %v6154, 1.442695
  %v6227 = vpow.pop %v6226
  %v6228 = vmul.f32 %v6155, 1.442695
  %v6229 = vpow.pop %v6228
  %v6230 = vmul.f32 %v6156, 1.442695
  %v6231 = vpow.pop %v6230
  %v6232 = vmul.f32 %v6157, 1.442695
  %v6233 = vpow.pop %v6232
  %v6234 = vmul.f32 %v6158, 1.442695
  %v6235 = vpow.pop %v6234
  %v6236 = vmul.f32 %v6159, 1.442695
  %v6237 = vpow.pop %v6236
  %v6238 = vmul.f32 %v6160, 1.442695
  %v6239 = vpow.pop %v6238
  %v6240 = vmul.f32 %v6161, 1.442695
  %v6241 = vpow.pop %v6240
  %v6242 = vmul.f32 %v6162, 1.442695
  %v6243 = vpow.pop %v6242
  %v6244 = vmul.f32 %v6163, 1.442695
  %v6245 = vpow.pop %v6244
  %v6246 = vmul.f32 %v6164, 1.442695
  %v6247 = vpow.pop %v6246
  %v6248 = vmul.f32 %v6165, 1.442695
  %v6249 = vpow.pop %v6248
  %v6250 = vmul.f32 %v6166, 1.442695
  %v6251 = vpow.pop %v6250
  %v6252 = vmul.f32 %v6167, 1.442695
  %v6253 = vpow.pop %v6252
  %v6254 = vmul.f32 %v6168, 1.442695
  %v6255 = vpow.pop %v6254
  %v6256 = vmul.f32 %v6169, 1.442695
  %v6257 = vpow.pop %v6256
  %v6258 = vmul.f32 %v6170, 1.442695
  %v6259 = vpow.pop %v6258
  %v6260 = vmul.f32 %v6171, 1.442695
  %v6261 = vpow.pop %v6260
  %v6262 = vmul.f32 %v6172, 1.442695
  %v6263 = vpow.pop %v6262
  %v6264 = vmul.f32 %v6173, 1.442695
  %v6265 = vpow.pop %v6264
  %v6266 = vmul.f32 %v6174, 1.442695
  %v6267 = vpow.pop %v6266
  %v6268 = vmul.f32 %v6175, 1.442695
  %v6269 = vpow.pop %v6268
  %v6270 = vmul.f32 %v6176, 1.442695
  %v6271 = vpow.pop %v6270
  %v6272 = vmul.f32 %v6177, 1.442695
  %v6273 = vpow.pop %v6272
  %v6274 = vmul.f32 %v6178, 1.442695
  %v6275 = vpow.pop %v6274
  %v6276 = vmul.f32 %v6179, 1.442695
  %v6277 = vpow.pop %v6276
  %v6278 = vmul.f32 %v6180, 1.442695
  %v6279 = vpow.pop %v6278
  %v6280 = vmul.f32 %v6181, 1.442695
  %v6281 = vpow.pop %v6280
  %v6282 = vmul.f32 %v6182, 1.442695
  %v6283 = vpow.pop %v6282
  %v6284 = vmul.f32 %v6183, 1.442695
  %v6285 = vpow.pop %v6284
  %v6286 = vmul.f32 %v6184, 1.442695
  %v6287 = vpow.pop %v6286
  %v6288 = vmul.f32 %v6185, 1.442695
  %v6289 = vpow.pop %v6288
  %v6290 = vmul.f32 %v6186, 1.442695
  %v6291 = vpow.pop %v6290
  %v6292 = vmul.f32 %v6187, 1.442695
  %v6293 = vpow.pop %v6292
  %v6294 = vmul.f32 %v6188, 1.442695
  %v6295 = vpow.pop %v6294
  %v6296 = vmul.f32 %v6189, 1.442695
  %v6297 = vpow.pop %v6296
  %v6298 = vmul.f32 %v6190, 1.442695
  %v6299 = vpow.pop %v6298
  %v6300 = vmul.f32 %v6191, 1.442695
  %v6301 = vpow.pop %v6300
  %v6302 = vmul.f32 %v6192, 1.442695
  %v6303 = vpow.pop %v6302
  %v6304 = vmul.f32 %v6193, 1.442695
  %v6305 = vpow.pop %v6304
  %v6306 = vmul.f32 %v6194, 1.442695
  %v6307 = vpow.pop %v6306
  %v6308 = vmul.f32 %v6195, 1.442695
  %v6309 = vpow.pop %v6308
  %v6310 = vmul.f32 %v6196, 1.442695
  %v6311 = vpow.pop %v6310
  %v6312 = vmul.f32 %v6197, 1.442695
  %v6313 = vpow.pop %v6312
  %v6314 = vmul.f32 %v6198, 1.442695
  %v6315 = vpow.pop %v6314
  %v6316 = vmul.f32 %v6199, 1.442695
  %v6317 = vpow.pop %v6316
  %v6318 = vmul.f32 %v6200, 1.442695
  %v6319 = vpow.pop %v6318
  %v6320 = vmul.f32 %v6201, 1.442695
  %v6321 = vpow.pop %v6320
  %v6322 = vmul.f32 %v6202, 1.442695
  %v6323 = vpow.pop %v6322
  %v6324 = vmul.f32 %v6203, 1.442695
  %v6325 = vpow.pop %v6324
  %v6326 = vmul.f32 %v6204, 1.442695
  %v6327 = vpow.pop %v6326
  %v6328 = vmul.f32 %v6205, 1.442695
  %v6329 = vpow.pop %v6328
  %v6330 = vmul.f32 %v6206, 1.442695
  %v6331 = vpow.pop %v6330
  %v6332 = vmul.f32 %v6207, 1.442695
  %v6333 = vpow.pop %v6332
  %v6334 = vmul.f32 %v6208, 1.442695
  %v6335 = vpow.pop %v6334
  %v6336 = vmul.f32 %v6209, 1.442695
  %v6337 = vpow.pop %v6336
  %v6338 = vadd.f32 %v6211, 1.0
  %v6339 = vadd.f32 %v6213, 1.0
  %v6340 = vadd.f32 %v6215, 1.0
  %v6341 = vadd.f32 %v6217, 1.0
  %v6342 = vadd.f32 %v6219, 1.0
  %v6343 = vadd.f32 %v6221, 1.0
  %v6344 = vadd.f32 %v6223, 1.0
  %v6345 = vadd.f32 %v6225, 1.0
  %v6346 = vadd.f32 %v6227, 1.0
  %v6347 = vadd.f32 %v6229, 1.0
  %v6348 = vadd.f32 %v6231, 1.0
  %v6349 = vadd.f32 %v6233, 1.0
  %v6350 = vadd.f32 %v6235, 1.0
  %v6351 = vadd.f32 %v6237, 1.0
  %v6352 = vadd.f32 %v6239, 1.0
  %v6353 = vadd.f32 %v6241, 1.0
  %v6354 = vadd.f32 %v6243, 1.0
  %v6355 = vadd.f32 %v6245, 1.0
  %v6356 = vadd.f32 %v6247, 1.0
  %v6357 = vadd.f32 %v6249, 1.0
  %v6358 = vadd.f32 %v6251, 1.0
  %v6359 = vadd.f32 %v6253, 1.0
  %v6360 = vadd.f32 %v6255, 1.0
  %v6361 = vadd.f32 %v6257, 1.0
  %v6362 = vadd.f32 %v6259, 1.0
  %v6363 = vadd.f32 %v6261, 1.0
  %v6364 = vadd.f32 %v6263, 1.0
  %v6365 = vadd.f32 %v6265, 1.0
  %v6366 = vadd.f32 %v6267, 1.0
  %v6367 = vadd.f32 %v6269, 1.0
  %v6368 = vadd.f32 %v6271, 1.0
  %v6369 = vadd.f32 %v6273, 1.0
  %v6370 = vadd.f32 %v6275, 1.0
  %v6371 = vadd.f32 %v6277, 1.0
  %v6372 = vadd.f32 %v6279, 1.0
  %v6373 = vadd.f32 %v6281, 1.0
  %v6374 = vadd.f32 %v6283, 1.0
  %v6375 = vadd.f32 %v6285, 1.0
  %v6376 = vadd.f32 %v6287, 1.0
  %v6377 = vadd.f32 %v6289, 1.0
  %v6378 = vadd.f32 %v6291, 1.0
  %v6379 = vadd.f32 %v6293, 1.0
  %v6380 = vadd.f32 %v6295, 1.0
  %v6381 = vadd.f32 %v6297, 1.0
  %v6382 = vadd.f32 %v6299, 1.0
  %v6383 = vadd.f32 %v6301, 1.0
  %v6384 = vadd.f32 %v6303, 1.0
  %v6385 = vadd.f32 %v6305, 1.0
  %v6386 = vadd.f32 %v6307, 1.0
  %v6387 = vadd.f32 %v6309, 1.0
  %v6388 = vadd.f32 %v6311, 1.0
  %v6389 = vadd.f32 %v6313, 1.0
  %v6390 = vadd.f32 %v6315, 1.0
  %v6391 = vadd.f32 %v6317, 1.0
  %v6392 = vadd.f32 %v6319, 1.0
  %v6393 = vadd.f32 %v6321, 1.0
  %v6394 = vadd.f32 %v6323, 1.0
  %v6395 = vadd.f32 %v6325, 1.0
  %v6396 = vadd.f32 %v6327, 1.0
  %v6397 = vadd.f32 %v6329, 1.0
  %v6398 = vadd.f32 %v6331, 1.0
  %v6399 = vadd.f32 %v6333, 1.0
  %v6400 = vadd.f32 %v6335, 1.0
  %v6401 = vadd.f32 %v6337, 1.0
  %v6402 = vrcp.pop %v6338
  %v6403 = vmul.f32 1.0, %v6402
  %v6404 = vrcp.pop %v6339
  %v6405 = vmul.f32 1.0, %v6404
  %v6406 = vrcp.pop %v6340
  %v6407 = vmul.f32 1.0, %v6406
  %v6408 = vrcp.pop %v6341
  %v6409 = vmul.f32 1.0, %v6408
  %v6410 = vrcp.pop %v6342
  %v6411 = vmul.f32 1.0, %v6410
  %v6412 = vrcp.pop %v6343
  %v6413 = vmul.f32 1.0, %v6412
  %v6414 = vrcp.pop %v6344
  %v6415 = vmul.f32 1.0, %v6414
  %v6416 = vrcp.pop %v6345
  %v6417 = vmul.f32 1.0, %v6416
  %v6418 = vrcp.pop %v6346
  %v6419 = vmul.f32 1.0, %v6418
  %v6420 = vrcp.pop %v6347
  %v6421 = vmul.f32 1.0, %v6420
  %v6422 = vrcp.pop %v6348
  %v6423 = vmul.f32 1.0, %v6422
  %v6424 = vrcp.pop %v6349
  %v6425 = vmul.f32 1.0, %v6424
  %v6426 = vrcp.pop %v6350
  %v6427 = vmul.f32 1.0, %v6426
  %v6428 = vrcp.pop %v6351
  %v6429 = vmul.f32 1.0, %v6428
  %v6430 = vrcp.pop %v6352
  %v6431 = vmul.f32 1.0, %v6430
  %v6432 = vrcp.pop %v6353
  %v6433 = vmul.f32 1.0, %v6432
  %v6434 = vrcp.pop %v6354
  %v6435 = vmul.f32 1.0, %v6434
  %v6436 = vrcp.pop %v6355
  %v6437 = vmul.f32 1.0, %v6436
  %v6438 = vrcp.pop %v6356
  %v6439 = vmul.f32 1.0, %v6438
  %v6440 = vrcp.pop %v6357
  %v6441 = vmul.f32 1.0, %v6440
  %v6442 = vrcp.pop %v6358
  %v6443 = vmul.f32 1.0, %v6442
  %v6444 = vrcp.pop %v6359
  %v6445 = vmul.f32 1.0, %v6444
  %v6446 = vrcp.pop %v6360
  %v6447 = vmul.f32 1.0, %v6446
  %v6448 = vrcp.pop %v6361
  %v6449 = vmul.f32 1.0, %v6448
  %v6450 = vrcp.pop %v6362
  %v6451 = vmul.f32 1.0, %v6450
  %v6452 = vrcp.pop %v6363
  %v6453 = vmul.f32 1.0, %v6452
  %v6454 = vrcp.pop %v6364
  %v6455 = vmul.f32 1.0, %v6454
  %v6456 = vrcp.pop %v6365
  %v6457 = vmul.f32 1.0, %v6456
  %v6458 = vrcp.pop %v6366
  %v6459 = vmul.f32 1.0, %v6458
  %v6460 = vrcp.pop %v6367
  %v6461 = vmul.f32 1.0, %v6460
  %v6462 = vrcp.pop %v6368
  %v6463 = vmul.f32 1.0, %v6462
  %v6464 = vrcp.pop %v6369
  %v6465 = vmul.f32 1.0, %v6464
  %v6466 = vrcp.pop %v6370
  %v6467 = vmul.f32 1.0, %v6466
  %v6468 = vrcp.pop %v6371
  %v6469 = vmul.f32 1.0, %v6468
  %v6470 = vrcp.pop %v6372
  %v6471 = vmul.f32 1.0, %v6470
  %v6472 = vrcp.pop %v6373
  %v6473 = vmul.f32 1.0, %v6472
  %v6474 = vrcp.pop %v6374
  %v6475 = vmul.f32 1.0, %v6474
  %v6476 = vrcp.pop %v6375
  %v6477 = vmul.f32 1.0, %v6476
  %v6478 = vrcp.pop %v6376
  %v6479 = vmul.f32 1.0, %v6478
  %v6480 = vrcp.pop %v6377
  %v6481 = vmul.f32 1.0, %v6480
  %v6482 = vrcp.pop %v6378
  %v6483 = vmul.f32 1.0, %v6482
  %v6484 = vrcp.pop %v6379
  %v6485 = vmul.f32 1.0, %v6484
  %v6486 = vrcp.pop %v6380
  %v6487 = vmul.f32 1.0, %v6486
  %v6488 = vrcp.pop %v6381
  %v6489 = vmul.f32 1.0, %v6488
  %v6490 = vrcp.pop %v6382
  %v6491 = vmul.f32 1.0, %v6490
  %v6492 = vrcp.pop %v6383
  %v6493 = vmul.f32 1.0, %v6492
  %v6494 = vrcp.pop %v6384
  %v6495 = vmul.f32 1.0, %v6494
  %v6496 = vrcp.pop %v6385
  %v6497 = vmul.f32 1.0, %v6496
  %v6498 = vrcp.pop %v6386
  %v6499 = vmul.f32 1.0, %v6498
  %v6500 = vrcp.pop %v6387
  %v6501 = vmul.f32 1.0, %v6500
  %v6502 = vrcp.pop %v6388
  %v6503 = vmul.f32 1.0, %v6502
  %v6504 = vrcp.pop %v6389
  %v6505 = vmul.f32 1.0, %v6504
  %v6506 = vrcp.pop %v6390
  %v6507 = vmul.f32 1.0, %v6506
  %v6508 = vrcp.pop %v6391
  %v6509 = vmul.f32 1.0, %v6508
  %v6510 = vrcp.pop %v6392
  %v6511 = vmul.f32 1.0, %v6510
  %v6512 = vrcp.pop %v6393
  %v6513 = vmul.f32 1.0, %v6512
  %v6514 = vrcp.pop %v6394
  %v6515 = vmul.f32 1.0, %v6514
  %v6516 = vrcp.pop %v6395
  %v6517 = vmul.f32 1.0, %v6516
  %v6518 = vrcp.pop %v6396
  %v6519 = vmul.f32 1.0, %v6518
  %v6520 = vrcp.pop %v6397
  %v6521 = vmul.f32 1.0, %v6520
  %v6522 = vrcp.pop %v6398
  %v6523 = vmul.f32 1.0, %v6522
  %v6524 = vrcp.pop %v6399
  %v6525 = vmul.f32 1.0, %v6524
  %v6526 = vrcp.pop %v6400
  %v6527 = vmul.f32 1.0, %v6526
  %v6528 = vrcp.pop %v6401
  %v6529 = vmul.f32 1.0, %v6528
  %v6530 = vmul.f32 %v6082, %v6403
  %v6531 = vmul.f32 %v6083, %v6405
  %v6532 = vmul.f32 %v6084, %v6407
  %v6533 = vmul.f32 %v6085, %v6409
  %v6534 = vmul.f32 %v6086, %v6411
  %v6535 = vmul.f32 %v6087, %v6413
  %v6536 = vmul.f32 %v6088, %v6415
  %v6537 = vmul.f32 %v6089, %v6417
  %v6538 = vmul.f32 %v6090, %v6419
  %v6539 = vmul.f32 %v6091, %v6421
  %v6540 = vmul.f32 %v6092, %v6423
  %v6541 = vmul.f32 %v6093, %v6425
  %v6542 = vmul.f32 %v6094, %v6427
  %v6543 = vmul.f32 %v6095, %v6429
  %v6544 = vmul.f32 %v6096, %v6431
  %v6545 = vmul.f32 %v6097, %v6433
  %v6546 = vmul.f32 %v6098, %v6435
  %v6547 = vmul.f32 %v6099, %v6437
  %v6548 = vmul.f32 %v6100, %v6439
  %v6549 = vmul.f32 %v6101, %v6441
  %v6550 = vmul.f32 %v6102, %v6443
  %v6551 = vmul.f32 %v6103, %v6445
  %v6552 = vmul.f32 %v6104, %v6447
  %v6553 = vmul.f32 %v6105, %v6449
  %v6554 = vmul.f32 %v6106, %v6451
  %v6555 = vmul.f32 %v6107, %v6453
  %v6556 = vmul.f32 %v6108, %v6455
  %v6557 = vmul.f32 %v6109, %v6457
  %v6558 = vmul.f32 %v6110, %v6459
  %v6559 = vmul.f32 %v6111, %v6461
  %v6560 = vmul.f32 %v6112, %v6463
  %v6561 = vmul.f32 %v6113, %v6465
  %v6562 = vmul.f32 %v6114, %v6467
  %v6563 = vmul.f32 %v6115, %v6469
  %v6564 = vmul.f32 %v6116, %v6471
  %v6565 = vmul.f32 %v6117, %v6473
  %v6566 = vmul.f32 %v6118, %v6475
  %v6567 = vmul.f32 %v6119, %v6477
  %v6568 = vmul.f32 %v6120, %v6479
  %v6569 = vmul.f32 %v6121, %v6481
  %v6570 = vmul.f32 %v6122, %v6483
  %v6571 = vmul.f32 %v6123, %v6485
  %v6572 = vmul.f32 %v6124, %v6487
  %v6573 = vmul.f32 %v6125, %v6489
  %v6574 = vmul.f32 %v6126, %v6491
  %v6575 = vmul.f32 %v6127, %v6493
  %v6576 = vmul.f32 %v6128, %v6495
  %v6577 = vmul.f32 %v6129, %v6497
  %v6578 = vmul.f32 %v6130, %v6499
  %v6579 = vmul.f32 %v6131, %v6501
  %v6580 = vmul.f32 %v6132, %v6503
  %v6581 = vmul.f32 %v6133, %v6505
  %v6582 = vmul.f32 %v6134, %v6507
  %v6583 = vmul.f32 %v6135, %v6509
  %v6584 = vmul.f32 %v6136, %v6511
  %v6585 = vmul.f32 %v6137, %v6513
  %v6586 = vmul.f32 %v6138, %v6515
  %v6587 = vmul.f32 %v6139, %v6517
  %v6588 = vmul.f32 %v6140, %v6519
  %v6589 = vmul.f32 %v6141, %v6521
  %v6590 = vmul.f32 %v6142, %v6523
  %v6591 = vmul.f32 %v6143, %v6525
  %v6592 = vmul.f32 %v6144, %v6527
  %v6593 = vmul.f32 %v6145, %v6529
  %v6594 = vpack.c.bf16 %v6531, %v6530
  %v6595 = vpack.c.bf16 %v6533, %v6532
  %v6596 = vpack.c.bf16 %v6535, %v6534
  %v6597 = vpack.c.bf16 %v6537, %v6536
  %v6598 = vpack.c.bf16 %v6539, %v6538
  %v6599 = vpack.c.bf16 %v6541, %v6540
  %v6600 = vpack.c.bf16 %v6543, %v6542
  %v6601 = vpack.c.bf16 %v6545, %v6544
  %v6602 = vpack.c.bf16 %v6547, %v6546
  %v6603 = vpack.c.bf16 %v6549, %v6548
  %v6604 = vpack.c.bf16 %v6551, %v6550
  %v6605 = vpack.c.bf16 %v6553, %v6552
  %v6606 = vpack.c.bf16 %v6555, %v6554
  %v6607 = vpack.c.bf16 %v6557, %v6556
  %v6608 = vpack.c.bf16 %v6559, %v6558
  %v6609 = vpack.c.bf16 %v6561, %v6560
  %v6610 = vpack.c.bf16 %v6563, %v6562
  %v6611 = vpack.c.bf16 %v6565, %v6564
  %v6612 = vpack.c.bf16 %v6567, %v6566
  %v6613 = vpack.c.bf16 %v6569, %v6568
  %v6614 = vpack.c.bf16 %v6571, %v6570
  %v6615 = vpack.c.bf16 %v6573, %v6572
  %v6616 = vpack.c.bf16 %v6575, %v6574
  %v6617 = vpack.c.bf16 %v6577, %v6576
  %v6618 = vpack.c.bf16 %v6579, %v6578
  %v6619 = vpack.c.bf16 %v6581, %v6580
  %v6620 = vpack.c.bf16 %v6583, %v6582
  %v6621 = vpack.c.bf16 %v6585, %v6584
  %v6622 = vpack.c.bf16 %v6587, %v6586
  %v6623 = vpack.c.bf16 %v6589, %v6588
  %v6624 = vpack.c.bf16 %v6591, %v6590
  %v6625 = vpack.c.bf16 %v6593, %v6592
  %v6658 = vunpack.c.l.b16 %v6594
  %v6659 = vunpack.c.h.b16 %v6594
  %v6660 = vunpack.c.l.b16 %v6595
  %v6661 = vunpack.c.h.b16 %v6595
  %v6662 = vunpack.c.l.b16 %v6596
  %v6663 = vunpack.c.h.b16 %v6596
  %v6664 = vunpack.c.l.b16 %v6597
  %v6665 = vunpack.c.h.b16 %v6597
  %v6666 = vunpack.c.l.b16 %v6598
  %v6667 = vunpack.c.h.b16 %v6598
  %v6668 = vunpack.c.l.b16 %v6599
  %v6669 = vunpack.c.h.b16 %v6599
  %v6670 = vunpack.c.l.b16 %v6600
  %v6671 = vunpack.c.h.b16 %v6600
  %v6672 = vunpack.c.l.b16 %v6601
  %v6673 = vunpack.c.h.b16 %v6601
  %v6674 = vunpack.c.l.b16 %v6602
  %v6675 = vunpack.c.h.b16 %v6602
  %v6676 = vunpack.c.l.b16 %v6603
  %v6677 = vunpack.c.h.b16 %v6603
  %v6678 = vunpack.c.l.b16 %v6604
  %v6679 = vunpack.c.h.b16 %v6604
  %v6680 = vunpack.c.l.b16 %v6605
  %v6681 = vunpack.c.h.b16 %v6605
  %v6682 = vunpack.c.l.b16 %v6606
  %v6683 = vunpack.c.h.b16 %v6606
  %v6684 = vunpack.c.l.b16 %v6607
  %v6685 = vunpack.c.h.b16 %v6607
  %v6686 = vunpack.c.l.b16 %v6608
  %v6687 = vunpack.c.h.b16 %v6608
  %v6688 = vunpack.c.l.b16 %v6609
  %v6689 = vunpack.c.h.b16 %v6609
  %v6690 = vunpack.c.l.b16 %v6610
  %v6691 = vunpack.c.h.b16 %v6610
  %v6692 = vunpack.c.l.b16 %v6611
  %v6693 = vunpack.c.h.b16 %v6611
  %v6694 = vunpack.c.l.b16 %v6612
  %v6695 = vunpack.c.h.b16 %v6612
  %v6696 = vunpack.c.l.b16 %v6613
  %v6697 = vunpack.c.h.b16 %v6613
  %v6698 = vunpack.c.l.b16 %v6614
  %v6699 = vunpack.c.h.b16 %v6614
  %v6700 = vunpack.c.l.b16 %v6615
  %v6701 = vunpack.c.h.b16 %v6615
  %v6702 = vunpack.c.l.b16 %v6616
  %v6703 = vunpack.c.h.b16 %v6616
  %v6704 = vunpack.c.l.b16 %v6617
  %v6705 = vunpack.c.h.b16 %v6617
  %v6706 = vunpack.c.l.b16 %v6618
  %v6707 = vunpack.c.h.b16 %v6618
  %v6708 = vunpack.c.l.b16 %v6619
  %v6709 = vunpack.c.h.b16 %v6619
  %v6710 = vunpack.c.l.b16 %v6620
  %v6711 = vunpack.c.h.b16 %v6620
  %v6712 = vunpack.c.l.b16 %v6621
  %v6713 = vunpack.c.h.b16 %v6621
  %v6714 = vunpack.c.l.b16 %v6622
  %v6715 = vunpack.c.h.b16 %v6622
  %v6716 = vunpack.c.l.b16 %v6623
  %v6717 = vunpack.c.h.b16 %v6623
  %v6718 = vunpack.c.l.b16 %v6624
  %v6719 = vunpack.c.h.b16 %v6624
  %v6720 = vunpack.c.l.b16 %v6625
  %v6721 = vunpack.c.h.b16 %v6625
  %v6722 = vpack.c.b16 %v6658, %v6658
  %v6723 = vpack.c.b16 %v6659, %v6659
  %v6724 = vpack.c.b16 %v6660, %v6660
  %v6725 = vpack.c.b16 %v6661, %v6661
  %v6726 = vpack.c.b16 %v6662, %v6662
  %v6727 = vpack.c.b16 %v6663, %v6663
  %v6728 = vpack.c.b16 %v6664, %v6664
  %v6729 = vpack.c.b16 %v6665, %v6665
  %v6730 = vpack.c.b16 %v6666, %v6666
  %v6731 = vpack.c.b16 %v6667, %v6667
  %v6732 = vpack.c.b16 %v6668, %v6668
  %v6733 = vpack.c.b16 %v6669, %v6669
  %v6734 = vpack.c.b16 %v6670, %v6670
  %v6735 = vpack.c.b16 %v6671, %v6671
  %v6736 = vpack.c.b16 %v6672, %v6672
  %v6737 = vpack.c.b16 %v6673, %v6673
  %v6738 = vpack.c.b16 %v6674, %v6674
  %v6739 = vpack.c.b16 %v6675, %v6675
  %v6740 = vpack.c.b16 %v6676, %v6676
  %v6741 = vpack.c.b16 %v6677, %v6677
  %v6742 = vpack.c.b16 %v6678, %v6678
  %v6743 = vpack.c.b16 %v6679, %v6679
  %v6744 = vpack.c.b16 %v6680, %v6680
  %v6745 = vpack.c.b16 %v6681, %v6681
  %v6746 = vpack.c.b16 %v6682, %v6682
  %v6747 = vpack.c.b16 %v6683, %v6683
  %v6748 = vpack.c.b16 %v6684, %v6684
  %v6749 = vpack.c.b16 %v6685, %v6685
  %v6750 = vpack.c.b16 %v6686, %v6686
  %v6751 = vpack.c.b16 %v6687, %v6687
  %v6752 = vpack.c.b16 %v6688, %v6688
  %v6753 = vpack.c.b16 %v6689, %v6689
  %v6754 = vpack.c.b16 %v6690, %v6690
  %v6755 = vpack.c.b16 %v6691, %v6691
  %v6756 = vpack.c.b16 %v6692, %v6692
  %v6757 = vpack.c.b16 %v6693, %v6693
  %v6758 = vpack.c.b16 %v6694, %v6694
  %v6759 = vpack.c.b16 %v6695, %v6695
  %v6760 = vpack.c.b16 %v6696, %v6696
  %v6761 = vpack.c.b16 %v6697, %v6697
  %v6762 = vpack.c.b16 %v6698, %v6698
  %v6763 = vpack.c.b16 %v6699, %v6699
  %v6764 = vpack.c.b16 %v6700, %v6700
  %v6765 = vpack.c.b16 %v6701, %v6701
  %v6766 = vpack.c.b16 %v6702, %v6702
  %v6767 = vpack.c.b16 %v6703, %v6703
  %v6768 = vpack.c.b16 %v6704, %v6704
  %v6769 = vpack.c.b16 %v6705, %v6705
  %v6770 = vpack.c.b16 %v6706, %v6706
  %v6771 = vpack.c.b16 %v6707, %v6707
  %v6772 = vpack.c.b16 %v6708, %v6708
  %v6773 = vpack.c.b16 %v6709, %v6709
  %v6774 = vpack.c.b16 %v6710, %v6710
  %v6775 = vpack.c.b16 %v6711, %v6711
  %v6776 = vpack.c.b16 %v6712, %v6712
  %v6777 = vpack.c.b16 %v6713, %v6713
  %v6778 = vpack.c.b16 %v6714, %v6714
  %v6779 = vpack.c.b16 %v6715, %v6715
  %v6780 = vpack.c.b16 %v6716, %v6716
  %v6781 = vpack.c.b16 %v6717, %v6717
  %v6782 = vpack.c.b16 %v6718, %v6718
  %v6783 = vpack.c.b16 %v6719, %v6719
  %v6784 = vpack.c.b16 %v6720, %v6720
  %v6785 = vpack.c.b16 %v6721, %v6721
  %vm6850 = vcmask 191488
  %6851 = vst.msk [vmem:[%s4] sm:$0xf] %vm6850, %v6722
  %6852 = vst.msk [vmem:[%s4 + $0x4] sm:$0xf] %vm6850, %v6723
  %6853 = vst.msk [vmem:[%s4 + $0x8] sm:$0xf] %vm6850, %v6724
  %6854 = vst.msk [vmem:[%s4 + $0xc] sm:$0xf] %vm6850, %v6725
  %6855 = vst.msk [vmem:[%s4 + $0x10] sm:$0xf] %vm6850, %v6726
  %6856 = vst.msk [vmem:[%s4 + $0x14] sm:$0xf] %vm6850, %v6727
  %6857 = vst.msk [vmem:[%s4 + $0x18] sm:$0xf] %vm6850, %v6728
  %6858 = vst.msk [vmem:[%s4 + $0x1c] sm:$0xf] %vm6850, %v6729
  %6859 = vst.msk [vmem:[%s4 + $0x20] sm:$0xf] %vm6850, %v6730
  %6860 = vst.msk [vmem:[%s4 + $0x24] sm:$0xf] %vm6850, %v6731
  %6861 = vst.msk [vmem:[%s4 + $0x28] sm:$0xf] %vm6850, %v6732
  %6862 = vst.msk [vmem:[%s4 + $0x2c] sm:$0xf] %vm6850, %v6733
  %6863 = vst.msk [vmem:[%s4 + $0x30] sm:$0xf] %vm6850, %v6734
  %6864 = vst.msk [vmem:[%s4 + $0x34] sm:$0xf] %vm6850, %v6735
  %6865 = vst.msk [vmem:[%s4 + $0x38] sm:$0xf] %vm6850, %v6736
  %6866 = vst.msk [vmem:[%s4 + $0x3c] sm:$0xf] %vm6850, %v6737
  %6867 = vst.msk [vmem:[%s4 + $0x40] sm:$0xf] %vm6850, %v6738
  %6868 = vst.msk [vmem:[%s4 + $0x44] sm:$0xf] %vm6850, %v6739
  %6869 = vst.msk [vmem:[%s4 + $0x48] sm:$0xf] %vm6850, %v6740
  %6870 = vst.msk [vmem:[%s4 + $0x4c] sm:$0xf] %vm6850, %v6741
  %6871 = vst.msk [vmem:[%s4 + $0x50] sm:$0xf] %vm6850, %v6742
  %6872 = vst.msk [vmem:[%s4 + $0x54] sm:$0xf] %vm6850, %v6743
  %6873 = vst.msk [vmem:[%s4 + $0x58] sm:$0xf] %vm6850, %v6744
  %6874 = vst.msk [vmem:[%s4 + $0x5c] sm:$0xf] %vm6850, %v6745
  %6875 = vst.msk [vmem:[%s4 + $0x60] sm:$0xf] %vm6850, %v6746
  %6876 = vst.msk [vmem:[%s4 + $0x64] sm:$0xf] %vm6850, %v6747
  %6877 = vst.msk [vmem:[%s4 + $0x68] sm:$0xf] %vm6850, %v6748
  %6878 = vst.msk [vmem:[%s4 + $0x6c] sm:$0xf] %vm6850, %v6749
  %6879 = vst.msk [vmem:[%s4 + $0x70] sm:$0xf] %vm6850, %v6750
  %6880 = vst.msk [vmem:[%s4 + $0x74] sm:$0xf] %vm6850, %v6751
  %6881 = vst.msk [vmem:[%s4 + $0x78] sm:$0xf] %vm6850, %v6752
  %6882 = vst.msk [vmem:[%s4 + $0x7c] sm:$0xf] %vm6850, %v6753
  %6883 = vst.msk [vmem:[%s4 + $0x80] sm:$0xf] %vm6850, %v6754
  %6884 = vst.msk [vmem:[%s4 + $0x84] sm:$0xf] %vm6850, %v6755
  %6885 = vst.msk [vmem:[%s4 + $0x88] sm:$0xf] %vm6850, %v6756
  %6886 = vst.msk [vmem:[%s4 + $0x8c] sm:$0xf] %vm6850, %v6757
  %6887 = vst.msk [vmem:[%s4 + $0x90] sm:$0xf] %vm6850, %v6758
  %6888 = vst.msk [vmem:[%s4 + $0x94] sm:$0xf] %vm6850, %v6759
  %6889 = vst.msk [vmem:[%s4 + $0x98] sm:$0xf] %vm6850, %v6760
  %6890 = vst.msk [vmem:[%s4 + $0x9c] sm:$0xf] %vm6850, %v6761
  %6891 = vst.msk [vmem:[%s4 + $0xa0] sm:$0xf] %vm6850, %v6762
  %6892 = vst.msk [vmem:[%s4 + $0xa4] sm:$0xf] %vm6850, %v6763
  %6893 = vst.msk [vmem:[%s4 + $0xa8] sm:$0xf] %vm6850, %v6764
  %6894 = vst.msk [vmem:[%s4 + $0xac] sm:$0xf] %vm6850, %v6765
  %6895 = vst.msk [vmem:[%s4 + $0xb0] sm:$0xf] %vm6850, %v6766
  %6896 = vst.msk [vmem:[%s4 + $0xb4] sm:$0xf] %vm6850, %v6767
  %6897 = vst.msk [vmem:[%s4 + $0xb8] sm:$0xf] %vm6850, %v6768
  %6898 = vst.msk [vmem:[%s4 + $0xbc] sm:$0xf] %vm6850, %v6769
  %6899 = vst.msk [vmem:[%s4 + $0xc0] sm:$0xf] %vm6850, %v6770
  %6900 = vst.msk [vmem:[%s4 + $0xc4] sm:$0xf] %vm6850, %v6771
  %6901 = vst.msk [vmem:[%s4 + $0xc8] sm:$0xf] %vm6850, %v6772
  %6902 = vst.msk [vmem:[%s4 + $0xcc] sm:$0xf] %vm6850, %v6773
  %6903 = vst.msk [vmem:[%s4 + $0xd0] sm:$0xf] %vm6850, %v6774
  %6904 = vst.msk [vmem:[%s4 + $0xd4] sm:$0xf] %vm6850, %v6775
  %6905 = vst.msk [vmem:[%s4 + $0xd8] sm:$0xf] %vm6850, %v6776
  %6906 = vst.msk [vmem:[%s4 + $0xdc] sm:$0xf] %vm6850, %v6777
  %6907 = vst.msk [vmem:[%s4 + $0xe0] sm:$0xf] %vm6850, %v6778
  %6908 = vst.msk [vmem:[%s4 + $0xe4] sm:$0xf] %vm6850, %v6779
  %6909 = vst.msk [vmem:[%s4 + $0xe8] sm:$0xf] %vm6850, %v6780
  %6910 = vst.msk [vmem:[%s4 + $0xec] sm:$0xf] %vm6850, %v6781
  %6911 = vst.msk [vmem:[%s4 + $0xf0] sm:$0xf] %vm6850, %v6782
  %6912 = vst.msk [vmem:[%s4 + $0xf4] sm:$0xf] %vm6850, %v6783
  %6913 = vst.msk [vmem:[%s4 + $0xf8] sm:$0xf] %vm6850, %v6784
  %6914 = vst.msk [vmem:[%s4 + $0xfc] sm:$0xf] %vm6850, %v6785
  // Predicated region
  $region18: #{tpu_custom_call.1} parent=0 // pred_check
    _
  $region19: #{tpu_custom_call.1} parent=0 // pred_check_branch
    %6916 = sbr.rel (0) target = $region21
  $region20: #{tpu_custom_call.1} parent=0 // pred_region
    _
  $region21: #{tpu_custom_call.1} parent=0 // pred_fallthru
    _
  // Predicated region
  $region22: #{tpu_custom_call.1} parent=0 // pred_check
    _
  $region23: #{tpu_custom_call.1} parent=0 // pred_check_branch
    %6918 = sbr.rel (0) target = $region25
  $region24: #{tpu_custom_call.1} parent=0 // pred_region
    _
  $region25: #{tpu_custom_call.1} parent=0 // pred_fallthru
    _

</llo_original>
